<compile_context>
chip_gen: v6e
topology: v6e:2x2x1
jax: 0.10.0
libtpu: 0.0.40
codegen_flags: <defaults>
</compile_context>

<pallas_src>
import jax
import jax.numpy as jnp
from jax.experimental import pallas as pl
from jax.experimental.pallas import tpu as pltpu

IN_FEATURES = 32 * 32 * 3   # 3072
H1, H2, N_OUT = 512, 256, 10
N_OUT_PAD = 128             # lane-dense padded output width


def _round_up(x, m):
    return (x + m - 1) // m * m


def _choose_batch_tile(B, block_b):
    """Batch tile: multiple of 8, <= block_b, >= 2 grid steps when B > 8
    (v7x megacore), and minimal padding."""
    block_b = max(8, _round_up(block_b, 8))
    if B <= 8:
        return 8
    n_steps = max(2, pl.cdiv(B, block_b))
    tb = _round_up(pl.cdiv(B, n_steps), 8)
    return min(tb, block_b)


def mlp_kernel(x_ref, w1_ref, b1_ref, w2_ref, b2_ref, w3_ref, b3_ref, o_ref):
    # Layer 1: (TB, 3072) @ (3072, 512) + (1, 512), ReLU.  bf16 MXU, f32 accumulate.
    x = x_ref[...].astype(jnp.bfloat16)   # no-op if the caller already supplies bf16
    h1 = jnp.dot(x, w1_ref[...], preferred_element_type=jnp.float32)
    h1 = jnp.maximum(h1 + b1_ref[...], 0.0)
    # Layer 2: (TB, 512) @ (512, 256) + (1, 256), ReLU.
    h2 = jnp.dot(h1.astype(jnp.bfloat16), w2_ref[...],
                 preferred_element_type=jnp.float32)
    h2 = jnp.maximum(h2 + b2_ref[...], 0.0)
    # Layer 3: (TB, 256) @ (256, 128-padded) + (1, 128-padded).
    o_ref[...] = jnp.dot(h2.astype(jnp.bfloat16), w3_ref[...],
                         preferred_element_type=jnp.float32) + b3_ref[...]


def mlp_forward(x_nchw, params, *, block_b=512):
    """x_nchw: (B, 3, 32, 32) float32 or bfloat16. Returns (B, 10) float32 logits."""
    w1, b1, w2, b2, w3, b3 = params  # w*: bf16 (in, out); b*: f32 (1, out); layer 3 padded to 128
    B = x_nchw.shape[0]

    # Glue: flatten exactly like torch.nn.Flatten on NCHW.  Dtype is passed through;
    # producers that emit bf16 halve the dominant HBM stream (v6e/v7x win).
    x = x_nchw.reshape(B, -1)  # (B, 3072)

    # Batch tiling: >=2 grid steps when possible, minimal padding, multiple of 8 rows.
    tb = _choose_batch_tile(B, block_b)
    b_pad = _round_up(B, tb)
    if b_pad != B:
        x = jnp.pad(x, ((0, b_pad - B), (0, 0)))

    # Grid-invariant (VMEM-resident) weights/biases: constant index_map + single buffer.
    resident = lambda shape: pl.BlockSpec(shape, lambda i: (0, 0),
                                          pipeline_mode=pl.Buffered(1))

    out = pl.pallas_call(
        mlp_kernel,
        out_shape=jax.ShapeDtypeStruct((b_pad, N_OUT_PAD), jnp.float32),
        grid=(b_pad // tb,),
        in_specs=[
            pl.BlockSpec((tb, IN_FEATURES), lambda i: (i, 0)),
            resident(w1.shape), resident(b1.shape),
            resident(w2.shape), resident(b2.shape),
            resident(w3.shape), resident(b3.shape),
        ],
        out_specs=pl.BlockSpec((tb, N_OUT_PAD), lambda i: (i, 0)),
        compiler_params=pltpu.CompilerParams(
            dimension_semantics=("parallel",),
            vmem_limit_bytes=32 << 20,
        ),
    )(x, w1, b1, w2, b2, w3, b3)

    # Drop padded batch rows and padded output lanes.
    return out[:B, :N_OUT]


def init_params(key):
    """Deterministic init matching PyTorch Linear shapes (stored transposed).

    Weights cast to bf16 (HBM-traffic dominant); biases kept f32.
    Final layer zero-padded from 10 to 128 output columns for a lane-dense store.
    """
    dims = [(IN_FEATURES, H1), (H1, H2), (H2, N_OUT)]
    params = []
    for fan_in, fan_out in dims:
        kw, kb, key = jax.random.split(key, 3)
        bound = 1.0 / jnp.sqrt(fan_in)
        w = jax.random.uniform(kw, (fan_in, fan_out), jnp.float32, -bound, bound)
        b = jax.random.uniform(kb, (1, fan_out), jnp.float32, -bound, bound)
        params += [w.astype(jnp.bfloat16), b]
    # Pad layer 3 to 128 output columns (zeros).
    w3, b3 = params[4], params[5]
    params[4] = jnp.pad(w3, ((0, 0), (0, N_OUT_PAD - N_OUT)))
    params[5] = jnp.pad(b3, ((0, 0), (0, N_OUT_PAD - N_OUT)))
    return tuple(params)


def ref_forward(x_nchw, params):
    """Plain-JAX reference with matched bf16 weight / activation rounding."""
    w1, b1, w2, b2, w3, b3 = params
    xf = x_nchw.reshape(x_nchw.shape[0], -1)
    h = jnp.dot(xf.astype(jnp.bfloat16), w1, preferred_element_type=jnp.float32) + b1
    h = jnp.maximum(h, 0.0)
    h = jnp.dot(h.astype(jnp.bfloat16), w2, preferred_element_type=jnp.float32) + b2
    h = jnp.maximum(h, 0.0)
    h = jnp.dot(h.astype(jnp.bfloat16), w3, preferred_element_type=jnp.float32) + b3
    return h[:, :N_OUT]


if __name__ == "__main__":
    key = jax.random.PRNGKey(0)
    kx, kp = jax.random.split(key)

    B = 2
    x = jax.random.normal(kx, (B, 3, 32, 32), jnp.float32)  # NCHW, CIFAR-sized
    params = init_params(kp)

    logits = mlp_forward(x, params)
    jax.block_until_ready(logits)

    ref = ref_forward(x, params)
    assert logits.shape == (B, N_OUT)
    assert jnp.allclose(logits, ref, atol=1e-2, rtol=1e-2), (
        float(jnp.max(jnp.abs(logits - ref))))

    # Also exercise a >1-step grid (multi-tile / megacore path) for correctness.
    B2 = 130
    kx2, _ = jax.random.split(kx)
    x2 = jax.random.normal(kx2, (B2, 3, 32, 32), jnp.float32)
    logits2 = mlp_forward(x2, params)
    jax.block_until_ready(logits2)
    ref2 = ref_forward(x2, params)
    assert logits2.shape == (B2, N_OUT)
    assert jnp.allclose(logits2, ref2, atol=1e-2, rtol=1e-2), (
        float(jnp.max(jnp.abs(logits2 - ref2))))

    print("KERNEL_OK")
</pallas_src>

<mosaic_0001>
module attributes {stable_mosaic.version = 11 : i64} {
  func.func @mlp_kernel(%arg0: i32, %arg1: memref<8x3072xf32, #tpu.memory_space<vmem>>, %arg2: memref<3072x512xbf16, #tpu.memory_space<vmem>>, %arg3: memref<1x512xf32, #tpu.memory_space<vmem>>, %arg4: memref<512x256xbf16, #tpu.memory_space<vmem>>, %arg5: memref<1x256xf32, #tpu.memory_space<vmem>>, %arg6: memref<256x128xbf16, #tpu.memory_space<vmem>>, %arg7: memref<1x128xf32, #tpu.memory_space<vmem>>, %arg8: memref<8x128xf32, #tpu.memory_space<vmem>>) attributes {dimension_semantics = [#tpu.dimension_semantics<parallel>], iteration_bounds = array<i64: 1>, scalar_prefetch = 0 : i64, scratch_operands = 0 : i64, tpu.core_type = #tpu.core_type<tc>, window_params = [{transform_indices = @transform_0, window_bounds = array<i64: 8, 3072>}, {pipeline_mode = #tpu.pipeline_mode<synchronous>, transform_indices = @transform_1, window_bounds = array<i64: 3072, 512>}, {pipeline_mode = #tpu.pipeline_mode<synchronous>, transform_indices = @transform_2, window_bounds = array<i64: 1, 512>}, {pipeline_mode = #tpu.pipeline_mode<synchronous>, transform_indices = @transform_3, window_bounds = array<i64: 512, 256>}, {pipeline_mode = #tpu.pipeline_mode<synchronous>, transform_indices = @transform_4, window_bounds = array<i64: 1, 256>}, {pipeline_mode = #tpu.pipeline_mode<synchronous>, transform_indices = @transform_5, window_bounds = array<i64: 256, 128>}, {pipeline_mode = #tpu.pipeline_mode<synchronous>, transform_indices = @transform_6, window_bounds = array<i64: 1, 128>}, {transform_indices = @transform_7, window_bounds = array<i64: 8, 128>}]} {
    %c0 = arith.constant 0 : index
    %c0_0 = arith.constant 0 : index
    %0 = vector.load %arg1[%c0, %c0_0] : memref<8x3072xf32, #tpu.memory_space<vmem>>, vector<8x3072xf32>
    %1 = arith.truncf %0 : vector<8x3072xf32> to vector<8x3072xbf16>
    %c0_1 = arith.constant 0 : index
    %c0_2 = arith.constant 0 : index
    %2 = vector.load %arg2[%c0_1, %c0_2] : memref<3072x512xbf16, #tpu.memory_space<vmem>>, vector<3072x512xbf16>
    %cst = arith.constant dense<0.000000e+00> : vector<8x512xf32>
    %3 = tpu.matmul %1, %2, %cst {dimension_numbers = #tpu.dot_dimension_numbers<[1], [0], [0], [1], [0, 0, 1, 1], [], []>} : vector<8x3072xbf16>, vector<3072x512xbf16>, vector<8x512xf32> -> vector<8x512xf32>
    %c0_3 = arith.constant 0 : index
    %c0_4 = arith.constant 0 : index
    %4 = vector.load %arg3[%c0_3, %c0_4] : memref<1x512xf32, #tpu.memory_space<vmem>>, vector<1x512xf32>
    %5 = vector.broadcast %4 : vector<1x512xf32> to vector<8x512xf32>
    %6 = arith.addf %3, %5 : vector<8x512xf32>
    %cst_5 = arith.constant 0.000000e+00 : f32
    %7 = vector.broadcast %cst_5 : f32 to vector<8x512xf32>
    %8 = arith.maximumf %6, %7 : vector<8x512xf32>
    %9 = arith.truncf %8 : vector<8x512xf32> to vector<8x512xbf16>
    %c0_6 = arith.constant 0 : index
    %c0_7 = arith.constant 0 : index
    %10 = vector.load %arg4[%c0_6, %c0_7] : memref<512x256xbf16, #tpu.memory_space<vmem>>, vector<512x256xbf16>
    %cst_8 = arith.constant dense<0.000000e+00> : vector<8x256xf32>
    %11 = tpu.matmul %9, %10, %cst_8 {dimension_numbers = #tpu.dot_dimension_numbers<[1], [0], [0], [1], [0, 0, 1, 1], [], []>} : vector<8x512xbf16>, vector<512x256xbf16>, vector<8x256xf32> -> vector<8x256xf32>
    %c0_9 = arith.constant 0 : index
    %c0_10 = arith.constant 0 : index
    %12 = vector.load %arg5[%c0_9, %c0_10] : memref<1x256xf32, #tpu.memory_space<vmem>>, vector<1x256xf32>
    %13 = vector.broadcast %12 : vector<1x256xf32> to vector<8x256xf32>
    %14 = arith.addf %11, %13 : vector<8x256xf32>
    %cst_11 = arith.constant 0.000000e+00 : f32
    %15 = vector.broadcast %cst_11 : f32 to vector<8x256xf32>
    %16 = arith.maximumf %14, %15 : vector<8x256xf32>
    %17 = arith.truncf %16 : vector<8x256xf32> to vector<8x256xbf16>
    %c0_12 = arith.constant 0 : index
    %c0_13 = arith.constant 0 : index
    %18 = vector.load %arg6[%c0_12, %c0_13] : memref<256x128xbf16, #tpu.memory_space<vmem>>, vector<256x128xbf16>
    %cst_14 = arith.constant dense<0.000000e+00> : vector<8x128xf32>
    %19 = tpu.matmul %17, %18, %cst_14 {dimension_numbers = #tpu.dot_dimension_numbers<[1], [0], [0], [1], [0, 0, 1, 1], [], []>} : vector<8x256xbf16>, vector<256x128xbf16>, vector<8x128xf32> -> vector<8x128xf32>
    %c0_15 = arith.constant 0 : index
    %c0_16 = arith.constant 0 : index
    %20 = vector.load %arg7[%c0_15, %c0_16] : memref<1x128xf32, #tpu.memory_space<vmem>>, vector<1x128xf32>
    %21 = vector.broadcast %20 : vector<1x128xf32> to vector<8x128xf32>
    %22 = arith.addf %19, %21 : vector<8x128xf32>
    %c0_17 = arith.constant 0 : index
    %c0_18 = arith.constant 0 : index
    %23 = vector.load %arg8[%c0_17, %c0_18] : memref<8x128xf32, #tpu.memory_space<vmem>>, vector<8x128xf32>
    tpu.vector_store %arg8[%c0_17, %c0_18], %22 {strides = array<i32>} : memref<8x128xf32, #tpu.memory_space<vmem>>, vector<8x128xf32>,
    return
  }
  func.func @transform_0(%arg0: i32) -> (i32, i32) {
    %c0_i32 = arith.constant 0 : i32
    %c0_i32_0 = arith.constant 0 : i32
    return %arg0, %c0_i32 : i32, i32
  }
  func.func @transform_1(%arg0: i32) -> (i32, i32) {
    %c0_i32 = arith.constant 0 : i32
    %c0_i32_0 = arith.constant 0 : i32
    %c0_i32_1 = arith.constant 0 : i32
    return %c0_i32, %c0_i32_0 : i32, i32
  }
  func.func @transform_2(%arg0: i32) -> (i32, i32) {
    %c0_i32 = arith.constant 0 : i32
    %c0_i32_0 = arith.constant 0 : i32
    %c0_i32_1 = arith.constant 0 : i32
    return %c0_i32, %c0_i32_0 : i32, i32
  }
  func.func @transform_3(%arg0: i32) -> (i32, i32) {
    %c0_i32 = arith.constant 0 : i32
    %c0_i32_0 = arith.constant 0 : i32
    %c0_i32_1 = arith.constant 0 : i32
    return %c0_i32, %c0_i32_0 : i32, i32
  }
  func.func @transform_4(%arg0: i32) -> (i32, i32) {
    %c0_i32 = arith.constant 0 : i32
    %c0_i32_0 = arith.constant 0 : i32
    %c0_i32_1 = arith.constant 0 : i32
    return %c0_i32, %c0_i32_0 : i32, i32
  }
  func.func @transform_5(%arg0: i32) -> (i32, i32) {
    %c0_i32 = arith.constant 0 : i32
    %c0_i32_0 = arith.constant 0 : i32
    %c0_i32_1 = arith.constant 0 : i32
    return %c0_i32, %c0_i32_0 : i32, i32
  }
  func.func @transform_6(%arg0: i32) -> (i32, i32) {
    %c0_i32 = arith.constant 0 : i32
    %c0_i32_0 = arith.constant 0 : i32
    %c0_i32_1 = arith.constant 0 : i32
    return %c0_i32, %c0_i32_0 : i32, i32
  }
  func.func @transform_7(%arg0: i32) -> (i32, i32) {
    %c0_i32 = arith.constant 0 : i32
    %c0_i32_0 = arith.constant 0 : i32
    return %arg0, %c0_i32 : i32, i32
  }
}

</mosaic_0001>

<llo_original>
// kernel: tpu_custom_call.1
$region0: #{tpu_custom_call.1}
  #allocation0 [shape = 'u32[]', space=smem, size = 0x4, offset = 0x4, fixed_abs, tag = 'smem constant byte address 0x4 - core index']
  #allocation1 [shape = 'u32[144,128]{1,0:T(1,128)}', space=vmem, size = 0x12000, scoped, tag = 'internal scratch']
  %s0 = inlined_call_operand.hbm [shape: f32[8,3072], index: 0, kind: input, shape index: {}]
  %s1 = inlined_call_operand.hbm [shape: bf16[3072,512], index: 1, kind: input, shape index: {}]
  %s2 = inlined_call_operand.hbm [shape: f32[1,512], index: 2, kind: input, shape index: {}]
  %s3 = inlined_call_operand.hbm [shape: bf16[512,256], index: 3, kind: input, shape index: {}]
  %s4 = inlined_call_operand.hbm [shape: f32[1,256], index: 4, kind: input, shape index: {}]
  %s5 = inlined_call_operand.hbm [shape: bf16[256,128], index: 5, kind: input, shape index: {}]
  %s6 = inlined_call_operand.hbm [shape: f32[1,128], index: 6, kind: input, shape index: {}]
  %s7 = inlined_call_operand.hbm [shape: f32[8,128], index: 7, kind: output, shape index: {}]
  %s8 = sld [smem:[#allocation0]]
  $region66: #{tpu_custom_call.1} parent=0
    _
  %s10 = ssub.s32 1, %s8
  %s11 = scalar_select 0, %s10, %s8
  $region1: #{tpu_custom_call.1} parent=0
    #allocation2 [shape = 'u8[98304]{0}', space=vmem, size = 0x18000, scoped, tag = 'input window, operand 0, single buffered']
    #allocation3 [shape = 's32[1]{0}', space=sflag, size = 0x4, scoped, tag = 'scoped memory for tpu_custom_call.1']
    #allocation4 [shape = 's32[1]{0}', space=sflag, size = 0x4, scoped, tag = 'scoped memory for tpu_custom_call.1']
    #allocation5 [shape = 'u8[3145728]{0}', space=vmem, size = 0x300000, scoped, tag = 'input window, operand 1, single buffered']
    #allocation6 [shape = 's32[1]{0}', space=sflag, size = 0x4, scoped, tag = 'scoped memory for tpu_custom_call.1']
    #allocation7 [shape = 'u8[2048]{0}', space=vmem, size = 0x800, scoped, tag = 'input window, operand 2, single buffered']
    #allocation8 [shape = 'u8[262144]{0}', space=vmem, size = 0x40000, scoped, tag = 'input window, operand 3, single buffered']
    #allocation9 [shape = 's32[1]{0}', space=sflag, size = 0x4, scoped, tag = 'scoped memory for tpu_custom_call.1']
    #allocation10 [shape = 'u8[1024]{0}', space=vmem, size = 0x400, scoped, tag = 'input window, operand 4, single buffered']
    #allocation11 [shape = 'u8[65536]{0}', space=vmem, size = 0x10000, scoped, tag = 'input window, operand 5, single buffered']
    #allocation12 [shape = 's32[1]{0}', space=sflag, size = 0x4, scoped, tag = 'scoped memory for tpu_custom_call.1']
    #allocation13 [shape = 'u8[512]{0}', space=vmem, size = 0x400, scoped, tag = 'input window, operand 6, single buffered']
    #allocation14 [shape = 'u8[4096]{0}', space=vmem, size = 0x1000, scoped, tag = 'output window, operand 0, single buffered']
    %12 = vsyncpa [#allocation3], 0
    %13 = vsyncpa [#allocation6], 0
    %14 = vsyncpa [#allocation9], 0
    %15 = vsyncpa [#allocation12], 0
    %16 = vsyncpa [#allocation4], 0
    // Predicated region
    $region2: #{tpu_custom_call.1} parent=1 // pred_check
      _
    $region3: #{tpu_custom_call.1} parent=1 // pred_check_branch
      %18 = sbr.rel (0) target = $region5
    $region4: #{tpu_custom_call.1} parent=1 // pred_region
      %s20 = ssub.s32 3072, 3072
      %21 = vsyncadd [#allocation3], %s20
      %s23 = sshll.u32 [#allocation2], 4
      %s24 = int_to_ptr.vmem [resolvable:$true] %s23
      %26 = dma.hbm_to_vmem [thread:$0]  %s0, 3072, %s24, [#allocation3]
    $region5: #{tpu_custom_call.1} parent=1 // pred_fallthru
      _
    // Predicated region
    $region6: #{tpu_custom_call.1} parent=1 // pred_check
      _
    $region7: #{tpu_custom_call.1} parent=1 // pred_check_branch
      %28 = sbr.rel (0) target = $region9
    $region8: #{tpu_custom_call.1} parent=1 // pred_region
      %s30 = ssub.s32 98304, 98304
      %31 = vsyncadd [#allocation6], %s30
      %s32 = sshll.u32 [#allocation5], 4
      %s33 = int_to_ptr.vmem [resolvable:$true] %s32
      %38 = dma.hbm_to_vmem [thread:$0]  %s1, 98304, %s33, [#allocation6], 256, 256, 16
    $region9: #{tpu_custom_call.1} parent=1 // pred_fallthru
      _
    // Predicated region
    $region10: #{tpu_custom_call.1} parent=1 // pred_check
      _
    $region11: #{tpu_custom_call.1} parent=1 // pred_check_branch
      %40 = sbr.rel (0) target = $region13
    $region12: #{tpu_custom_call.1} parent=1 // pred_region
      %s42 = ssub.s32 64, 64
      %43 = vsyncadd [#allocation6], %s42
      %s45 = sshll.u32 [#allocation7], 4
      %s46 = int_to_ptr.vmem [resolvable:$true] %s45
      %48 = dma.hbm_to_vmem [thread:$0]  %s2, 64, %s46, [#allocation6]
    $region13: #{tpu_custom_call.1} parent=1 // pred_fallthru
      _
    // Predicated region
    $region14: #{tpu_custom_call.1} parent=1 // pred_check
      _
    $region15: #{tpu_custom_call.1} parent=1 // pred_check_branch
      %50 = sbr.rel (0) target = $region17
    $region16: #{tpu_custom_call.1} parent=1 // pred_region
      %s52 = ssub.s32 8192, 8192
      %53 = vsyncadd [#allocation9], %s52
      %s54 = sshll.u32 [#allocation8], 4
      %s55 = int_to_ptr.vmem [resolvable:$true] %s54
      %60 = dma.hbm_to_vmem [thread:$0]  %s3, 8192, %s55, [#allocation9], 128, 128, 8
    $region17: #{tpu_custom_call.1} parent=1 // pred_fallthru
      _
    // Predicated region
    $region18: #{tpu_custom_call.1} parent=1 // pred_check
      _
    $region19: #{tpu_custom_call.1} parent=1 // pred_check_branch
      %62 = sbr.rel (0) target = $region21
    $region20: #{tpu_custom_call.1} parent=1 // pred_region
      %s64 = ssub.s32 32, 32
      %65 = vsyncadd [#allocation9], %s64
      %s67 = sshll.u32 [#allocation10], 4
      %s68 = int_to_ptr.vmem [resolvable:$true] %s67
      %70 = dma.hbm_to_vmem [thread:$0]  %s4, 32, %s68, [#allocation9]
    $region21: #{tpu_custom_call.1} parent=1 // pred_fallthru
      _
    // Predicated region
    $region22: #{tpu_custom_call.1} parent=1 // pred_check
      _
    $region23: #{tpu_custom_call.1} parent=1 // pred_check_branch
      %72 = sbr.rel (0) target = $region25
    $region24: #{tpu_custom_call.1} parent=1 // pred_region
      %s74 = ssub.s32 2048, 2048
      %75 = vsyncadd [#allocation12], %s74
      %s76 = sshll.u32 [#allocation11], 4
      %s77 = int_to_ptr.vmem [resolvable:$true] %s76
      %82 = dma.hbm_to_vmem [thread:$0]  %s5, 2048, %s77, [#allocation12], 64, 64, 4
    $region25: #{tpu_custom_call.1} parent=1 // pred_fallthru
      _
    // Predicated region
    $region26: #{tpu_custom_call.1} parent=1 // pred_check
      _
    $region27: #{tpu_custom_call.1} parent=1 // pred_check_branch
      %84 = sbr.rel (0) target = $region29
    $region28: #{tpu_custom_call.1} parent=1 // pred_region
      %s86 = ssub.s32 16, 16
      %87 = vsyncadd [#allocation12], %s86
      %s89 = sshll.u32 [#allocation13], 4
      %s90 = int_to_ptr.vmem [resolvable:$true] %s89
      %92 = dma.hbm_to_vmem [thread:$0]  %s6, 16, %s90, [#allocation12]
    $region29: #{tpu_custom_call.1} parent=1 // pred_fallthru
      _
    // Predicated region
    $region30: #{tpu_custom_call.1} parent=1 // pred_check
      _
    $region31: #{tpu_custom_call.1} parent=1 // pred_check_branch
      %94 = sbr.rel (0) target = $region33
    $region32: #{tpu_custom_call.1} parent=1 // pred_region
      %95 = dma.done [#allocation3], 3072
    $region33: #{tpu_custom_call.1} parent=1 // pred_fallthru
      _
    // Predicated region
    $region34: #{tpu_custom_call.1} parent=1 // pred_check
      _
    $region35: #{tpu_custom_call.1} parent=1 // pred_check_branch
      %97 = sbr.rel (0) target = $region37
    $region36: #{tpu_custom_call.1} parent=1 // pred_region
      %98 = dma.done [#allocation6], 98304
    $region37: #{tpu_custom_call.1} parent=1 // pred_fallthru
      _
    // Predicated region
    $region38: #{tpu_custom_call.1} parent=1 // pred_check
      _
    $region39: #{tpu_custom_call.1} parent=1 // pred_check_branch
      %100 = sbr.rel (0) target = $region41
    $region40: #{tpu_custom_call.1} parent=1 // pred_region
      %101 = dma.done [#allocation6], 64
    $region41: #{tpu_custom_call.1} parent=1 // pred_fallthru
      _
    // Predicated region
    $region42: #{tpu_custom_call.1} parent=1 // pred_check
      _
    $region43: #{tpu_custom_call.1} parent=1 // pred_check_branch
      %103 = sbr.rel (0) target = $region45
    $region44: #{tpu_custom_call.1} parent=1 // pred_region
      %104 = dma.done [#allocation9], 8192
    $region45: #{tpu_custom_call.1} parent=1 // pred_fallthru
      _
    // Predicated region
    $region46: #{tpu_custom_call.1} parent=1 // pred_check
      _
    $region47: #{tpu_custom_call.1} parent=1 // pred_check_branch
      %106 = sbr.rel (0) target = $region49
    $region48: #{tpu_custom_call.1} parent=1 // pred_region
      %107 = dma.done [#allocation9], 32
    $region49: #{tpu_custom_call.1} parent=1 // pred_fallthru
      _
    // Predicated region
    $region50: #{tpu_custom_call.1} parent=1 // pred_check
      _
    $region51: #{tpu_custom_call.1} parent=1 // pred_check_branch
      %109 = sbr.rel (0) target = $region53
    $region52: #{tpu_custom_call.1} parent=1 // pred_region
      %110 = dma.done [#allocation12], 2048
    $region53: #{tpu_custom_call.1} parent=1 // pred_fallthru
      _
    // Predicated region
    $region54: #{tpu_custom_call.1} parent=1 // pred_check
      _
    $region55: #{tpu_custom_call.1} parent=1 // pred_check_branch
      %112 = sbr.rel (0) target = $region57
    $region56: #{tpu_custom_call.1} parent=1 // pred_region
      %113 = dma.done [#allocation12], 16
    $region57: #{tpu_custom_call.1} parent=1 // pred_fallthru
      _
    %v115 = vld [vmem:[#allocation2] sm:$0xff]
    %v116 = vld [vmem:[#allocation2 + $0x8] sm:$0xff]
    %v117 = vld [vmem:[#allocation2 + $0x10] sm:$0xff]
    %v118 = vld [vmem:[#allocation2 + $0x18] sm:$0xff]
    %v119 = vld [vmem:[#allocation2 + $0x20] sm:$0xff]
    %v120 = vld [vmem:[#allocation2 + $0x28] sm:$0xff]
    %v121 = vld [vmem:[#allocation2 + $0x30] sm:$0xff]
    %v122 = vld [vmem:[#allocation2 + $0x38] sm:$0xff]
    %v123 = vld [vmem:[#allocation2 + $0x40] sm:$0xff]
    %v124 = vld [vmem:[#allocation2 + $0x48] sm:$0xff]
    %v125 = vld [vmem:[#allocation2 + $0x50] sm:$0xff]
    %v126 = vld [vmem:[#allocation2 + $0x58] sm:$0xff]
    %v127 = vld [vmem:[#allocation2 + $0x60] sm:$0xff]
    %v128 = vld [vmem:[#allocation2 + $0x68] sm:$0xff]
    %v129 = vld [vmem:[#allocation2 + $0x70] sm:$0xff]
    %v130 = vld [vmem:[#allocation2 + $0x78] sm:$0xff]
    %v131 = vld [vmem:[#allocation2 + $0x80] sm:$0xff]
    %v132 = vld [vmem:[#allocation2 + $0x88] sm:$0xff]
    %v133 = vld [vmem:[#allocation2 + $0x90] sm:$0xff]
    %v134 = vld [vmem:[#allocation2 + $0x98] sm:$0xff]
    %v135 = vld [vmem:[#allocation2 + $0xa0] sm:$0xff]
    %v136 = vld [vmem:[#allocation2 + $0xa8] sm:$0xff]
    %v137 = vld [vmem:[#allocation2 + $0xb0] sm:$0xff]
    %v138 = vld [vmem:[#allocation2 + $0xb8] sm:$0xff]
    %v139 = vpack.c.bf16 %v115, %v115
    %v140 = vpack.c.bf16 %v116, %v116
    %v141 = vpack.c.bf16 %v117, %v117
    %v142 = vpack.c.bf16 %v118, %v118
    %v143 = vpack.c.bf16 %v119, %v119
    %v144 = vpack.c.bf16 %v120, %v120
    %v145 = vpack.c.bf16 %v121, %v121
    %v146 = vpack.c.bf16 %v122, %v122
    %v147 = vpack.c.bf16 %v123, %v123
    %v148 = vpack.c.bf16 %v124, %v124
    %v149 = vpack.c.bf16 %v125, %v125
    %v150 = vpack.c.bf16 %v126, %v126
    %v151 = vpack.c.bf16 %v127, %v127
    %v152 = vpack.c.bf16 %v128, %v128
    %v153 = vpack.c.bf16 %v129, %v129
    %v154 = vpack.c.bf16 %v130, %v130
    %v155 = vpack.c.bf16 %v131, %v131
    %v156 = vpack.c.bf16 %v132, %v132
    %v157 = vpack.c.bf16 %v133, %v133
    %v158 = vpack.c.bf16 %v134, %v134
    %v159 = vpack.c.bf16 %v135, %v135
    %v160 = vpack.c.bf16 %v136, %v136
    %v161 = vpack.c.bf16 %v137, %v137
    %v162 = vpack.c.bf16 %v138, %v138
    %v163 = vld [vmem:[#allocation5] sm:$0xff]
    %v164 = vld [vmem:[#allocation5 + $0x8] sm:$0xff]
    %v165 = vld [vmem:[#allocation5 + $0x10] sm:$0xff]
    %v166 = vld [vmem:[#allocation5 + $0x18] sm:$0xff]
    %v167 = vld [vmem:[#allocation5 + $0x20] sm:$0xff]
    %v168 = vld [vmem:[#allocation5 + $0x28] sm:$0xff]
    %v169 = vld [vmem:[#allocation5 + $0x30] sm:$0xff]
    %v170 = vld [vmem:[#allocation5 + $0x38] sm:$0xff]
    %v171 = vld [vmem:[#allocation5 + $0x40] sm:$0xff]
    %v172 = vld [vmem:[#allocation5 + $0x48] sm:$0xff]
    %v173 = vld [vmem:[#allocation5 + $0x50] sm:$0xff]
    %v174 = vld [vmem:[#allocation5 + $0x58] sm:$0xff]
    %v175 = vld [vmem:[#allocation5 + $0x60] sm:$0xff]
    %v176 = vld [vmem:[#allocation5 + $0x68] sm:$0xff]
    %v177 = vld [vmem:[#allocation5 + $0x70] sm:$0xff]
    %v178 = vld [vmem:[#allocation5 + $0x78] sm:$0xff]
    %v179 = vld [vmem:[#allocation5 + $0x80] sm:$0xff]
    %v180 = vld [vmem:[#allocation5 + $0x88] sm:$0xff]
    %v181 = vld [vmem:[#allocation5 + $0x90] sm:$0xff]
    %v182 = vld [vmem:[#allocation5 + $0x98] sm:$0xff]
    %v183 = vld [vmem:[#allocation5 + $0xa0] sm:$0xff]
    %v184 = vld [vmem:[#allocation5 + $0xa8] sm:$0xff]
    %v185 = vld [vmem:[#allocation5 + $0xb0] sm:$0xff]
    %v186 = vld [vmem:[#allocation5 + $0xb8] sm:$0xff]
    %v187 = vld [vmem:[#allocation5 + $0xc0] sm:$0xff]
    %v188 = vld [vmem:[#allocation5 + $0xc8] sm:$0xff]
    %v189 = vld [vmem:[#allocation5 + $0xd0] sm:$0xff]
    %v190 = vld [vmem:[#allocation5 + $0xd8] sm:$0xff]
    %v191 = vld [vmem:[#allocation5 + $0xe0] sm:$0xff]
    %v192 = vld [vmem:[#allocation5 + $0xe8] sm:$0xff]
    %v193 = vld [vmem:[#allocation5 + $0xf0] sm:$0xff]
    %v194 = vld [vmem:[#allocation5 + $0xf8] sm:$0xff]
    %v195 = vld [vmem:[#allocation5 + $0x100] sm:$0xff]
    %v196 = vld [vmem:[#allocation5 + $0x108] sm:$0xff]
    %v197 = vld [vmem:[#allocation5 + $0x110] sm:$0xff]
    %v198 = vld [vmem:[#allocation5 + $0x118] sm:$0xff]
    %v199 = vld [vmem:[#allocation5 + $0x120] sm:$0xff]
    %v200 = vld [vmem:[#allocation5 + $0x128] sm:$0xff]
    %v201 = vld [vmem:[#allocation5 + $0x130] sm:$0xff]
    %v202 = vld [vmem:[#allocation5 + $0x138] sm:$0xff]
    %v203 = vld [vmem:[#allocation5 + $0x140] sm:$0xff]
    %v204 = vld [vmem:[#allocation5 + $0x148] sm:$0xff]
    %v205 = vld [vmem:[#allocation5 + $0x150] sm:$0xff]
    %v206 = vld [vmem:[#allocation5 + $0x158] sm:$0xff]
    %v207 = vld [vmem:[#allocation5 + $0x160] sm:$0xff]
    %v208 = vld [vmem:[#allocation5 + $0x168] sm:$0xff]
    %v209 = vld [vmem:[#allocation5 + $0x170] sm:$0xff]
    %v210 = vld [vmem:[#allocation5 + $0x178] sm:$0xff]
    %v211 = vld [vmem:[#allocation5 + $0x180] sm:$0xff]
    %v212 = vld [vmem:[#allocation5 + $0x188] sm:$0xff]
    %v213 = vld [vmem:[#allocation5 + $0x190] sm:$0xff]
    %v214 = vld [vmem:[#allocation5 + $0x198] sm:$0xff]
    %v215 = vld [vmem:[#allocation5 + $0x1a0] sm:$0xff]
    %v216 = vld [vmem:[#allocation5 + $0x1a8] sm:$0xff]
    %v217 = vld [vmem:[#allocation5 + $0x1b0] sm:$0xff]
    %v218 = vld [vmem:[#allocation5 + $0x1b8] sm:$0xff]
    %v219 = vld [vmem:[#allocation5 + $0x1c0] sm:$0xff]
    %v220 = vld [vmem:[#allocation5 + $0x1c8] sm:$0xff]
    %v221 = vld [vmem:[#allocation5 + $0x1d0] sm:$0xff]
    %v222 = vld [vmem:[#allocation5 + $0x1d8] sm:$0xff]
    %v223 = vld [vmem:[#allocation5 + $0x1e0] sm:$0xff]
    %v224 = vld [vmem:[#allocation5 + $0x1e8] sm:$0xff]
    %v225 = vld [vmem:[#allocation5 + $0x1f0] sm:$0xff]
    %v226 = vld [vmem:[#allocation5 + $0x1f8] sm:$0xff]
    %v227 = vld [vmem:[#allocation5 + $0x200] sm:$0xff]
    %v228 = vld [vmem:[#allocation5 + $0x208] sm:$0xff]
    %v229 = vld [vmem:[#allocation5 + $0x210] sm:$0xff]
    %v230 = vld [vmem:[#allocation5 + $0x218] sm:$0xff]
    %v231 = vld [vmem:[#allocation5 + $0x220] sm:$0xff]
    %v232 = vld [vmem:[#allocation5 + $0x228] sm:$0xff]
    %v233 = vld [vmem:[#allocation5 + $0x230] sm:$0xff]
    %v234 = vld [vmem:[#allocation5 + $0x238] sm:$0xff]
    %v235 = vld [vmem:[#allocation5 + $0x240] sm:$0xff]
    %v236 = vld [vmem:[#allocation5 + $0x248] sm:$0xff]
    %v237 = vld [vmem:[#allocation5 + $0x250] sm:$0xff]
    %v238 = vld [vmem:[#allocation5 + $0x258] sm:$0xff]
    %v239 = vld [vmem:[#allocation5 + $0x260] sm:$0xff]
    %v240 = vld [vmem:[#allocation5 + $0x268] sm:$0xff]
    %v241 = vld [vmem:[#allocation5 + $0x270] sm:$0xff]
    %v242 = vld [vmem:[#allocation5 + $0x278] sm:$0xff]
    %v243 = vld [vmem:[#allocation5 + $0x280] sm:$0xff]
    %v244 = vld [vmem:[#allocation5 + $0x288] sm:$0xff]
    %v245 = vld [vmem:[#allocation5 + $0x290] sm:$0xff]
    %v246 = vld [vmem:[#allocation5 + $0x298] sm:$0xff]
    %v247 = vld [vmem:[#allocation5 + $0x2a0] sm:$0xff]
    %v248 = vld [vmem:[#allocation5 + $0x2a8] sm:$0xff]
    %v249 = vld [vmem:[#allocation5 + $0x2b0] sm:$0xff]
    %v250 = vld [vmem:[#allocation5 + $0x2b8] sm:$0xff]
    %v251 = vld [vmem:[#allocation5 + $0x2c0] sm:$0xff]
    %v252 = vld [vmem:[#allocation5 + $0x2c8] sm:$0xff]
    %v253 = vld [vmem:[#allocation5 + $0x2d0] sm:$0xff]
    %v254 = vld [vmem:[#allocation5 + $0x2d8] sm:$0xff]
    %v255 = vld [vmem:[#allocation5 + $0x2e0] sm:$0xff]
    %v256 = vld [vmem:[#allocation5 + $0x2e8] sm:$0xff]
    %v257 = vld [vmem:[#allocation5 + $0x2f0] sm:$0xff]
    %v258 = vld [vmem:[#allocation5 + $0x2f8] sm:$0xff]
    %v259 = vld [vmem:[#allocation5 + $0x300] sm:$0xff]
    %v260 = vld [vmem:[#allocation5 + $0x308] sm:$0xff]
    %v261 = vld [vmem:[#allocation5 + $0x310] sm:$0xff]
    %v262 = vld [vmem:[#allocation5 + $0x318] sm:$0xff]
    %v263 = vld [vmem:[#allocation5 + $0x320] sm:$0xff]
    %v264 = vld [vmem:[#allocation5 + $0x328] sm:$0xff]
    %v265 = vld [vmem:[#allocation5 + $0x330] sm:$0xff]
    %v266 = vld [vmem:[#allocation5 + $0x338] sm:$0xff]
    %v267 = vld [vmem:[#allocation5 + $0x340] sm:$0xff]
    %v268 = vld [vmem:[#allocation5 + $0x348] sm:$0xff]
    %v269 = vld [vmem:[#allocation5 + $0x350] sm:$0xff]
    %v270 = vld [vmem:[#allocation5 + $0x358] sm:$0xff]
    %v271 = vld [vmem:[#allocation5 + $0x360] sm:$0xff]
    %v272 = vld [vmem:[#allocation5 + $0x368] sm:$0xff]
    %v273 = vld [vmem:[#allocation5 + $0x370] sm:$0xff]
    %v274 = vld [vmem:[#allocation5 + $0x378] sm:$0xff]
    %v275 = vld [vmem:[#allocation5 + $0x380] sm:$0xff]
    %v276 = vld [vmem:[#allocation5 + $0x388] sm:$0xff]
    %v277 = vld [vmem:[#allocation5 + $0x390] sm:$0xff]
    %v278 = vld [vmem:[#allocation5 + $0x398] sm:$0xff]
    %v279 = vld [vmem:[#allocation5 + $0x3a0] sm:$0xff]
    %v280 = vld [vmem:[#allocation5 + $0x3a8] sm:$0xff]
    %v281 = vld [vmem:[#allocation5 + $0x3b0] sm:$0xff]
    %v282 = vld [vmem:[#allocation5 + $0x3b8] sm:$0xff]
    %v283 = vld [vmem:[#allocation5 + $0x3c0] sm:$0xff]
    %v284 = vld [vmem:[#allocation5 + $0x3c8] sm:$0xff]
    %v285 = vld [vmem:[#allocation5 + $0x3d0] sm:$0xff]
    %v286 = vld [vmem:[#allocation5 + $0x3d8] sm:$0xff]
    %v287 = vld [vmem:[#allocation5 + $0x3e0] sm:$0xff]
    %v288 = vld [vmem:[#allocation5 + $0x3e8] sm:$0xff]
    %v289 = vld [vmem:[#allocation5 + $0x3f0] sm:$0xff]
    %v290 = vld [vmem:[#allocation5 + $0x3f8] sm:$0xff]
    %v291 = vld [vmem:[#allocation5 + $0x400] sm:$0xff]
    %v292 = vld [vmem:[#allocation5 + $0x408] sm:$0xff]
    %v293 = vld [vmem:[#allocation5 + $0x410] sm:$0xff]
    %v294 = vld [vmem:[#allocation5 + $0x418] sm:$0xff]
    %v295 = vld [vmem:[#allocation5 + $0x420] sm:$0xff]
    %v296 = vld [vmem:[#allocation5 + $0x428] sm:$0xff]
    %v297 = vld [vmem:[#allocation5 + $0x430] sm:$0xff]
    %v298 = vld [vmem:[#allocation5 + $0x438] sm:$0xff]
    %v299 = vld [vmem:[#allocation5 + $0x440] sm:$0xff]
    %v300 = vld [vmem:[#allocation5 + $0x448] sm:$0xff]
    %v301 = vld [vmem:[#allocation5 + $0x450] sm:$0xff]
    %v302 = vld [vmem:[#allocation5 + $0x458] sm:$0xff]
    %v303 = vld [vmem:[#allocation5 + $0x460] sm:$0xff]
    %v304 = vld [vmem:[#allocation5 + $0x468] sm:$0xff]
    %v305 = vld [vmem:[#allocation5 + $0x470] sm:$0xff]
    %v306 = vld [vmem:[#allocation5 + $0x478] sm:$0xff]
    %v307 = vld [vmem:[#allocation5 + $0x480] sm:$0xff]
    %v308 = vld [vmem:[#allocation5 + $0x488] sm:$0xff]
    %v309 = vld [vmem:[#allocation5 + $0x490] sm:$0xff]
    %v310 = vld [vmem:[#allocation5 + $0x498] sm:$0xff]
    %v311 = vld [vmem:[#allocation5 + $0x4a0] sm:$0xff]
    %v312 = vld [vmem:[#allocation5 + $0x4a8] sm:$0xff]
    %v313 = vld [vmem:[#allocation5 + $0x4b0] sm:$0xff]
    %v314 = vld [vmem:[#allocation5 + $0x4b8] sm:$0xff]
    %v315 = vld [vmem:[#allocation5 + $0x4c0] sm:$0xff]
    %v316 = vld [vmem:[#allocation5 + $0x4c8] sm:$0xff]
    %v317 = vld [vmem:[#allocation5 + $0x4d0] sm:$0xff]
    %v318 = vld [vmem:[#allocation5 + $0x4d8] sm:$0xff]
    %v319 = vld [vmem:[#allocation5 + $0x4e0] sm:$0xff]
    %v320 = vld [vmem:[#allocation5 + $0x4e8] sm:$0xff]
    %v321 = vld [vmem:[#allocation5 + $0x4f0] sm:$0xff]
    %v322 = vld [vmem:[#allocation5 + $0x4f8] sm:$0xff]
    %v323 = vld [vmem:[#allocation5 + $0x500] sm:$0xff]
    %v324 = vld [vmem:[#allocation5 + $0x508] sm:$0xff]
    %v325 = vld [vmem:[#allocation5 + $0x510] sm:$0xff]
    %v326 = vld [vmem:[#allocation5 + $0x518] sm:$0xff]
    %v327 = vld [vmem:[#allocation5 + $0x520] sm:$0xff]
    %v328 = vld [vmem:[#allocation5 + $0x528] sm:$0xff]
    %v329 = vld [vmem:[#allocation5 + $0x530] sm:$0xff]
    %v330 = vld [vmem:[#allocation5 + $0x538] sm:$0xff]
    %v331 = vld [vmem:[#allocation5 + $0x540] sm:$0xff]
    %v332 = vld [vmem:[#allocation5 + $0x548] sm:$0xff]
    %v333 = vld [vmem:[#allocation5 + $0x550] sm:$0xff]
    %v334 = vld [vmem:[#allocation5 + $0x558] sm:$0xff]
    %v335 = vld [vmem:[#allocation5 + $0x560] sm:$0xff]
    %v336 = vld [vmem:[#allocation5 + $0x568] sm:$0xff]
    %v337 = vld [vmem:[#allocation5 + $0x570] sm:$0xff]
    %v338 = vld [vmem:[#allocation5 + $0x578] sm:$0xff]
    %v339 = vld [vmem:[#allocation5 + $0x580] sm:$0xff]
    %v340 = vld [vmem:[#allocation5 + $0x588] sm:$0xff]
    %v341 = vld [vmem:[#allocation5 + $0x590] sm:$0xff]
    %v342 = vld [vmem:[#allocation5 + $0x598] sm:$0xff]
    %v343 = vld [vmem:[#allocation5 + $0x5a0] sm:$0xff]
    %v344 = vld [vmem:[#allocation5 + $0x5a8] sm:$0xff]
    %v345 = vld [vmem:[#allocation5 + $0x5b0] sm:$0xff]
    %v346 = vld [vmem:[#allocation5 + $0x5b8] sm:$0xff]
    %v347 = vld [vmem:[#allocation5 + $0x5c0] sm:$0xff]
    %v348 = vld [vmem:[#allocation5 + $0x5c8] sm:$0xff]
    %v349 = vld [vmem:[#allocation5 + $0x5d0] sm:$0xff]
    %v350 = vld [vmem:[#allocation5 + $0x5d8] sm:$0xff]
    %v351 = vld [vmem:[#allocation5 + $0x5e0] sm:$0xff]
    %v352 = vld [vmem:[#allocation5 + $0x5e8] sm:$0xff]
    %v353 = vld [vmem:[#allocation5 + $0x5f0] sm:$0xff]
    %v354 = vld [vmem:[#allocation5 + $0x5f8] sm:$0xff]
    %v355 = vld [vmem:[#allocation5 + $0x600] sm:$0xff]
    %v356 = vld [vmem:[#allocation5 + $0x608] sm:$0xff]
    %v357 = vld [vmem:[#allocation5 + $0x610] sm:$0xff]
    %v358 = vld [vmem:[#allocation5 + $0x618] sm:$0xff]
    %v359 = vld [vmem:[#allocation5 + $0x620] sm:$0xff]
    %v360 = vld [vmem:[#allocation5 + $0x628] sm:$0xff]
    %v361 = vld [vmem:[#allocation5 + $0x630] sm:$0xff]
    %v362 = vld [vmem:[#allocation5 + $0x638] sm:$0xff]
    %v363 = vld [vmem:[#allocation5 + $0x640] sm:$0xff]
    %v364 = vld [vmem:[#allocation5 + $0x648] sm:$0xff]
    %v365 = vld [vmem:[#allocation5 + $0x650] sm:$0xff]
    %v366 = vld [vmem:[#allocation5 + $0x658] sm:$0xff]
    %v367 = vld [vmem:[#allocation5 + $0x660] sm:$0xff]
    %v368 = vld [vmem:[#allocation5 + $0x668] sm:$0xff]
    %v369 = vld [vmem:[#allocation5 + $0x670] sm:$0xff]
    %v370 = vld [vmem:[#allocation5 + $0x678] sm:$0xff]
    %v371 = vld [vmem:[#allocation5 + $0x680] sm:$0xff]
    %v372 = vld [vmem:[#allocation5 + $0x688] sm:$0xff]
    %v373 = vld [vmem:[#allocation5 + $0x690] sm:$0xff]
    %v374 = vld [vmem:[#allocation5 + $0x698] sm:$0xff]
    %v375 = vld [vmem:[#allocation5 + $0x6a0] sm:$0xff]
    %v376 = vld [vmem:[#allocation5 + $0x6a8] sm:$0xff]
    %v377 = vld [vmem:[#allocation5 + $0x6b0] sm:$0xff]
    %v378 = vld [vmem:[#allocation5 + $0x6b8] sm:$0xff]
    %v379 = vld [vmem:[#allocation5 + $0x6c0] sm:$0xff]
    %v380 = vld [vmem:[#allocation5 + $0x6c8] sm:$0xff]
    %v381 = vld [vmem:[#allocation5 + $0x6d0] sm:$0xff]
    %v382 = vld [vmem:[#allocation5 + $0x6d8] sm:$0xff]
    %v383 = vld [vmem:[#allocation5 + $0x6e0] sm:$0xff]
    %v384 = vld [vmem:[#allocation5 + $0x6e8] sm:$0xff]
    %v385 = vld [vmem:[#allocation5 + $0x6f0] sm:$0xff]
    %v386 = vld [vmem:[#allocation5 + $0x6f8] sm:$0xff]
    %v387 = vld [vmem:[#allocation5 + $0x700] sm:$0xff]
    %v388 = vld [vmem:[#allocation5 + $0x708] sm:$0xff]
    %v389 = vld [vmem:[#allocation5 + $0x710] sm:$0xff]
    %v390 = vld [vmem:[#allocation5 + $0x718] sm:$0xff]
    %v391 = vld [vmem:[#allocation5 + $0x720] sm:$0xff]
    %v392 = vld [vmem:[#allocation5 + $0x728] sm:$0xff]
    %v393 = vld [vmem:[#allocation5 + $0x730] sm:$0xff]
    %v394 = vld [vmem:[#allocation5 + $0x738] sm:$0xff]
    %v395 = vld [vmem:[#allocation5 + $0x740] sm:$0xff]
    %v396 = vld [vmem:[#allocation5 + $0x748] sm:$0xff]
    %v397 = vld [vmem:[#allocation5 + $0x750] sm:$0xff]
    %v398 = vld [vmem:[#allocation5 + $0x758] sm:$0xff]
    %v399 = vld [vmem:[#allocation5 + $0x760] sm:$0xff]
    %v400 = vld [vmem:[#allocation5 + $0x768] sm:$0xff]
    %v401 = vld [vmem:[#allocation5 + $0x770] sm:$0xff]
    %v402 = vld [vmem:[#allocation5 + $0x778] sm:$0xff]
    %v403 = vld [vmem:[#allocation5 + $0x780] sm:$0xff]
    %v404 = vld [vmem:[#allocation5 + $0x788] sm:$0xff]
    %v405 = vld [vmem:[#allocation5 + $0x790] sm:$0xff]
    %v406 = vld [vmem:[#allocation5 + $0x798] sm:$0xff]
    %v407 = vld [vmem:[#allocation5 + $0x7a0] sm:$0xff]
    %v408 = vld [vmem:[#allocation5 + $0x7a8] sm:$0xff]
    %v409 = vld [vmem:[#allocation5 + $0x7b0] sm:$0xff]
    %v410 = vld [vmem:[#allocation5 + $0x7b8] sm:$0xff]
    %v411 = vld [vmem:[#allocation5 + $0x7c0] sm:$0xff]
    %v412 = vld [vmem:[#allocation5 + $0x7c8] sm:$0xff]
    %v413 = vld [vmem:[#allocation5 + $0x7d0] sm:$0xff]
    %v414 = vld [vmem:[#allocation5 + $0x7d8] sm:$0xff]
    %v415 = vld [vmem:[#allocation5 + $0x7e0] sm:$0xff]
    %v416 = vld [vmem:[#allocation5 + $0x7e8] sm:$0xff]
    %v417 = vld [vmem:[#allocation5 + $0x7f0] sm:$0xff]
    %v418 = vld [vmem:[#allocation5 + $0x7f8] sm:$0xff]
    %v419 = vld [vmem:[#allocation5 + $0x800] sm:$0xff]
    %v420 = vld [vmem:[#allocation5 + $0x808] sm:$0xff]
    %v421 = vld [vmem:[#allocation5 + $0x810] sm:$0xff]
    %v422 = vld [vmem:[#allocation5 + $0x818] sm:$0xff]
    %v423 = vld [vmem:[#allocation5 + $0x820] sm:$0xff]
    %v424 = vld [vmem:[#allocation5 + $0x828] sm:$0xff]
    %v425 = vld [vmem:[#allocation5 + $0x830] sm:$0xff]
    %v426 = vld [vmem:[#allocation5 + $0x838] sm:$0xff]
    %v427 = vld [vmem:[#allocation5 + $0x840] sm:$0xff]
    %v428 = vld [vmem:[#allocation5 + $0x848] sm:$0xff]
    %v429 = vld [vmem:[#allocation5 + $0x850] sm:$0xff]
    %v430 = vld [vmem:[#allocation5 + $0x858] sm:$0xff]
    %v431 = vld [vmem:[#allocation5 + $0x860] sm:$0xff]
    %v432 = vld [vmem:[#allocation5 + $0x868] sm:$0xff]
    %v433 = vld [vmem:[#allocation5 + $0x870] sm:$0xff]
    %v434 = vld [vmem:[#allocation5 + $0x878] sm:$0xff]
    %v435 = vld [vmem:[#allocation5 + $0x880] sm:$0xff]
    %v436 = vld [vmem:[#allocation5 + $0x888] sm:$0xff]
    %v437 = vld [vmem:[#allocation5 + $0x890] sm:$0xff]
    %v438 = vld [vmem:[#allocation5 + $0x898] sm:$0xff]
    %v439 = vld [vmem:[#allocation5 + $0x8a0] sm:$0xff]
    %v440 = vld [vmem:[#allocation5 + $0x8a8] sm:$0xff]
    %v441 = vld [vmem:[#allocation5 + $0x8b0] sm:$0xff]
    %v442 = vld [vmem:[#allocation5 + $0x8b8] sm:$0xff]
    %v443 = vld [vmem:[#allocation5 + $0x8c0] sm:$0xff]
    %v444 = vld [vmem:[#allocation5 + $0x8c8] sm:$0xff]
    %v445 = vld [vmem:[#allocation5 + $0x8d0] sm:$0xff]
    %v446 = vld [vmem:[#allocation5 + $0x8d8] sm:$0xff]
    %v447 = vld [vmem:[#allocation5 + $0x8e0] sm:$0xff]
    %v448 = vld [vmem:[#allocation5 + $0x8e8] sm:$0xff]
    %v449 = vld [vmem:[#allocation5 + $0x8f0] sm:$0xff]
    %v450 = vld [vmem:[#allocation5 + $0x8f8] sm:$0xff]
    %v451 = vld [vmem:[#allocation5 + $0x900] sm:$0xff]
    %v452 = vld [vmem:[#allocation5 + $0x908] sm:$0xff]
    %v453 = vld [vmem:[#allocation5 + $0x910] sm:$0xff]
    %v454 = vld [vmem:[#allocation5 + $0x918] sm:$0xff]
    %v455 = vld [vmem:[#allocation5 + $0x920] sm:$0xff]
    %v456 = vld [vmem:[#allocation5 + $0x928] sm:$0xff]
    %v457 = vld [vmem:[#allocation5 + $0x930] sm:$0xff]
    %v458 = vld [vmem:[#allocation5 + $0x938] sm:$0xff]
    %v459 = vld [vmem:[#allocation5 + $0x940] sm:$0xff]
    %v460 = vld [vmem:[#allocation5 + $0x948] sm:$0xff]
    %v461 = vld [vmem:[#allocation5 + $0x950] sm:$0xff]
    %v462 = vld [vmem:[#allocation5 + $0x958] sm:$0xff]
    %v463 = vld [vmem:[#allocation5 + $0x960] sm:$0xff]
    %v464 = vld [vmem:[#allocation5 + $0x968] sm:$0xff]
    %v465 = vld [vmem:[#allocation5 + $0x970] sm:$0xff]
    %v466 = vld [vmem:[#allocation5 + $0x978] sm:$0xff]
    %v467 = vld [vmem:[#allocation5 + $0x980] sm:$0xff]
    %v468 = vld [vmem:[#allocation5 + $0x988] sm:$0xff]
    %v469 = vld [vmem:[#allocation5 + $0x990] sm:$0xff]
    %v470 = vld [vmem:[#allocation5 + $0x998] sm:$0xff]
    %v471 = vld [vmem:[#allocation5 + $0x9a0] sm:$0xff]
    %v472 = vld [vmem:[#allocation5 + $0x9a8] sm:$0xff]
    %v473 = vld [vmem:[#allocation5 + $0x9b0] sm:$0xff]
    %v474 = vld [vmem:[#allocation5 + $0x9b8] sm:$0xff]
    %v475 = vld [vmem:[#allocation5 + $0x9c0] sm:$0xff]
    %v476 = vld [vmem:[#allocation5 + $0x9c8] sm:$0xff]
    %v477 = vld [vmem:[#allocation5 + $0x9d0] sm:$0xff]
    %v478 = vld [vmem:[#allocation5 + $0x9d8] sm:$0xff]
    %v479 = vld [vmem:[#allocation5 + $0x9e0] sm:$0xff]
    %v480 = vld [vmem:[#allocation5 + $0x9e8] sm:$0xff]
    %v481 = vld [vmem:[#allocation5 + $0x9f0] sm:$0xff]
    %v482 = vld [vmem:[#allocation5 + $0x9f8] sm:$0xff]
    %v483 = vld [vmem:[#allocation5 + $0xa00] sm:$0xff]
    %v484 = vld [vmem:[#allocation5 + $0xa08] sm:$0xff]
    %v485 = vld [vmem:[#allocation5 + $0xa10] sm:$0xff]
    %v486 = vld [vmem:[#allocation5 + $0xa18] sm:$0xff]
    %v487 = vld [vmem:[#allocation5 + $0xa20] sm:$0xff]
    %v488 = vld [vmem:[#allocation5 + $0xa28] sm:$0xff]
    %v489 = vld [vmem:[#allocation5 + $0xa30] sm:$0xff]
    %v490 = vld [vmem:[#allocation5 + $0xa38] sm:$0xff]
    %v491 = vld [vmem:[#allocation5 + $0xa40] sm:$0xff]
    %v492 = vld [vmem:[#allocation5 + $0xa48] sm:$0xff]
    %v493 = vld [vmem:[#allocation5 + $0xa50] sm:$0xff]
    %v494 = vld [vmem:[#allocation5 + $0xa58] sm:$0xff]
    %v495 = vld [vmem:[#allocation5 + $0xa60] sm:$0xff]
    %v496 = vld [vmem:[#allocation5 + $0xa68] sm:$0xff]
    %v497 = vld [vmem:[#allocation5 + $0xa70] sm:$0xff]
    %v498 = vld [vmem:[#allocation5 + $0xa78] sm:$0xff]
    %v499 = vld [vmem:[#allocation5 + $0xa80] sm:$0xff]
    %v500 = vld [vmem:[#allocation5 + $0xa88] sm:$0xff]
    %v501 = vld [vmem:[#allocation5 + $0xa90] sm:$0xff]
    %v502 = vld [vmem:[#allocation5 + $0xa98] sm:$0xff]
    %v503 = vld [vmem:[#allocation5 + $0xaa0] sm:$0xff]
    %v504 = vld [vmem:[#allocation5 + $0xaa8] sm:$0xff]
    %v505 = vld [vmem:[#allocation5 + $0xab0] sm:$0xff]
    %v506 = vld [vmem:[#allocation5 + $0xab8] sm:$0xff]
    %v507 = vld [vmem:[#allocation5 + $0xac0] sm:$0xff]
    %v508 = vld [vmem:[#allocation5 + $0xac8] sm:$0xff]
    %v509 = vld [vmem:[#allocation5 + $0xad0] sm:$0xff]
    %v510 = vld [vmem:[#allocation5 + $0xad8] sm:$0xff]
    %v511 = vld [vmem:[#allocation5 + $0xae0] sm:$0xff]
    %v512 = vld [vmem:[#allocation5 + $0xae8] sm:$0xff]
    %v513 = vld [vmem:[#allocation5 + $0xaf0] sm:$0xff]
    %v514 = vld [vmem:[#allocation5 + $0xaf8] sm:$0xff]
    %v515 = vld [vmem:[#allocation5 + $0xb00] sm:$0xff]
    %v516 = vld [vmem:[#allocation5 + $0xb08] sm:$0xff]
    %v517 = vld [vmem:[#allocation5 + $0xb10] sm:$0xff]
    %v518 = vld [vmem:[#allocation5 + $0xb18] sm:$0xff]
    %v519 = vld [vmem:[#allocation5 + $0xb20] sm:$0xff]
    %v520 = vld [vmem:[#allocation5 + $0xb28] sm:$0xff]
    %v521 = vld [vmem:[#allocation5 + $0xb30] sm:$0xff]
    %v522 = vld [vmem:[#allocation5 + $0xb38] sm:$0xff]
    %v523 = vld [vmem:[#allocation5 + $0xb40] sm:$0xff]
    %v524 = vld [vmem:[#allocation5 + $0xb48] sm:$0xff]
    %v525 = vld [vmem:[#allocation5 + $0xb50] sm:$0xff]
    %v526 = vld [vmem:[#allocation5 + $0xb58] sm:$0xff]
    %v527 = vld [vmem:[#allocation5 + $0xb60] sm:$0xff]
    %v528 = vld [vmem:[#allocation5 + $0xb68] sm:$0xff]
    %v529 = vld [vmem:[#allocation5 + $0xb70] sm:$0xff]
    %v530 = vld [vmem:[#allocation5 + $0xb78] sm:$0xff]
    %v531 = vld [vmem:[#allocation5 + $0xb80] sm:$0xff]
    %v532 = vld [vmem:[#allocation5 + $0xb88] sm:$0xff]
    %v533 = vld [vmem:[#allocation5 + $0xb90] sm:$0xff]
    %v534 = vld [vmem:[#allocation5 + $0xb98] sm:$0xff]
    %v535 = vld [vmem:[#allocation5 + $0xba0] sm:$0xff]
    %v536 = vld [vmem:[#allocation5 + $0xba8] sm:$0xff]
    %v537 = vld [vmem:[#allocation5 + $0xbb0] sm:$0xff]
    %v538 = vld [vmem:[#allocation5 + $0xbb8] sm:$0xff]
    %v539 = vld [vmem:[#allocation5 + $0xbc0] sm:$0xff]
    %v540 = vld [vmem:[#allocation5 + $0xbc8] sm:$0xff]
    %v541 = vld [vmem:[#allocation5 + $0xbd0] sm:$0xff]
    %v542 = vld [vmem:[#allocation5 + $0xbd8] sm:$0xff]
    %v543 = vld [vmem:[#allocation5 + $0xbe0] sm:$0xff]
    %v544 = vld [vmem:[#allocation5 + $0xbe8] sm:$0xff]
    %v545 = vld [vmem:[#allocation5 + $0xbf0] sm:$0xff]
    %v546 = vld [vmem:[#allocation5 + $0xbf8] sm:$0xff]
    %v547 = vld [vmem:[#allocation5 + $0xc00] sm:$0xff]
    %v548 = vld [vmem:[#allocation5 + $0xc08] sm:$0xff]
    %v549 = vld [vmem:[#allocation5 + $0xc10] sm:$0xff]
    %v550 = vld [vmem:[#allocation5 + $0xc18] sm:$0xff]
    %v551 = vld [vmem:[#allocation5 + $0xc20] sm:$0xff]
    %v552 = vld [vmem:[#allocation5 + $0xc28] sm:$0xff]
    %v553 = vld [vmem:[#allocation5 + $0xc30] sm:$0xff]
    %v554 = vld [vmem:[#allocation5 + $0xc38] sm:$0xff]
    %v555 = vld [vmem:[#allocation5 + $0xc40] sm:$0xff]
    %v556 = vld [vmem:[#allocation5 + $0xc48] sm:$0xff]
    %v557 = vld [vmem:[#allocation5 + $0xc50] sm:$0xff]
    %v558 = vld [vmem:[#allocation5 + $0xc58] sm:$0xff]
    %v559 = vld [vmem:[#allocation5 + $0xc60] sm:$0xff]
    %v560 = vld [vmem:[#allocation5 + $0xc68] sm:$0xff]
    %v561 = vld [vmem:[#allocation5 + $0xc70] sm:$0xff]
    %v562 = vld [vmem:[#allocation5 + $0xc78] sm:$0xff]
    %v563 = vld [vmem:[#allocation5 + $0xc80] sm:$0xff]
    %v564 = vld [vmem:[#allocation5 + $0xc88] sm:$0xff]
    %v565 = vld [vmem:[#allocation5 + $0xc90] sm:$0xff]
    %v566 = vld [vmem:[#allocation5 + $0xc98] sm:$0xff]
    %v567 = vld [vmem:[#allocation5 + $0xca0] sm:$0xff]
    %v568 = vld [vmem:[#allocation5 + $0xca8] sm:$0xff]
    %v569 = vld [vmem:[#allocation5 + $0xcb0] sm:$0xff]
    %v570 = vld [vmem:[#allocation5 + $0xcb8] sm:$0xff]
    %v571 = vld [vmem:[#allocation5 + $0xcc0] sm:$0xff]
    %v572 = vld [vmem:[#allocation5 + $0xcc8] sm:$0xff]
    %v573 = vld [vmem:[#allocation5 + $0xcd0] sm:$0xff]
    %v574 = vld [vmem:[#allocation5 + $0xcd8] sm:$0xff]
    %v575 = vld [vmem:[#allocation5 + $0xce0] sm:$0xff]
    %v576 = vld [vmem:[#allocation5 + $0xce8] sm:$0xff]
    %v577 = vld [vmem:[#allocation5 + $0xcf0] sm:$0xff]
    %v578 = vld [vmem:[#allocation5 + $0xcf8] sm:$0xff]
    %v579 = vld [vmem:[#allocation5 + $0xd00] sm:$0xff]
    %v580 = vld [vmem:[#allocation5 + $0xd08] sm:$0xff]
    %v581 = vld [vmem:[#allocation5 + $0xd10] sm:$0xff]
    %v582 = vld [vmem:[#allocation5 + $0xd18] sm:$0xff]
    %v583 = vld [vmem:[#allocation5 + $0xd20] sm:$0xff]
    %v584 = vld [vmem:[#allocation5 + $0xd28] sm:$0xff]
    %v585 = vld [vmem:[#allocation5 + $0xd30] sm:$0xff]
    %v586 = vld [vmem:[#allocation5 + $0xd38] sm:$0xff]
    %v587 = vld [vmem:[#allocation5 + $0xd40] sm:$0xff]
    %v588 = vld [vmem:[#allocation5 + $0xd48] sm:$0xff]
    %v589 = vld [vmem:[#allocation5 + $0xd50] sm:$0xff]
    %v590 = vld [vmem:[#allocation5 + $0xd58] sm:$0xff]
    %v591 = vld [vmem:[#allocation5 + $0xd60] sm:$0xff]
    %v592 = vld [vmem:[#allocation5 + $0xd68] sm:$0xff]
    %v593 = vld [vmem:[#allocation5 + $0xd70] sm:$0xff]
    %v594 = vld [vmem:[#allocation5 + $0xd78] sm:$0xff]
    %v595 = vld [vmem:[#allocation5 + $0xd80] sm:$0xff]
    %v596 = vld [vmem:[#allocation5 + $0xd88] sm:$0xff]
    %v597 = vld [vmem:[#allocation5 + $0xd90] sm:$0xff]
    %v598 = vld [vmem:[#allocation5 + $0xd98] sm:$0xff]
    %v599 = vld [vmem:[#allocation5 + $0xda0] sm:$0xff]
    %v600 = vld [vmem:[#allocation5 + $0xda8] sm:$0xff]
    %v601 = vld [vmem:[#allocation5 + $0xdb0] sm:$0xff]
    %v602 = vld [vmem:[#allocation5 + $0xdb8] sm:$0xff]
    %v603 = vld [vmem:[#allocation5 + $0xdc0] sm:$0xff]
    %v604 = vld [vmem:[#allocation5 + $0xdc8] sm:$0xff]
    %v605 = vld [vmem:[#allocation5 + $0xdd0] sm:$0xff]
    %v606 = vld [vmem:[#allocation5 + $0xdd8] sm:$0xff]
    %v607 = vld [vmem:[#allocation5 + $0xde0] sm:$0xff]
    %v608 = vld [vmem:[#allocation5 + $0xde8] sm:$0xff]
    %v609 = vld [vmem:[#allocation5 + $0xdf0] sm:$0xff]
    %v610 = vld [vmem:[#allocation5 + $0xdf8] sm:$0xff]
    %v611 = vld [vmem:[#allocation5 + $0xe00] sm:$0xff]
    %v612 = vld [vmem:[#allocation5 + $0xe08] sm:$0xff]
    %v613 = vld [vmem:[#allocation5 + $0xe10] sm:$0xff]
    %v614 = vld [vmem:[#allocation5 + $0xe18] sm:$0xff]
    %v615 = vld [vmem:[#allocation5 + $0xe20] sm:$0xff]
    %v616 = vld [vmem:[#allocation5 + $0xe28] sm:$0xff]
    %v617 = vld [vmem:[#allocation5 + $0xe30] sm:$0xff]
    %v618 = vld [vmem:[#allocation5 + $0xe38] sm:$0xff]
    %v619 = vld [vmem:[#allocation5 + $0xe40] sm:$0xff]
    %v620 = vld [vmem:[#allocation5 + $0xe48] sm:$0xff]
    %v621 = vld [vmem:[#allocation5 + $0xe50] sm:$0xff]
    %v622 = vld [vmem:[#allocation5 + $0xe58] sm:$0xff]
    %v623 = vld [vmem:[#allocation5 + $0xe60] sm:$0xff]
    %v624 = vld [vmem:[#allocation5 + $0xe68] sm:$0xff]
    %v625 = vld [vmem:[#allocation5 + $0xe70] sm:$0xff]
    %v626 = vld [vmem:[#allocation5 + $0xe78] sm:$0xff]
    %v627 = vld [vmem:[#allocation5 + $0xe80] sm:$0xff]
    %v628 = vld [vmem:[#allocation5 + $0xe88] sm:$0xff]
    %v629 = vld [vmem:[#allocation5 + $0xe90] sm:$0xff]
    %v630 = vld [vmem:[#allocation5 + $0xe98] sm:$0xff]
    %v631 = vld [vmem:[#allocation5 + $0xea0] sm:$0xff]
    %v632 = vld [vmem:[#allocation5 + $0xea8] sm:$0xff]
    %v633 = vld [vmem:[#allocation5 + $0xeb0] sm:$0xff]
    %v634 = vld [vmem:[#allocation5 + $0xeb8] sm:$0xff]
    %v635 = vld [vmem:[#allocation5 + $0xec0] sm:$0xff]
    %v636 = vld [vmem:[#allocation5 + $0xec8] sm:$0xff]
    %v637 = vld [vmem:[#allocation5 + $0xed0] sm:$0xff]
    %v638 = vld [vmem:[#allocation5 + $0xed8] sm:$0xff]
    %v639 = vld [vmem:[#allocation5 + $0xee0] sm:$0xff]
    %v640 = vld [vmem:[#allocation5 + $0xee8] sm:$0xff]
    %v641 = vld [vmem:[#allocation5 + $0xef0] sm:$0xff]
    %v642 = vld [vmem:[#allocation5 + $0xef8] sm:$0xff]
    %v643 = vld [vmem:[#allocation5 + $0xf00] sm:$0xff]
    %v644 = vld [vmem:[#allocation5 + $0xf08] sm:$0xff]
    %v645 = vld [vmem:[#allocation5 + $0xf10] sm:$0xff]
    %v646 = vld [vmem:[#allocation5 + $0xf18] sm:$0xff]
    %v647 = vld [vmem:[#allocation5 + $0xf20] sm:$0xff]
    %v648 = vld [vmem:[#allocation5 + $0xf28] sm:$0xff]
    %v649 = vld [vmem:[#allocation5 + $0xf30] sm:$0xff]
    %v650 = vld [vmem:[#allocation5 + $0xf38] sm:$0xff]
    %v651 = vld [vmem:[#allocation5 + $0xf40] sm:$0xff]
    %v652 = vld [vmem:[#allocation5 + $0xf48] sm:$0xff]
    %v653 = vld [vmem:[#allocation5 + $0xf50] sm:$0xff]
    %v654 = vld [vmem:[#allocation5 + $0xf58] sm:$0xff]
    %v655 = vld [vmem:[#allocation5 + $0xf60] sm:$0xff]
    %v656 = vld [vmem:[#allocation5 + $0xf68] sm:$0xff]
    %v657 = vld [vmem:[#allocation5 + $0xf70] sm:$0xff]
    %v658 = vld [vmem:[#allocation5 + $0xf78] sm:$0xff]
    %v659 = vld [vmem:[#allocation5 + $0xf80] sm:$0xff]
    %v660 = vld [vmem:[#allocation5 + $0xf88] sm:$0xff]
    %v661 = vld [vmem:[#allocation5 + $0xf90] sm:$0xff]
    %v662 = vld [vmem:[#allocation5 + $0xf98] sm:$0xff]
    %v663 = vld [vmem:[#allocation5 + $0xfa0] sm:$0xff]
    %v664 = vld [vmem:[#allocation5 + $0xfa8] sm:$0xff]
    %v665 = vld [vmem:[#allocation5 + $0xfb0] sm:$0xff]
    %v666 = vld [vmem:[#allocation5 + $0xfb8] sm:$0xff]
    %v667 = vld [vmem:[#allocation5 + $0xfc0] sm:$0xff]
    %v668 = vld [vmem:[#allocation5 + $0xfc8] sm:$0xff]
    %v669 = vld [vmem:[#allocation5 + $0xfd0] sm:$0xff]
    %v670 = vld [vmem:[#allocation5 + $0xfd8] sm:$0xff]
    %v671 = vld [vmem:[#allocation5 + $0xfe0] sm:$0xff]
    %v672 = vld [vmem:[#allocation5 + $0xfe8] sm:$0xff]
    %v673 = vld [vmem:[#allocation5 + $0xff0] sm:$0xff]
    %v674 = vld [vmem:[#allocation5 + $0xff8] sm:$0xff]
    %v675 = vld [vmem:[#allocation5 + $0x1000] sm:$0xff]
    %v676 = vld [vmem:[#allocation5 + $0x1008] sm:$0xff]
    %v677 = vld [vmem:[#allocation5 + $0x1010] sm:$0xff]
    %v678 = vld [vmem:[#allocation5 + $0x1018] sm:$0xff]
    %v679 = vld [vmem:[#allocation5 + $0x1020] sm:$0xff]
    %v680 = vld [vmem:[#allocation5 + $0x1028] sm:$0xff]
    %v681 = vld [vmem:[#allocation5 + $0x1030] sm:$0xff]
    %v682 = vld [vmem:[#allocation5 + $0x1038] sm:$0xff]
    %v683 = vld [vmem:[#allocation5 + $0x1040] sm:$0xff]
    %v684 = vld [vmem:[#allocation5 + $0x1048] sm:$0xff]
    %v685 = vld [vmem:[#allocation5 + $0x1050] sm:$0xff]
    %v686 = vld [vmem:[#allocation5 + $0x1058] sm:$0xff]
    %v687 = vld [vmem:[#allocation5 + $0x1060] sm:$0xff]
    %v688 = vld [vmem:[#allocation5 + $0x1068] sm:$0xff]
    %v689 = vld [vmem:[#allocation5 + $0x1070] sm:$0xff]
    %v690 = vld [vmem:[#allocation5 + $0x1078] sm:$0xff]
    %v691 = vld [vmem:[#allocation5 + $0x1080] sm:$0xff]
    %v692 = vld [vmem:[#allocation5 + $0x1088] sm:$0xff]
    %v693 = vld [vmem:[#allocation5 + $0x1090] sm:$0xff]
    %v694 = vld [vmem:[#allocation5 + $0x1098] sm:$0xff]
    %v695 = vld [vmem:[#allocation5 + $0x10a0] sm:$0xff]
    %v696 = vld [vmem:[#allocation5 + $0x10a8] sm:$0xff]
    %v697 = vld [vmem:[#allocation5 + $0x10b0] sm:$0xff]
    %v698 = vld [vmem:[#allocation5 + $0x10b8] sm:$0xff]
    %v699 = vld [vmem:[#allocation5 + $0x10c0] sm:$0xff]
    %v700 = vld [vmem:[#allocation5 + $0x10c8] sm:$0xff]
    %v701 = vld [vmem:[#allocation5 + $0x10d0] sm:$0xff]
    %v702 = vld [vmem:[#allocation5 + $0x10d8] sm:$0xff]
    %v703 = vld [vmem:[#allocation5 + $0x10e0] sm:$0xff]
    %v704 = vld [vmem:[#allocation5 + $0x10e8] sm:$0xff]
    %v705 = vld [vmem:[#allocation5 + $0x10f0] sm:$0xff]
    %v706 = vld [vmem:[#allocation5 + $0x10f8] sm:$0xff]
    %v707 = vld [vmem:[#allocation5 + $0x1100] sm:$0xff]
    %v708 = vld [vmem:[#allocation5 + $0x1108] sm:$0xff]
    %v709 = vld [vmem:[#allocation5 + $0x1110] sm:$0xff]
    %v710 = vld [vmem:[#allocation5 + $0x1118] sm:$0xff]
    %v711 = vld [vmem:[#allocation5 + $0x1120] sm:$0xff]
    %v712 = vld [vmem:[#allocation5 + $0x1128] sm:$0xff]
    %v713 = vld [vmem:[#allocation5 + $0x1130] sm:$0xff]
    %v714 = vld [vmem:[#allocation5 + $0x1138] sm:$0xff]
    %v715 = vld [vmem:[#allocation5 + $0x1140] sm:$0xff]
    %v716 = vld [vmem:[#allocation5 + $0x1148] sm:$0xff]
    %v717 = vld [vmem:[#allocation5 + $0x1150] sm:$0xff]
    %v718 = vld [vmem:[#allocation5 + $0x1158] sm:$0xff]
    %v719 = vld [vmem:[#allocation5 + $0x1160] sm:$0xff]
    %v720 = vld [vmem:[#allocation5 + $0x1168] sm:$0xff]
    %v721 = vld [vmem:[#allocation5 + $0x1170] sm:$0xff]
    %v722 = vld [vmem:[#allocation5 + $0x1178] sm:$0xff]
    %v723 = vld [vmem:[#allocation5 + $0x1180] sm:$0xff]
    %v724 = vld [vmem:[#allocation5 + $0x1188] sm:$0xff]
    %v725 = vld [vmem:[#allocation5 + $0x1190] sm:$0xff]
    %v726 = vld [vmem:[#allocation5 + $0x1198] sm:$0xff]
    %v727 = vld [vmem:[#allocation5 + $0x11a0] sm:$0xff]
    %v728 = vld [vmem:[#allocation5 + $0x11a8] sm:$0xff]
    %v729 = vld [vmem:[#allocation5 + $0x11b0] sm:$0xff]
    %v730 = vld [vmem:[#allocation5 + $0x11b8] sm:$0xff]
    %v731 = vld [vmem:[#allocation5 + $0x11c0] sm:$0xff]
    %v732 = vld [vmem:[#allocation5 + $0x11c8] sm:$0xff]
    %v733 = vld [vmem:[#allocation5 + $0x11d0] sm:$0xff]
    %v734 = vld [vmem:[#allocation5 + $0x11d8] sm:$0xff]
    %v735 = vld [vmem:[#allocation5 + $0x11e0] sm:$0xff]
    %v736 = vld [vmem:[#allocation5 + $0x11e8] sm:$0xff]
    %v737 = vld [vmem:[#allocation5 + $0x11f0] sm:$0xff]
    %v738 = vld [vmem:[#allocation5 + $0x11f8] sm:$0xff]
    %v739 = vld [vmem:[#allocation5 + $0x1200] sm:$0xff]
    %v740 = vld [vmem:[#allocation5 + $0x1208] sm:$0xff]
    %v741 = vld [vmem:[#allocation5 + $0x1210] sm:$0xff]
    %v742 = vld [vmem:[#allocation5 + $0x1218] sm:$0xff]
    %v743 = vld [vmem:[#allocation5 + $0x1220] sm:$0xff]
    %v744 = vld [vmem:[#allocation5 + $0x1228] sm:$0xff]
    %v745 = vld [vmem:[#allocation5 + $0x1230] sm:$0xff]
    %v746 = vld [vmem:[#allocation5 + $0x1238] sm:$0xff]
    %v747 = vld [vmem:[#allocation5 + $0x1240] sm:$0xff]
    %v748 = vld [vmem:[#allocation5 + $0x1248] sm:$0xff]
    %v749 = vld [vmem:[#allocation5 + $0x1250] sm:$0xff]
    %v750 = vld [vmem:[#allocation5 + $0x1258] sm:$0xff]
    %v751 = vld [vmem:[#allocation5 + $0x1260] sm:$0xff]
    %v752 = vld [vmem:[#allocation5 + $0x1268] sm:$0xff]
    %v753 = vld [vmem:[#allocation5 + $0x1270] sm:$0xff]
    %v754 = vld [vmem:[#allocation5 + $0x1278] sm:$0xff]
    %v755 = vld [vmem:[#allocation5 + $0x1280] sm:$0xff]
    %v756 = vld [vmem:[#allocation5 + $0x1288] sm:$0xff]
    %v757 = vld [vmem:[#allocation5 + $0x1290] sm:$0xff]
    %v758 = vld [vmem:[#allocation5 + $0x1298] sm:$0xff]
    %v759 = vld [vmem:[#allocation5 + $0x12a0] sm:$0xff]
    %v760 = vld [vmem:[#allocation5 + $0x12a8] sm:$0xff]
    %v761 = vld [vmem:[#allocation5 + $0x12b0] sm:$0xff]
    %v762 = vld [vmem:[#allocation5 + $0x12b8] sm:$0xff]
    %v763 = vld [vmem:[#allocation5 + $0x12c0] sm:$0xff]
    %v764 = vld [vmem:[#allocation5 + $0x12c8] sm:$0xff]
    %v765 = vld [vmem:[#allocation5 + $0x12d0] sm:$0xff]
    %v766 = vld [vmem:[#allocation5 + $0x12d8] sm:$0xff]
    %v767 = vld [vmem:[#allocation5 + $0x12e0] sm:$0xff]
    %v768 = vld [vmem:[#allocation5 + $0x12e8] sm:$0xff]
    %v769 = vld [vmem:[#allocation5 + $0x12f0] sm:$0xff]
    %v770 = vld [vmem:[#allocation5 + $0x12f8] sm:$0xff]
    %v771 = vld [vmem:[#allocation5 + $0x1300] sm:$0xff]
    %v772 = vld [vmem:[#allocation5 + $0x1308] sm:$0xff]
    %v773 = vld [vmem:[#allocation5 + $0x1310] sm:$0xff]
    %v774 = vld [vmem:[#allocation5 + $0x1318] sm:$0xff]
    %v775 = vld [vmem:[#allocation5 + $0x1320] sm:$0xff]
    %v776 = vld [vmem:[#allocation5 + $0x1328] sm:$0xff]
    %v777 = vld [vmem:[#allocation5 + $0x1330] sm:$0xff]
    %v778 = vld [vmem:[#allocation5 + $0x1338] sm:$0xff]
    %v779 = vld [vmem:[#allocation5 + $0x1340] sm:$0xff]
    %v780 = vld [vmem:[#allocation5 + $0x1348] sm:$0xff]
    %v781 = vld [vmem:[#allocation5 + $0x1350] sm:$0xff]
    %v782 = vld [vmem:[#allocation5 + $0x1358] sm:$0xff]
    %v783 = vld [vmem:[#allocation5 + $0x1360] sm:$0xff]
    %v784 = vld [vmem:[#allocation5 + $0x1368] sm:$0xff]
    %v785 = vld [vmem:[#allocation5 + $0x1370] sm:$0xff]
    %v786 = vld [vmem:[#allocation5 + $0x1378] sm:$0xff]
    %v787 = vld [vmem:[#allocation5 + $0x1380] sm:$0xff]
    %v788 = vld [vmem:[#allocation5 + $0x1388] sm:$0xff]
    %v789 = vld [vmem:[#allocation5 + $0x1390] sm:$0xff]
    %v790 = vld [vmem:[#allocation5 + $0x1398] sm:$0xff]
    %v791 = vld [vmem:[#allocation5 + $0x13a0] sm:$0xff]
    %v792 = vld [vmem:[#allocation5 + $0x13a8] sm:$0xff]
    %v793 = vld [vmem:[#allocation5 + $0x13b0] sm:$0xff]
    %v794 = vld [vmem:[#allocation5 + $0x13b8] sm:$0xff]
    %v795 = vld [vmem:[#allocation5 + $0x13c0] sm:$0xff]
    %v796 = vld [vmem:[#allocation5 + $0x13c8] sm:$0xff]
    %v797 = vld [vmem:[#allocation5 + $0x13d0] sm:$0xff]
    %v798 = vld [vmem:[#allocation5 + $0x13d8] sm:$0xff]
    %v799 = vld [vmem:[#allocation5 + $0x13e0] sm:$0xff]
    %v800 = vld [vmem:[#allocation5 + $0x13e8] sm:$0xff]
    %v801 = vld [vmem:[#allocation5 + $0x13f0] sm:$0xff]
    %v802 = vld [vmem:[#allocation5 + $0x13f8] sm:$0xff]
    %v803 = vld [vmem:[#allocation5 + $0x1400] sm:$0xff]
    %v804 = vld [vmem:[#allocation5 + $0x1408] sm:$0xff]
    %v805 = vld [vmem:[#allocation5 + $0x1410] sm:$0xff]
    %v806 = vld [vmem:[#allocation5 + $0x1418] sm:$0xff]
    %v807 = vld [vmem:[#allocation5 + $0x1420] sm:$0xff]
    %v808 = vld [vmem:[#allocation5 + $0x1428] sm:$0xff]
    %v809 = vld [vmem:[#allocation5 + $0x1430] sm:$0xff]
    %v810 = vld [vmem:[#allocation5 + $0x1438] sm:$0xff]
    %v811 = vld [vmem:[#allocation5 + $0x1440] sm:$0xff]
    %v812 = vld [vmem:[#allocation5 + $0x1448] sm:$0xff]
    %v813 = vld [vmem:[#allocation5 + $0x1450] sm:$0xff]
    %v814 = vld [vmem:[#allocation5 + $0x1458] sm:$0xff]
    %v815 = vld [vmem:[#allocation5 + $0x1460] sm:$0xff]
    %v816 = vld [vmem:[#allocation5 + $0x1468] sm:$0xff]
    %v817 = vld [vmem:[#allocation5 + $0x1470] sm:$0xff]
    %v818 = vld [vmem:[#allocation5 + $0x1478] sm:$0xff]
    %v819 = vld [vmem:[#allocation5 + $0x1480] sm:$0xff]
    %v820 = vld [vmem:[#allocation5 + $0x1488] sm:$0xff]
    %v821 = vld [vmem:[#allocation5 + $0x1490] sm:$0xff]
    %v822 = vld [vmem:[#allocation5 + $0x1498] sm:$0xff]
    %v823 = vld [vmem:[#allocation5 + $0x14a0] sm:$0xff]
    %v824 = vld [vmem:[#allocation5 + $0x14a8] sm:$0xff]
    %v825 = vld [vmem:[#allocation5 + $0x14b0] sm:$0xff]
    %v826 = vld [vmem:[#allocation5 + $0x14b8] sm:$0xff]
    %v827 = vld [vmem:[#allocation5 + $0x14c0] sm:$0xff]
    %v828 = vld [vmem:[#allocation5 + $0x14c8] sm:$0xff]
    %v829 = vld [vmem:[#allocation5 + $0x14d0] sm:$0xff]
    %v830 = vld [vmem:[#allocation5 + $0x14d8] sm:$0xff]
    %v831 = vld [vmem:[#allocation5 + $0x14e0] sm:$0xff]
    %v832 = vld [vmem:[#allocation5 + $0x14e8] sm:$0xff]
    %v833 = vld [vmem:[#allocation5 + $0x14f0] sm:$0xff]
    %v834 = vld [vmem:[#allocation5 + $0x14f8] sm:$0xff]
    %v835 = vld [vmem:[#allocation5 + $0x1500] sm:$0xff]
    %v836 = vld [vmem:[#allocation5 + $0x1508] sm:$0xff]
    %v837 = vld [vmem:[#allocation5 + $0x1510] sm:$0xff]
    %v838 = vld [vmem:[#allocation5 + $0x1518] sm:$0xff]
    %v839 = vld [vmem:[#allocation5 + $0x1520] sm:$0xff]
    %v840 = vld [vmem:[#allocation5 + $0x1528] sm:$0xff]
    %v841 = vld [vmem:[#allocation5 + $0x1530] sm:$0xff]
    %v842 = vld [vmem:[#allocation5 + $0x1538] sm:$0xff]
    %v843 = vld [vmem:[#allocation5 + $0x1540] sm:$0xff]
    %v844 = vld [vmem:[#allocation5 + $0x1548] sm:$0xff]
    %v845 = vld [vmem:[#allocation5 + $0x1550] sm:$0xff]
    %v846 = vld [vmem:[#allocation5 + $0x1558] sm:$0xff]
    %v847 = vld [vmem:[#allocation5 + $0x1560] sm:$0xff]
    %v848 = vld [vmem:[#allocation5 + $0x1568] sm:$0xff]
    %v849 = vld [vmem:[#allocation5 + $0x1570] sm:$0xff]
    %v850 = vld [vmem:[#allocation5 + $0x1578] sm:$0xff]
    %v851 = vld [vmem:[#allocation5 + $0x1580] sm:$0xff]
    %v852 = vld [vmem:[#allocation5 + $0x1588] sm:$0xff]
    %v853 = vld [vmem:[#allocation5 + $0x1590] sm:$0xff]
    %v854 = vld [vmem:[#allocation5 + $0x1598] sm:$0xff]
    %v855 = vld [vmem:[#allocation5 + $0x15a0] sm:$0xff]
    %v856 = vld [vmem:[#allocation5 + $0x15a8] sm:$0xff]
    %v857 = vld [vmem:[#allocation5 + $0x15b0] sm:$0xff]
    %v858 = vld [vmem:[#allocation5 + $0x15b8] sm:$0xff]
    %v859 = vld [vmem:[#allocation5 + $0x15c0] sm:$0xff]
    %v860 = vld [vmem:[#allocation5 + $0x15c8] sm:$0xff]
    %v861 = vld [vmem:[#allocation5 + $0x15d0] sm:$0xff]
    %v862 = vld [vmem:[#allocation5 + $0x15d8] sm:$0xff]
    %v863 = vld [vmem:[#allocation5 + $0x15e0] sm:$0xff]
    %v864 = vld [vmem:[#allocation5 + $0x15e8] sm:$0xff]
    %v865 = vld [vmem:[#allocation5 + $0x15f0] sm:$0xff]
    %v866 = vld [vmem:[#allocation5 + $0x15f8] sm:$0xff]
    %v867 = vld [vmem:[#allocation5 + $0x1600] sm:$0xff]
    %v868 = vld [vmem:[#allocation5 + $0x1608] sm:$0xff]
    %v869 = vld [vmem:[#allocation5 + $0x1610] sm:$0xff]
    %v870 = vld [vmem:[#allocation5 + $0x1618] sm:$0xff]
    %v871 = vld [vmem:[#allocation5 + $0x1620] sm:$0xff]
    %v872 = vld [vmem:[#allocation5 + $0x1628] sm:$0xff]
    %v873 = vld [vmem:[#allocation5 + $0x1630] sm:$0xff]
    %v874 = vld [vmem:[#allocation5 + $0x1638] sm:$0xff]
    %v875 = vld [vmem:[#allocation5 + $0x1640] sm:$0xff]
    %v876 = vld [vmem:[#allocation5 + $0x1648] sm:$0xff]
    %v877 = vld [vmem:[#allocation5 + $0x1650] sm:$0xff]
    %v878 = vld [vmem:[#allocation5 + $0x1658] sm:$0xff]
    %v879 = vld [vmem:[#allocation5 + $0x1660] sm:$0xff]
    %v880 = vld [vmem:[#allocation5 + $0x1668] sm:$0xff]
    %v881 = vld [vmem:[#allocation5 + $0x1670] sm:$0xff]
    %v882 = vld [vmem:[#allocation5 + $0x1678] sm:$0xff]
    %v883 = vld [vmem:[#allocation5 + $0x1680] sm:$0xff]
    %v884 = vld [vmem:[#allocation5 + $0x1688] sm:$0xff]
    %v885 = vld [vmem:[#allocation5 + $0x1690] sm:$0xff]
    %v886 = vld [vmem:[#allocation5 + $0x1698] sm:$0xff]
    %v887 = vld [vmem:[#allocation5 + $0x16a0] sm:$0xff]
    %v888 = vld [vmem:[#allocation5 + $0x16a8] sm:$0xff]
    %v889 = vld [vmem:[#allocation5 + $0x16b0] sm:$0xff]
    %v890 = vld [vmem:[#allocation5 + $0x16b8] sm:$0xff]
    %v891 = vld [vmem:[#allocation5 + $0x16c0] sm:$0xff]
    %v892 = vld [vmem:[#allocation5 + $0x16c8] sm:$0xff]
    %v893 = vld [vmem:[#allocation5 + $0x16d0] sm:$0xff]
    %v894 = vld [vmem:[#allocation5 + $0x16d8] sm:$0xff]
    %v895 = vld [vmem:[#allocation5 + $0x16e0] sm:$0xff]
    %v896 = vld [vmem:[#allocation5 + $0x16e8] sm:$0xff]
    %v897 = vld [vmem:[#allocation5 + $0x16f0] sm:$0xff]
    %v898 = vld [vmem:[#allocation5 + $0x16f8] sm:$0xff]
    %v899 = vld [vmem:[#allocation5 + $0x1700] sm:$0xff]
    %v900 = vld [vmem:[#allocation5 + $0x1708] sm:$0xff]
    %v901 = vld [vmem:[#allocation5 + $0x1710] sm:$0xff]
    %v902 = vld [vmem:[#allocation5 + $0x1718] sm:$0xff]
    %v903 = vld [vmem:[#allocation5 + $0x1720] sm:$0xff]
    %v904 = vld [vmem:[#allocation5 + $0x1728] sm:$0xff]
    %v905 = vld [vmem:[#allocation5 + $0x1730] sm:$0xff]
    %v906 = vld [vmem:[#allocation5 + $0x1738] sm:$0xff]
    %v907 = vld [vmem:[#allocation5 + $0x1740] sm:$0xff]
    %v908 = vld [vmem:[#allocation5 + $0x1748] sm:$0xff]
    %v909 = vld [vmem:[#allocation5 + $0x1750] sm:$0xff]
    %v910 = vld [vmem:[#allocation5 + $0x1758] sm:$0xff]
    %v911 = vld [vmem:[#allocation5 + $0x1760] sm:$0xff]
    %v912 = vld [vmem:[#allocation5 + $0x1768] sm:$0xff]
    %v913 = vld [vmem:[#allocation5 + $0x1770] sm:$0xff]
    %v914 = vld [vmem:[#allocation5 + $0x1778] sm:$0xff]
    %v915 = vld [vmem:[#allocation5 + $0x1780] sm:$0xff]
    %v916 = vld [vmem:[#allocation5 + $0x1788] sm:$0xff]
    %v917 = vld [vmem:[#allocation5 + $0x1790] sm:$0xff]
    %v918 = vld [vmem:[#allocation5 + $0x1798] sm:$0xff]
    %v919 = vld [vmem:[#allocation5 + $0x17a0] sm:$0xff]
    %v920 = vld [vmem:[#allocation5 + $0x17a8] sm:$0xff]
    %v921 = vld [vmem:[#allocation5 + $0x17b0] sm:$0xff]
    %v922 = vld [vmem:[#allocation5 + $0x17b8] sm:$0xff]
    %v923 = vld [vmem:[#allocation5 + $0x17c0] sm:$0xff]
    %v924 = vld [vmem:[#allocation5 + $0x17c8] sm:$0xff]
    %v925 = vld [vmem:[#allocation5 + $0x17d0] sm:$0xff]
    %v926 = vld [vmem:[#allocation5 + $0x17d8] sm:$0xff]
    %v927 = vld [vmem:[#allocation5 + $0x17e0] sm:$0xff]
    %v928 = vld [vmem:[#allocation5 + $0x17e8] sm:$0xff]
    %v929 = vld [vmem:[#allocation5 + $0x17f0] sm:$0xff]
    %v930 = vld [vmem:[#allocation5 + $0x17f8] sm:$0xff]
    %v931 = vld [vmem:[#allocation7] sm:$0xf]
    %v933 = vlaneseq
    %v934 = vshrl.u32 %v933, 7
    %v935 = vsub.s32 0, %v934
    %v936 = vrot.slane %v931, %v935
    %v937 = vlaneseq
    %v938 = vshrl.u32 %v937, 7
    %v939 = vsub.s32 1, %v938
    %v940 = vrot.slane %v931, %v939
    %v941 = vlaneseq
    %v942 = vshrl.u32 %v941, 7
    %v943 = vsub.s32 2, %v942
    %v944 = vrot.slane %v931, %v943
    %v945 = vlaneseq
    %v946 = vshrl.u32 %v945, 7
    %v947 = vsub.s32 3, %v946
    %v948 = vrot.slane %v931, %v947
    %v1721 = vunpack.c.l.b16 %v163
    %v1722 = vunpack.c.h.b16 %v163
    %v1723 = vunpack.c.l.b16 %v164
    %v1724 = vunpack.c.h.b16 %v164
    %v1725 = vunpack.c.l.b16 %v165
    %v1726 = vunpack.c.h.b16 %v165
    %v1727 = vunpack.c.l.b16 %v166
    %v1728 = vunpack.c.h.b16 %v166
    %v1729 = vunpack.c.l.b16 %v167
    %v1730 = vunpack.c.h.b16 %v167
    %v1731 = vunpack.c.l.b16 %v168
    %v1732 = vunpack.c.h.b16 %v168
    %v1733 = vunpack.c.l.b16 %v169
    %v1734 = vunpack.c.h.b16 %v169
    %v1735 = vunpack.c.l.b16 %v170
    %v1736 = vunpack.c.h.b16 %v170
    %v1737 = vunpack.c.l.b16 %v171
    %v1738 = vunpack.c.h.b16 %v171
    %v1739 = vunpack.c.l.b16 %v172
    %v1740 = vunpack.c.h.b16 %v172
    %v1741 = vunpack.c.l.b16 %v173
    %v1742 = vunpack.c.h.b16 %v173
    %v1743 = vunpack.c.l.b16 %v174
    %v1744 = vunpack.c.h.b16 %v174
    %v1745 = vunpack.c.l.b16 %v175
    %v1746 = vunpack.c.h.b16 %v175
    %v1747 = vunpack.c.l.b16 %v176
    %v1748 = vunpack.c.h.b16 %v176
    %v1749 = vunpack.c.l.b16 %v177
    %v1750 = vunpack.c.h.b16 %v177
    %v1751 = vunpack.c.l.b16 %v178
    %v1752 = vunpack.c.h.b16 %v178
    %v1753 = vunpack.c.l.b16 %v179
    %v1754 = vunpack.c.h.b16 %v179
    %v1755 = vunpack.c.l.b16 %v180
    %v1756 = vunpack.c.h.b16 %v180
    %v1757 = vunpack.c.l.b16 %v181
    %v1758 = vunpack.c.h.b16 %v181
    %v1759 = vunpack.c.l.b16 %v182
    %v1760 = vunpack.c.h.b16 %v182
    %v1761 = vunpack.c.l.b16 %v183
    %v1762 = vunpack.c.h.b16 %v183
    %v1763 = vunpack.c.l.b16 %v184
    %v1764 = vunpack.c.h.b16 %v184
    %v1765 = vunpack.c.l.b16 %v185
    %v1766 = vunpack.c.h.b16 %v185
    %v1767 = vunpack.c.l.b16 %v186
    %v1768 = vunpack.c.h.b16 %v186
    %v1769 = vunpack.c.l.b16 %v187
    %v1770 = vunpack.c.h.b16 %v187
    %v1771 = vunpack.c.l.b16 %v188
    %v1772 = vunpack.c.h.b16 %v188
    %v1773 = vunpack.c.l.b16 %v189
    %v1774 = vunpack.c.h.b16 %v189
    %v1775 = vunpack.c.l.b16 %v190
    %v1776 = vunpack.c.h.b16 %v190
    %v1777 = vunpack.c.l.b16 %v191
    %v1778 = vunpack.c.h.b16 %v191
    %v1779 = vunpack.c.l.b16 %v192
    %v1780 = vunpack.c.h.b16 %v192
    %v1781 = vunpack.c.l.b16 %v193
    %v1782 = vunpack.c.h.b16 %v193
    %v1783 = vunpack.c.l.b16 %v194
    %v1784 = vunpack.c.h.b16 %v194
    %v1785 = vunpack.c.l.b16 %v195
    %v1786 = vunpack.c.h.b16 %v195
    %v1787 = vunpack.c.l.b16 %v196
    %v1788 = vunpack.c.h.b16 %v196
    %v1789 = vunpack.c.l.b16 %v197
    %v1790 = vunpack.c.h.b16 %v197
    %v1791 = vunpack.c.l.b16 %v198
    %v1792 = vunpack.c.h.b16 %v198
    %v1793 = vunpack.c.l.b16 %v199
    %v1794 = vunpack.c.h.b16 %v199
    %v1795 = vunpack.c.l.b16 %v200
    %v1796 = vunpack.c.h.b16 %v200
    %v1797 = vunpack.c.l.b16 %v201
    %v1798 = vunpack.c.h.b16 %v201
    %v1799 = vunpack.c.l.b16 %v202
    %v1800 = vunpack.c.h.b16 %v202
    %v1801 = vunpack.c.l.b16 %v203
    %v1802 = vunpack.c.h.b16 %v203
    %v1803 = vunpack.c.l.b16 %v204
    %v1804 = vunpack.c.h.b16 %v204
    %v1805 = vunpack.c.l.b16 %v205
    %v1806 = vunpack.c.h.b16 %v205
    %v1807 = vunpack.c.l.b16 %v206
    %v1808 = vunpack.c.h.b16 %v206
    %v1809 = vunpack.c.l.b16 %v207
    %v1810 = vunpack.c.h.b16 %v207
    %v1811 = vunpack.c.l.b16 %v208
    %v1812 = vunpack.c.h.b16 %v208
    %v1813 = vunpack.c.l.b16 %v209
    %v1814 = vunpack.c.h.b16 %v209
    %v1815 = vunpack.c.l.b16 %v210
    %v1816 = vunpack.c.h.b16 %v210
    %v1817 = vunpack.c.l.b16 %v211
    %v1818 = vunpack.c.h.b16 %v211
    %v1819 = vunpack.c.l.b16 %v212
    %v1820 = vunpack.c.h.b16 %v212
    %v1821 = vunpack.c.l.b16 %v213
    %v1822 = vunpack.c.h.b16 %v213
    %v1823 = vunpack.c.l.b16 %v214
    %v1824 = vunpack.c.h.b16 %v214
    %v1825 = vunpack.c.l.b16 %v215
    %v1826 = vunpack.c.h.b16 %v215
    %v1827 = vunpack.c.l.b16 %v216
    %v1828 = vunpack.c.h.b16 %v216
    %v1829 = vunpack.c.l.b16 %v217
    %v1830 = vunpack.c.h.b16 %v217
    %v1831 = vunpack.c.l.b16 %v218
    %v1832 = vunpack.c.h.b16 %v218
    %v1833 = vunpack.c.l.b16 %v219
    %v1834 = vunpack.c.h.b16 %v219
    %v1835 = vunpack.c.l.b16 %v220
    %v1836 = vunpack.c.h.b16 %v220
    %v1837 = vunpack.c.l.b16 %v221
    %v1838 = vunpack.c.h.b16 %v221
    %v1839 = vunpack.c.l.b16 %v222
    %v1840 = vunpack.c.h.b16 %v222
    %v1841 = vunpack.c.l.b16 %v223
    %v1842 = vunpack.c.h.b16 %v223
    %v1843 = vunpack.c.l.b16 %v224
    %v1844 = vunpack.c.h.b16 %v224
    %v1845 = vunpack.c.l.b16 %v225
    %v1846 = vunpack.c.h.b16 %v225
    %v1847 = vunpack.c.l.b16 %v226
    %v1848 = vunpack.c.h.b16 %v226
    %v1849 = vunpack.c.l.b16 %v227
    %v1850 = vunpack.c.h.b16 %v227
    %v1851 = vunpack.c.l.b16 %v228
    %v1852 = vunpack.c.h.b16 %v228
    %v1853 = vunpack.c.l.b16 %v229
    %v1854 = vunpack.c.h.b16 %v229
    %v1855 = vunpack.c.l.b16 %v230
    %v1856 = vunpack.c.h.b16 %v230
    %v1857 = vunpack.c.l.b16 %v231
    %v1858 = vunpack.c.h.b16 %v231
    %v1859 = vunpack.c.l.b16 %v232
    %v1860 = vunpack.c.h.b16 %v232
    %v1861 = vunpack.c.l.b16 %v233
    %v1862 = vunpack.c.h.b16 %v233
    %v1863 = vunpack.c.l.b16 %v234
    %v1864 = vunpack.c.h.b16 %v234
    %v1865 = vunpack.c.l.b16 %v235
    %v1866 = vunpack.c.h.b16 %v235
    %v1867 = vunpack.c.l.b16 %v236
    %v1868 = vunpack.c.h.b16 %v236
    %v1869 = vunpack.c.l.b16 %v237
    %v1870 = vunpack.c.h.b16 %v237
    %v1871 = vunpack.c.l.b16 %v238
    %v1872 = vunpack.c.h.b16 %v238
    %v1873 = vunpack.c.l.b16 %v239
    %v1874 = vunpack.c.h.b16 %v239
    %v1875 = vunpack.c.l.b16 %v240
    %v1876 = vunpack.c.h.b16 %v240
    %v1877 = vunpack.c.l.b16 %v241
    %v1878 = vunpack.c.h.b16 %v241
    %v1879 = vunpack.c.l.b16 %v242
    %v1880 = vunpack.c.h.b16 %v242
    %v1881 = vunpack.c.l.b16 %v243
    %v1882 = vunpack.c.h.b16 %v243
    %v1883 = vunpack.c.l.b16 %v244
    %v1884 = vunpack.c.h.b16 %v244
    %v1885 = vunpack.c.l.b16 %v245
    %v1886 = vunpack.c.h.b16 %v245
    %v1887 = vunpack.c.l.b16 %v246
    %v1888 = vunpack.c.h.b16 %v246
    %v1889 = vunpack.c.l.b16 %v247
    %v1890 = vunpack.c.h.b16 %v247
    %v1891 = vunpack.c.l.b16 %v248
    %v1892 = vunpack.c.h.b16 %v248
    %v1893 = vunpack.c.l.b16 %v249
    %v1894 = vunpack.c.h.b16 %v249
    %v1895 = vunpack.c.l.b16 %v250
    %v1896 = vunpack.c.h.b16 %v250
    %v1897 = vunpack.c.l.b16 %v251
    %v1898 = vunpack.c.h.b16 %v251
    %v1899 = vunpack.c.l.b16 %v252
    %v1900 = vunpack.c.h.b16 %v252
    %v1901 = vunpack.c.l.b16 %v253
    %v1902 = vunpack.c.h.b16 %v253
    %v1903 = vunpack.c.l.b16 %v254
    %v1904 = vunpack.c.h.b16 %v254
    %v1905 = vunpack.c.l.b16 %v255
    %v1906 = vunpack.c.h.b16 %v255
    %v1907 = vunpack.c.l.b16 %v256
    %v1908 = vunpack.c.h.b16 %v256
    %v1909 = vunpack.c.l.b16 %v257
    %v1910 = vunpack.c.h.b16 %v257
    %v1911 = vunpack.c.l.b16 %v258
    %v1912 = vunpack.c.h.b16 %v258
    %v1913 = vunpack.c.l.b16 %v259
    %v1914 = vunpack.c.h.b16 %v259
    %v1915 = vunpack.c.l.b16 %v260
    %v1916 = vunpack.c.h.b16 %v260
    %v1917 = vunpack.c.l.b16 %v261
    %v1918 = vunpack.c.h.b16 %v261
    %v1919 = vunpack.c.l.b16 %v262
    %v1920 = vunpack.c.h.b16 %v262
    %v1921 = vunpack.c.l.b16 %v263
    %v1922 = vunpack.c.h.b16 %v263
    %v1923 = vunpack.c.l.b16 %v264
    %v1924 = vunpack.c.h.b16 %v264
    %v1925 = vunpack.c.l.b16 %v265
    %v1926 = vunpack.c.h.b16 %v265
    %v1927 = vunpack.c.l.b16 %v266
    %v1928 = vunpack.c.h.b16 %v266
    %v1929 = vunpack.c.l.b16 %v267
    %v1930 = vunpack.c.h.b16 %v267
    %v1931 = vunpack.c.l.b16 %v268
    %v1932 = vunpack.c.h.b16 %v268
    %v1933 = vunpack.c.l.b16 %v269
    %v1934 = vunpack.c.h.b16 %v269
    %v1935 = vunpack.c.l.b16 %v270
    %v1936 = vunpack.c.h.b16 %v270
    %v1937 = vunpack.c.l.b16 %v271
    %v1938 = vunpack.c.h.b16 %v271
    %v1939 = vunpack.c.l.b16 %v272
    %v1940 = vunpack.c.h.b16 %v272
    %v1941 = vunpack.c.l.b16 %v273
    %v1942 = vunpack.c.h.b16 %v273
    %v1943 = vunpack.c.l.b16 %v274
    %v1944 = vunpack.c.h.b16 %v274
    %v1945 = vunpack.c.l.b16 %v275
    %v1946 = vunpack.c.h.b16 %v275
    %v1947 = vunpack.c.l.b16 %v276
    %v1948 = vunpack.c.h.b16 %v276
    %v1949 = vunpack.c.l.b16 %v277
    %v1950 = vunpack.c.h.b16 %v277
    %v1951 = vunpack.c.l.b16 %v278
    %v1952 = vunpack.c.h.b16 %v278
    %v1953 = vunpack.c.l.b16 %v279
    %v1954 = vunpack.c.h.b16 %v279
    %v1955 = vunpack.c.l.b16 %v280
    %v1956 = vunpack.c.h.b16 %v280
    %v1957 = vunpack.c.l.b16 %v281
    %v1958 = vunpack.c.h.b16 %v281
    %v1959 = vunpack.c.l.b16 %v282
    %v1960 = vunpack.c.h.b16 %v282
    %v1961 = vunpack.c.l.b16 %v283
    %v1962 = vunpack.c.h.b16 %v283
    %v1963 = vunpack.c.l.b16 %v284
    %v1964 = vunpack.c.h.b16 %v284
    %v1965 = vunpack.c.l.b16 %v285
    %v1966 = vunpack.c.h.b16 %v285
    %v1967 = vunpack.c.l.b16 %v286
    %v1968 = vunpack.c.h.b16 %v286
    %v1969 = vunpack.c.l.b16 %v287
    %v1970 = vunpack.c.h.b16 %v287
    %v1971 = vunpack.c.l.b16 %v288
    %v1972 = vunpack.c.h.b16 %v288
    %v1973 = vunpack.c.l.b16 %v289
    %v1974 = vunpack.c.h.b16 %v289
    %v1975 = vunpack.c.l.b16 %v290
    %v1976 = vunpack.c.h.b16 %v290
    %v1977 = vunpack.c.l.b16 %v291
    %v1978 = vunpack.c.h.b16 %v291
    %v1979 = vunpack.c.l.b16 %v292
    %v1980 = vunpack.c.h.b16 %v292
    %v1981 = vunpack.c.l.b16 %v293
    %v1982 = vunpack.c.h.b16 %v293
    %v1983 = vunpack.c.l.b16 %v294
    %v1984 = vunpack.c.h.b16 %v294
    %v1985 = vunpack.c.l.b16 %v295
    %v1986 = vunpack.c.h.b16 %v295
    %v1987 = vunpack.c.l.b16 %v296
    %v1988 = vunpack.c.h.b16 %v296
    %v1989 = vunpack.c.l.b16 %v297
    %v1990 = vunpack.c.h.b16 %v297
    %v1991 = vunpack.c.l.b16 %v298
    %v1992 = vunpack.c.h.b16 %v298
    %v1993 = vunpack.c.l.b16 %v299
    %v1994 = vunpack.c.h.b16 %v299
    %v1995 = vunpack.c.l.b16 %v300
    %v1996 = vunpack.c.h.b16 %v300
    %v1997 = vunpack.c.l.b16 %v301
    %v1998 = vunpack.c.h.b16 %v301
    %v1999 = vunpack.c.l.b16 %v302
    %v2000 = vunpack.c.h.b16 %v302
    %v2001 = vunpack.c.l.b16 %v303
    %v2002 = vunpack.c.h.b16 %v303
    %v2003 = vunpack.c.l.b16 %v304
    %v2004 = vunpack.c.h.b16 %v304
    %v2005 = vunpack.c.l.b16 %v305
    %v2006 = vunpack.c.h.b16 %v305
    %v2007 = vunpack.c.l.b16 %v306
    %v2008 = vunpack.c.h.b16 %v306
    %v2009 = vunpack.c.l.b16 %v307
    %v2010 = vunpack.c.h.b16 %v307
    %v2011 = vunpack.c.l.b16 %v308
    %v2012 = vunpack.c.h.b16 %v308
    %v2013 = vunpack.c.l.b16 %v309
    %v2014 = vunpack.c.h.b16 %v309
    %v2015 = vunpack.c.l.b16 %v310
    %v2016 = vunpack.c.h.b16 %v310
    %v2017 = vunpack.c.l.b16 %v311
    %v2018 = vunpack.c.h.b16 %v311
    %v2019 = vunpack.c.l.b16 %v312
    %v2020 = vunpack.c.h.b16 %v312
    %v2021 = vunpack.c.l.b16 %v313
    %v2022 = vunpack.c.h.b16 %v313
    %v2023 = vunpack.c.l.b16 %v314
    %v2024 = vunpack.c.h.b16 %v314
    %v2025 = vunpack.c.l.b16 %v315
    %v2026 = vunpack.c.h.b16 %v315
    %v2027 = vunpack.c.l.b16 %v316
    %v2028 = vunpack.c.h.b16 %v316
    %v2029 = vunpack.c.l.b16 %v317
    %v2030 = vunpack.c.h.b16 %v317
    %v2031 = vunpack.c.l.b16 %v318
    %v2032 = vunpack.c.h.b16 %v318
    %v2033 = vunpack.c.l.b16 %v319
    %v2034 = vunpack.c.h.b16 %v319
    %v2035 = vunpack.c.l.b16 %v320
    %v2036 = vunpack.c.h.b16 %v320
    %v2037 = vunpack.c.l.b16 %v321
    %v2038 = vunpack.c.h.b16 %v321
    %v2039 = vunpack.c.l.b16 %v322
    %v2040 = vunpack.c.h.b16 %v322
    %v2041 = vunpack.c.l.b16 %v323
    %v2042 = vunpack.c.h.b16 %v323
    %v2043 = vunpack.c.l.b16 %v324
    %v2044 = vunpack.c.h.b16 %v324
    %v2045 = vunpack.c.l.b16 %v325
    %v2046 = vunpack.c.h.b16 %v325
    %v2047 = vunpack.c.l.b16 %v326
    %v2048 = vunpack.c.h.b16 %v326
    %v2049 = vunpack.c.l.b16 %v327
    %v2050 = vunpack.c.h.b16 %v327
    %v2051 = vunpack.c.l.b16 %v328
    %v2052 = vunpack.c.h.b16 %v328
    %v2053 = vunpack.c.l.b16 %v329
    %v2054 = vunpack.c.h.b16 %v329
    %v2055 = vunpack.c.l.b16 %v330
    %v2056 = vunpack.c.h.b16 %v330
    %v2057 = vunpack.c.l.b16 %v331
    %v2058 = vunpack.c.h.b16 %v331
    %v2059 = vunpack.c.l.b16 %v332
    %v2060 = vunpack.c.h.b16 %v332
    %v2061 = vunpack.c.l.b16 %v333
    %v2062 = vunpack.c.h.b16 %v333
    %v2063 = vunpack.c.l.b16 %v334
    %v2064 = vunpack.c.h.b16 %v334
    %v2065 = vunpack.c.l.b16 %v335
    %v2066 = vunpack.c.h.b16 %v335
    %v2067 = vunpack.c.l.b16 %v336
    %v2068 = vunpack.c.h.b16 %v336
    %v2069 = vunpack.c.l.b16 %v337
    %v2070 = vunpack.c.h.b16 %v337
    %v2071 = vunpack.c.l.b16 %v338
    %v2072 = vunpack.c.h.b16 %v338
    %v2073 = vunpack.c.l.b16 %v339
    %v2074 = vunpack.c.h.b16 %v339
    %v2075 = vunpack.c.l.b16 %v340
    %v2076 = vunpack.c.h.b16 %v340
    %v2077 = vunpack.c.l.b16 %v341
    %v2078 = vunpack.c.h.b16 %v341
    %v2079 = vunpack.c.l.b16 %v342
    %v2080 = vunpack.c.h.b16 %v342
    %v2081 = vunpack.c.l.b16 %v343
    %v2082 = vunpack.c.h.b16 %v343
    %v2083 = vunpack.c.l.b16 %v344
    %v2084 = vunpack.c.h.b16 %v344
    %v2085 = vunpack.c.l.b16 %v345
    %v2086 = vunpack.c.h.b16 %v345
    %v2087 = vunpack.c.l.b16 %v346
    %v2088 = vunpack.c.h.b16 %v346
    %v2089 = vunpack.c.l.b16 %v347
    %v2090 = vunpack.c.h.b16 %v347
    %v2091 = vunpack.c.l.b16 %v348
    %v2092 = vunpack.c.h.b16 %v348
    %v2093 = vunpack.c.l.b16 %v349
    %v2094 = vunpack.c.h.b16 %v349
    %v2095 = vunpack.c.l.b16 %v350
    %v2096 = vunpack.c.h.b16 %v350
    %v2097 = vunpack.c.l.b16 %v351
    %v2098 = vunpack.c.h.b16 %v351
    %v2099 = vunpack.c.l.b16 %v352
    %v2100 = vunpack.c.h.b16 %v352
    %v2101 = vunpack.c.l.b16 %v353
    %v2102 = vunpack.c.h.b16 %v353
    %v2103 = vunpack.c.l.b16 %v354
    %v2104 = vunpack.c.h.b16 %v354
    %v2105 = vunpack.c.l.b16 %v355
    %v2106 = vunpack.c.h.b16 %v355
    %v2107 = vunpack.c.l.b16 %v356
    %v2108 = vunpack.c.h.b16 %v356
    %v2109 = vunpack.c.l.b16 %v357
    %v2110 = vunpack.c.h.b16 %v357
    %v2111 = vunpack.c.l.b16 %v358
    %v2112 = vunpack.c.h.b16 %v358
    %v2113 = vunpack.c.l.b16 %v359
    %v2114 = vunpack.c.h.b16 %v359
    %v2115 = vunpack.c.l.b16 %v360
    %v2116 = vunpack.c.h.b16 %v360
    %v2117 = vunpack.c.l.b16 %v361
    %v2118 = vunpack.c.h.b16 %v361
    %v2119 = vunpack.c.l.b16 %v362
    %v2120 = vunpack.c.h.b16 %v362
    %v2121 = vunpack.c.l.b16 %v363
    %v2122 = vunpack.c.h.b16 %v363
    %v2123 = vunpack.c.l.b16 %v364
    %v2124 = vunpack.c.h.b16 %v364
    %v2125 = vunpack.c.l.b16 %v365
    %v2126 = vunpack.c.h.b16 %v365
    %v2127 = vunpack.c.l.b16 %v366
    %v2128 = vunpack.c.h.b16 %v366
    %v2129 = vunpack.c.l.b16 %v367
    %v2130 = vunpack.c.h.b16 %v367
    %v2131 = vunpack.c.l.b16 %v368
    %v2132 = vunpack.c.h.b16 %v368
    %v2133 = vunpack.c.l.b16 %v369
    %v2134 = vunpack.c.h.b16 %v369
    %v2135 = vunpack.c.l.b16 %v370
    %v2136 = vunpack.c.h.b16 %v370
    %v2137 = vunpack.c.l.b16 %v371
    %v2138 = vunpack.c.h.b16 %v371
    %v2139 = vunpack.c.l.b16 %v372
    %v2140 = vunpack.c.h.b16 %v372
    %v2141 = vunpack.c.l.b16 %v373
    %v2142 = vunpack.c.h.b16 %v373
    %v2143 = vunpack.c.l.b16 %v374
    %v2144 = vunpack.c.h.b16 %v374
    %v2145 = vunpack.c.l.b16 %v375
    %v2146 = vunpack.c.h.b16 %v375
    %v2147 = vunpack.c.l.b16 %v376
    %v2148 = vunpack.c.h.b16 %v376
    %v2149 = vunpack.c.l.b16 %v377
    %v2150 = vunpack.c.h.b16 %v377
    %v2151 = vunpack.c.l.b16 %v378
    %v2152 = vunpack.c.h.b16 %v378
    %v2153 = vunpack.c.l.b16 %v379
    %v2154 = vunpack.c.h.b16 %v379
    %v2155 = vunpack.c.l.b16 %v380
    %v2156 = vunpack.c.h.b16 %v380
    %v2157 = vunpack.c.l.b16 %v381
    %v2158 = vunpack.c.h.b16 %v381
    %v2159 = vunpack.c.l.b16 %v382
    %v2160 = vunpack.c.h.b16 %v382
    %v2161 = vunpack.c.l.b16 %v383
    %v2162 = vunpack.c.h.b16 %v383
    %v2163 = vunpack.c.l.b16 %v384
    %v2164 = vunpack.c.h.b16 %v384
    %v2165 = vunpack.c.l.b16 %v385
    %v2166 = vunpack.c.h.b16 %v385
    %v2167 = vunpack.c.l.b16 %v386
    %v2168 = vunpack.c.h.b16 %v386
    %v2169 = vunpack.c.l.b16 %v387
    %v2170 = vunpack.c.h.b16 %v387
    %v2171 = vunpack.c.l.b16 %v388
    %v2172 = vunpack.c.h.b16 %v388
    %v2173 = vunpack.c.l.b16 %v389
    %v2174 = vunpack.c.h.b16 %v389
    %v2175 = vunpack.c.l.b16 %v390
    %v2176 = vunpack.c.h.b16 %v390
    %v2177 = vunpack.c.l.b16 %v391
    %v2178 = vunpack.c.h.b16 %v391
    %v2179 = vunpack.c.l.b16 %v392
    %v2180 = vunpack.c.h.b16 %v392
    %v2181 = vunpack.c.l.b16 %v393
    %v2182 = vunpack.c.h.b16 %v393
    %v2183 = vunpack.c.l.b16 %v394
    %v2184 = vunpack.c.h.b16 %v394
    %v2185 = vunpack.c.l.b16 %v395
    %v2186 = vunpack.c.h.b16 %v395
    %v2187 = vunpack.c.l.b16 %v396
    %v2188 = vunpack.c.h.b16 %v396
    %v2189 = vunpack.c.l.b16 %v397
    %v2190 = vunpack.c.h.b16 %v397
    %v2191 = vunpack.c.l.b16 %v398
    %v2192 = vunpack.c.h.b16 %v398
    %v2193 = vunpack.c.l.b16 %v399
    %v2194 = vunpack.c.h.b16 %v399
    %v2195 = vunpack.c.l.b16 %v400
    %v2196 = vunpack.c.h.b16 %v400
    %v2197 = vunpack.c.l.b16 %v401
    %v2198 = vunpack.c.h.b16 %v401
    %v2199 = vunpack.c.l.b16 %v402
    %v2200 = vunpack.c.h.b16 %v402
    %v2201 = vunpack.c.l.b16 %v403
    %v2202 = vunpack.c.h.b16 %v403
    %v2203 = vunpack.c.l.b16 %v404
    %v2204 = vunpack.c.h.b16 %v404
    %v2205 = vunpack.c.l.b16 %v405
    %v2206 = vunpack.c.h.b16 %v405
    %v2207 = vunpack.c.l.b16 %v406
    %v2208 = vunpack.c.h.b16 %v406
    %v2209 = vunpack.c.l.b16 %v407
    %v2210 = vunpack.c.h.b16 %v407
    %v2211 = vunpack.c.l.b16 %v408
    %v2212 = vunpack.c.h.b16 %v408
    %v2213 = vunpack.c.l.b16 %v409
    %v2214 = vunpack.c.h.b16 %v409
    %v2215 = vunpack.c.l.b16 %v410
    %v2216 = vunpack.c.h.b16 %v410
    %v2217 = vunpack.c.l.b16 %v411
    %v2218 = vunpack.c.h.b16 %v411
    %v2219 = vunpack.c.l.b16 %v412
    %v2220 = vunpack.c.h.b16 %v412
    %v2221 = vunpack.c.l.b16 %v413
    %v2222 = vunpack.c.h.b16 %v413
    %v2223 = vunpack.c.l.b16 %v414
    %v2224 = vunpack.c.h.b16 %v414
    %v2225 = vunpack.c.l.b16 %v415
    %v2226 = vunpack.c.h.b16 %v415
    %v2227 = vunpack.c.l.b16 %v416
    %v2228 = vunpack.c.h.b16 %v416
    %v2229 = vunpack.c.l.b16 %v417
    %v2230 = vunpack.c.h.b16 %v417
    %v2231 = vunpack.c.l.b16 %v418
    %v2232 = vunpack.c.h.b16 %v418
    %v2233 = vunpack.c.l.b16 %v419
    %v2234 = vunpack.c.h.b16 %v419
    %v2235 = vunpack.c.l.b16 %v420
    %v2236 = vunpack.c.h.b16 %v420
    %v2237 = vunpack.c.l.b16 %v421
    %v2238 = vunpack.c.h.b16 %v421
    %v2239 = vunpack.c.l.b16 %v422
    %v2240 = vunpack.c.h.b16 %v422
    %v2241 = vunpack.c.l.b16 %v423
    %v2242 = vunpack.c.h.b16 %v423
    %v2243 = vunpack.c.l.b16 %v424
    %v2244 = vunpack.c.h.b16 %v424
    %v2245 = vunpack.c.l.b16 %v425
    %v2246 = vunpack.c.h.b16 %v425
    %v2247 = vunpack.c.l.b16 %v426
    %v2248 = vunpack.c.h.b16 %v426
    %v2249 = vunpack.c.l.b16 %v427
    %v2250 = vunpack.c.h.b16 %v427
    %v2251 = vunpack.c.l.b16 %v428
    %v2252 = vunpack.c.h.b16 %v428
    %v2253 = vunpack.c.l.b16 %v429
    %v2254 = vunpack.c.h.b16 %v429
    %v2255 = vunpack.c.l.b16 %v430
    %v2256 = vunpack.c.h.b16 %v430
    %v2257 = vunpack.c.l.b16 %v431
    %v2258 = vunpack.c.h.b16 %v431
    %v2259 = vunpack.c.l.b16 %v432
    %v2260 = vunpack.c.h.b16 %v432
    %v2261 = vunpack.c.l.b16 %v433
    %v2262 = vunpack.c.h.b16 %v433
    %v2263 = vunpack.c.l.b16 %v434
    %v2264 = vunpack.c.h.b16 %v434
    %v2265 = vunpack.c.l.b16 %v435
    %v2266 = vunpack.c.h.b16 %v435
    %v2267 = vunpack.c.l.b16 %v436
    %v2268 = vunpack.c.h.b16 %v436
    %v2269 = vunpack.c.l.b16 %v437
    %v2270 = vunpack.c.h.b16 %v437
    %v2271 = vunpack.c.l.b16 %v438
    %v2272 = vunpack.c.h.b16 %v438
    %v2273 = vunpack.c.l.b16 %v439
    %v2274 = vunpack.c.h.b16 %v439
    %v2275 = vunpack.c.l.b16 %v440
    %v2276 = vunpack.c.h.b16 %v440
    %v2277 = vunpack.c.l.b16 %v441
    %v2278 = vunpack.c.h.b16 %v441
    %v2279 = vunpack.c.l.b16 %v442
    %v2280 = vunpack.c.h.b16 %v442
    %v2281 = vunpack.c.l.b16 %v443
    %v2282 = vunpack.c.h.b16 %v443
    %v2283 = vunpack.c.l.b16 %v444
    %v2284 = vunpack.c.h.b16 %v444
    %v2285 = vunpack.c.l.b16 %v445
    %v2286 = vunpack.c.h.b16 %v445
    %v2287 = vunpack.c.l.b16 %v446
    %v2288 = vunpack.c.h.b16 %v446
    %v2289 = vunpack.c.l.b16 %v447
    %v2290 = vunpack.c.h.b16 %v447
    %v2291 = vunpack.c.l.b16 %v448
    %v2292 = vunpack.c.h.b16 %v448
    %v2293 = vunpack.c.l.b16 %v449
    %v2294 = vunpack.c.h.b16 %v449
    %v2295 = vunpack.c.l.b16 %v450
    %v2296 = vunpack.c.h.b16 %v450
    %v2297 = vunpack.c.l.b16 %v451
    %v2298 = vunpack.c.h.b16 %v451
    %v2299 = vunpack.c.l.b16 %v452
    %v2300 = vunpack.c.h.b16 %v452
    %v2301 = vunpack.c.l.b16 %v453
    %v2302 = vunpack.c.h.b16 %v453
    %v2303 = vunpack.c.l.b16 %v454
    %v2304 = vunpack.c.h.b16 %v454
    %v2305 = vunpack.c.l.b16 %v455
    %v2306 = vunpack.c.h.b16 %v455
    %v2307 = vunpack.c.l.b16 %v456
    %v2308 = vunpack.c.h.b16 %v456
    %v2309 = vunpack.c.l.b16 %v457
    %v2310 = vunpack.c.h.b16 %v457
    %v2311 = vunpack.c.l.b16 %v458
    %v2312 = vunpack.c.h.b16 %v458
    %v2313 = vunpack.c.l.b16 %v459
    %v2314 = vunpack.c.h.b16 %v459
    %v2315 = vunpack.c.l.b16 %v460
    %v2316 = vunpack.c.h.b16 %v460
    %v2317 = vunpack.c.l.b16 %v461
    %v2318 = vunpack.c.h.b16 %v461
    %v2319 = vunpack.c.l.b16 %v462
    %v2320 = vunpack.c.h.b16 %v462
    %v2321 = vunpack.c.l.b16 %v463
    %v2322 = vunpack.c.h.b16 %v463
    %v2323 = vunpack.c.l.b16 %v464
    %v2324 = vunpack.c.h.b16 %v464
    %v2325 = vunpack.c.l.b16 %v465
    %v2326 = vunpack.c.h.b16 %v465
    %v2327 = vunpack.c.l.b16 %v466
    %v2328 = vunpack.c.h.b16 %v466
    %v2329 = vunpack.c.l.b16 %v467
    %v2330 = vunpack.c.h.b16 %v467
    %v2331 = vunpack.c.l.b16 %v468
    %v2332 = vunpack.c.h.b16 %v468
    %v2333 = vunpack.c.l.b16 %v469
    %v2334 = vunpack.c.h.b16 %v469
    %v2335 = vunpack.c.l.b16 %v470
    %v2336 = vunpack.c.h.b16 %v470
    %v2337 = vunpack.c.l.b16 %v471
    %v2338 = vunpack.c.h.b16 %v471
    %v2339 = vunpack.c.l.b16 %v472
    %v2340 = vunpack.c.h.b16 %v472
    %v2341 = vunpack.c.l.b16 %v473
    %v2342 = vunpack.c.h.b16 %v473
    %v2343 = vunpack.c.l.b16 %v474
    %v2344 = vunpack.c.h.b16 %v474
    %v2345 = vunpack.c.l.b16 %v475
    %v2346 = vunpack.c.h.b16 %v475
    %v2347 = vunpack.c.l.b16 %v476
    %v2348 = vunpack.c.h.b16 %v476
    %v2349 = vunpack.c.l.b16 %v477
    %v2350 = vunpack.c.h.b16 %v477
    %v2351 = vunpack.c.l.b16 %v478
    %v2352 = vunpack.c.h.b16 %v478
    %v2353 = vunpack.c.l.b16 %v479
    %v2354 = vunpack.c.h.b16 %v479
    %v2355 = vunpack.c.l.b16 %v480
    %v2356 = vunpack.c.h.b16 %v480
    %v2357 = vunpack.c.l.b16 %v481
    %v2358 = vunpack.c.h.b16 %v481
    %v2359 = vunpack.c.l.b16 %v482
    %v2360 = vunpack.c.h.b16 %v482
    %v2361 = vunpack.c.l.b16 %v483
    %v2362 = vunpack.c.h.b16 %v483
    %v2363 = vunpack.c.l.b16 %v484
    %v2364 = vunpack.c.h.b16 %v484
    %v2365 = vunpack.c.l.b16 %v485
    %v2366 = vunpack.c.h.b16 %v485
    %v2367 = vunpack.c.l.b16 %v486
    %v2368 = vunpack.c.h.b16 %v486
    %v2369 = vunpack.c.l.b16 %v487
    %v2370 = vunpack.c.h.b16 %v487
    %v2371 = vunpack.c.l.b16 %v488
    %v2372 = vunpack.c.h.b16 %v488
    %v2373 = vunpack.c.l.b16 %v489
    %v2374 = vunpack.c.h.b16 %v489
    %v2375 = vunpack.c.l.b16 %v490
    %v2376 = vunpack.c.h.b16 %v490
    %v2377 = vunpack.c.l.b16 %v491
    %v2378 = vunpack.c.h.b16 %v491
    %v2379 = vunpack.c.l.b16 %v492
    %v2380 = vunpack.c.h.b16 %v492
    %v2381 = vunpack.c.l.b16 %v493
    %v2382 = vunpack.c.h.b16 %v493
    %v2383 = vunpack.c.l.b16 %v494
    %v2384 = vunpack.c.h.b16 %v494
    %v2385 = vunpack.c.l.b16 %v495
    %v2386 = vunpack.c.h.b16 %v495
    %v2387 = vunpack.c.l.b16 %v496
    %v2388 = vunpack.c.h.b16 %v496
    %v2389 = vunpack.c.l.b16 %v497
    %v2390 = vunpack.c.h.b16 %v497
    %v2391 = vunpack.c.l.b16 %v498
    %v2392 = vunpack.c.h.b16 %v498
    %v2393 = vunpack.c.l.b16 %v499
    %v2394 = vunpack.c.h.b16 %v499
    %v2395 = vunpack.c.l.b16 %v500
    %v2396 = vunpack.c.h.b16 %v500
    %v2397 = vunpack.c.l.b16 %v501
    %v2398 = vunpack.c.h.b16 %v501
    %v2399 = vunpack.c.l.b16 %v502
    %v2400 = vunpack.c.h.b16 %v502
    %v2401 = vunpack.c.l.b16 %v503
    %v2402 = vunpack.c.h.b16 %v503
    %v2403 = vunpack.c.l.b16 %v504
    %v2404 = vunpack.c.h.b16 %v504
    %v2405 = vunpack.c.l.b16 %v505
    %v2406 = vunpack.c.h.b16 %v505
    %v2407 = vunpack.c.l.b16 %v506
    %v2408 = vunpack.c.h.b16 %v506
    %v2409 = vunpack.c.l.b16 %v507
    %v2410 = vunpack.c.h.b16 %v507
    %v2411 = vunpack.c.l.b16 %v508
    %v2412 = vunpack.c.h.b16 %v508
    %v2413 = vunpack.c.l.b16 %v509
    %v2414 = vunpack.c.h.b16 %v509
    %v2415 = vunpack.c.l.b16 %v510
    %v2416 = vunpack.c.h.b16 %v510
    %v2417 = vunpack.c.l.b16 %v511
    %v2418 = vunpack.c.h.b16 %v511
    %v2419 = vunpack.c.l.b16 %v512
    %v2420 = vunpack.c.h.b16 %v512
    %v2421 = vunpack.c.l.b16 %v513
    %v2422 = vunpack.c.h.b16 %v513
    %v2423 = vunpack.c.l.b16 %v514
    %v2424 = vunpack.c.h.b16 %v514
    %v2425 = vunpack.c.l.b16 %v515
    %v2426 = vunpack.c.h.b16 %v515
    %v2427 = vunpack.c.l.b16 %v516
    %v2428 = vunpack.c.h.b16 %v516
    %v2429 = vunpack.c.l.b16 %v517
    %v2430 = vunpack.c.h.b16 %v517
    %v2431 = vunpack.c.l.b16 %v518
    %v2432 = vunpack.c.h.b16 %v518
    %v2433 = vunpack.c.l.b16 %v519
    %v2434 = vunpack.c.h.b16 %v519
    %v2435 = vunpack.c.l.b16 %v520
    %v2436 = vunpack.c.h.b16 %v520
    %v2437 = vunpack.c.l.b16 %v521
    %v2438 = vunpack.c.h.b16 %v521
    %v2439 = vunpack.c.l.b16 %v522
    %v2440 = vunpack.c.h.b16 %v522
    %v2441 = vunpack.c.l.b16 %v523
    %v2442 = vunpack.c.h.b16 %v523
    %v2443 = vunpack.c.l.b16 %v524
    %v2444 = vunpack.c.h.b16 %v524
    %v2445 = vunpack.c.l.b16 %v525
    %v2446 = vunpack.c.h.b16 %v525
    %v2447 = vunpack.c.l.b16 %v526
    %v2448 = vunpack.c.h.b16 %v526
    %v2449 = vunpack.c.l.b16 %v527
    %v2450 = vunpack.c.h.b16 %v527
    %v2451 = vunpack.c.l.b16 %v528
    %v2452 = vunpack.c.h.b16 %v528
    %v2453 = vunpack.c.l.b16 %v529
    %v2454 = vunpack.c.h.b16 %v529
    %v2455 = vunpack.c.l.b16 %v530
    %v2456 = vunpack.c.h.b16 %v530
    %v2457 = vunpack.c.l.b16 %v531
    %v2458 = vunpack.c.h.b16 %v531
    %v2459 = vunpack.c.l.b16 %v532
    %v2460 = vunpack.c.h.b16 %v532
    %v2461 = vunpack.c.l.b16 %v533
    %v2462 = vunpack.c.h.b16 %v533
    %v2463 = vunpack.c.l.b16 %v534
    %v2464 = vunpack.c.h.b16 %v534
    %v2465 = vunpack.c.l.b16 %v535
    %v2466 = vunpack.c.h.b16 %v535
    %v2467 = vunpack.c.l.b16 %v536
    %v2468 = vunpack.c.h.b16 %v536
    %v2469 = vunpack.c.l.b16 %v537
    %v2470 = vunpack.c.h.b16 %v537
    %v2471 = vunpack.c.l.b16 %v538
    %v2472 = vunpack.c.h.b16 %v538
    %v2473 = vunpack.c.l.b16 %v539
    %v2474 = vunpack.c.h.b16 %v539
    %v2475 = vunpack.c.l.b16 %v540
    %v2476 = vunpack.c.h.b16 %v540
    %v2477 = vunpack.c.l.b16 %v541
    %v2478 = vunpack.c.h.b16 %v541
    %v2479 = vunpack.c.l.b16 %v542
    %v2480 = vunpack.c.h.b16 %v542
    %v2481 = vunpack.c.l.b16 %v543
    %v2482 = vunpack.c.h.b16 %v543
    %v2483 = vunpack.c.l.b16 %v544
    %v2484 = vunpack.c.h.b16 %v544
    %v2485 = vunpack.c.l.b16 %v545
    %v2486 = vunpack.c.h.b16 %v545
    %v2487 = vunpack.c.l.b16 %v546
    %v2488 = vunpack.c.h.b16 %v546
    %v2489 = vunpack.c.l.b16 %v547
    %v2490 = vunpack.c.h.b16 %v547
    %v2491 = vunpack.c.l.b16 %v548
    %v2492 = vunpack.c.h.b16 %v548
    %v2493 = vunpack.c.l.b16 %v549
    %v2494 = vunpack.c.h.b16 %v549
    %v2495 = vunpack.c.l.b16 %v550
    %v2496 = vunpack.c.h.b16 %v550
    %v2497 = vunpack.c.l.b16 %v551
    %v2498 = vunpack.c.h.b16 %v551
    %v2499 = vunpack.c.l.b16 %v552
    %v2500 = vunpack.c.h.b16 %v552
    %v2501 = vunpack.c.l.b16 %v553
    %v2502 = vunpack.c.h.b16 %v553
    %v2503 = vunpack.c.l.b16 %v554
    %v2504 = vunpack.c.h.b16 %v554
    %v2505 = vunpack.c.l.b16 %v555
    %v2506 = vunpack.c.h.b16 %v555
    %v2507 = vunpack.c.l.b16 %v556
    %v2508 = vunpack.c.h.b16 %v556
    %v2509 = vunpack.c.l.b16 %v557
    %v2510 = vunpack.c.h.b16 %v557
    %v2511 = vunpack.c.l.b16 %v558
    %v2512 = vunpack.c.h.b16 %v558
    %v2513 = vunpack.c.l.b16 %v559
    %v2514 = vunpack.c.h.b16 %v559
    %v2515 = vunpack.c.l.b16 %v560
    %v2516 = vunpack.c.h.b16 %v560
    %v2517 = vunpack.c.l.b16 %v561
    %v2518 = vunpack.c.h.b16 %v561
    %v2519 = vunpack.c.l.b16 %v562
    %v2520 = vunpack.c.h.b16 %v562
    %v2521 = vunpack.c.l.b16 %v563
    %v2522 = vunpack.c.h.b16 %v563
    %v2523 = vunpack.c.l.b16 %v564
    %v2524 = vunpack.c.h.b16 %v564
    %v2525 = vunpack.c.l.b16 %v565
    %v2526 = vunpack.c.h.b16 %v565
    %v2527 = vunpack.c.l.b16 %v566
    %v2528 = vunpack.c.h.b16 %v566
    %v2529 = vunpack.c.l.b16 %v567
    %v2530 = vunpack.c.h.b16 %v567
    %v2531 = vunpack.c.l.b16 %v568
    %v2532 = vunpack.c.h.b16 %v568
    %v2533 = vunpack.c.l.b16 %v569
    %v2534 = vunpack.c.h.b16 %v569
    %v2535 = vunpack.c.l.b16 %v570
    %v2536 = vunpack.c.h.b16 %v570
    %v2537 = vunpack.c.l.b16 %v571
    %v2538 = vunpack.c.h.b16 %v571
    %v2539 = vunpack.c.l.b16 %v572
    %v2540 = vunpack.c.h.b16 %v572
    %v2541 = vunpack.c.l.b16 %v573
    %v2542 = vunpack.c.h.b16 %v573
    %v2543 = vunpack.c.l.b16 %v574
    %v2544 = vunpack.c.h.b16 %v574
    %v2545 = vunpack.c.l.b16 %v575
    %v2546 = vunpack.c.h.b16 %v575
    %v2547 = vunpack.c.l.b16 %v576
    %v2548 = vunpack.c.h.b16 %v576
    %v2549 = vunpack.c.l.b16 %v577
    %v2550 = vunpack.c.h.b16 %v577
    %v2551 = vunpack.c.l.b16 %v578
    %v2552 = vunpack.c.h.b16 %v578
    %v2553 = vunpack.c.l.b16 %v579
    %v2554 = vunpack.c.h.b16 %v579
    %v2555 = vunpack.c.l.b16 %v580
    %v2556 = vunpack.c.h.b16 %v580
    %v2557 = vunpack.c.l.b16 %v581
    %v2558 = vunpack.c.h.b16 %v581
    %v2559 = vunpack.c.l.b16 %v582
    %v2560 = vunpack.c.h.b16 %v582
    %v2561 = vunpack.c.l.b16 %v583
    %v2562 = vunpack.c.h.b16 %v583
    %v2563 = vunpack.c.l.b16 %v584
    %v2564 = vunpack.c.h.b16 %v584
    %v2565 = vunpack.c.l.b16 %v585
    %v2566 = vunpack.c.h.b16 %v585
    %v2567 = vunpack.c.l.b16 %v586
    %v2568 = vunpack.c.h.b16 %v586
    %v2569 = vunpack.c.l.b16 %v587
    %v2570 = vunpack.c.h.b16 %v587
    %v2571 = vunpack.c.l.b16 %v588
    %v2572 = vunpack.c.h.b16 %v588
    %v2573 = vunpack.c.l.b16 %v589
    %v2574 = vunpack.c.h.b16 %v589
    %v2575 = vunpack.c.l.b16 %v590
    %v2576 = vunpack.c.h.b16 %v590
    %v2577 = vunpack.c.l.b16 %v591
    %v2578 = vunpack.c.h.b16 %v591
    %v2579 = vunpack.c.l.b16 %v592
    %v2580 = vunpack.c.h.b16 %v592
    %v2581 = vunpack.c.l.b16 %v593
    %v2582 = vunpack.c.h.b16 %v593
    %v2583 = vunpack.c.l.b16 %v594
    %v2584 = vunpack.c.h.b16 %v594
    %v2585 = vunpack.c.l.b16 %v595
    %v2586 = vunpack.c.h.b16 %v595
    %v2587 = vunpack.c.l.b16 %v596
    %v2588 = vunpack.c.h.b16 %v596
    %v2589 = vunpack.c.l.b16 %v597
    %v2590 = vunpack.c.h.b16 %v597
    %v2591 = vunpack.c.l.b16 %v598
    %v2592 = vunpack.c.h.b16 %v598
    %v2593 = vunpack.c.l.b16 %v599
    %v2594 = vunpack.c.h.b16 %v599
    %v2595 = vunpack.c.l.b16 %v600
    %v2596 = vunpack.c.h.b16 %v600
    %v2597 = vunpack.c.l.b16 %v601
    %v2598 = vunpack.c.h.b16 %v601
    %v2599 = vunpack.c.l.b16 %v602
    %v2600 = vunpack.c.h.b16 %v602
    %v2601 = vunpack.c.l.b16 %v603
    %v2602 = vunpack.c.h.b16 %v603
    %v2603 = vunpack.c.l.b16 %v604
    %v2604 = vunpack.c.h.b16 %v604
    %v2605 = vunpack.c.l.b16 %v605
    %v2606 = vunpack.c.h.b16 %v605
    %v2607 = vunpack.c.l.b16 %v606
    %v2608 = vunpack.c.h.b16 %v606
    %v2609 = vunpack.c.l.b16 %v607
    %v2610 = vunpack.c.h.b16 %v607
    %v2611 = vunpack.c.l.b16 %v608
    %v2612 = vunpack.c.h.b16 %v608
    %v2613 = vunpack.c.l.b16 %v609
    %v2614 = vunpack.c.h.b16 %v609
    %v2615 = vunpack.c.l.b16 %v610
    %v2616 = vunpack.c.h.b16 %v610
    %v2617 = vunpack.c.l.b16 %v611
    %v2618 = vunpack.c.h.b16 %v611
    %v2619 = vunpack.c.l.b16 %v612
    %v2620 = vunpack.c.h.b16 %v612
    %v2621 = vunpack.c.l.b16 %v613
    %v2622 = vunpack.c.h.b16 %v613
    %v2623 = vunpack.c.l.b16 %v614
    %v2624 = vunpack.c.h.b16 %v614
    %v2625 = vunpack.c.l.b16 %v615
    %v2626 = vunpack.c.h.b16 %v615
    %v2627 = vunpack.c.l.b16 %v616
    %v2628 = vunpack.c.h.b16 %v616
    %v2629 = vunpack.c.l.b16 %v617
    %v2630 = vunpack.c.h.b16 %v617
    %v2631 = vunpack.c.l.b16 %v618
    %v2632 = vunpack.c.h.b16 %v618
    %v2633 = vunpack.c.l.b16 %v619
    %v2634 = vunpack.c.h.b16 %v619
    %v2635 = vunpack.c.l.b16 %v620
    %v2636 = vunpack.c.h.b16 %v620
    %v2637 = vunpack.c.l.b16 %v621
    %v2638 = vunpack.c.h.b16 %v621
    %v2639 = vunpack.c.l.b16 %v622
    %v2640 = vunpack.c.h.b16 %v622
    %v2641 = vunpack.c.l.b16 %v623
    %v2642 = vunpack.c.h.b16 %v623
    %v2643 = vunpack.c.l.b16 %v624
    %v2644 = vunpack.c.h.b16 %v624
    %v2645 = vunpack.c.l.b16 %v625
    %v2646 = vunpack.c.h.b16 %v625
    %v2647 = vunpack.c.l.b16 %v626
    %v2648 = vunpack.c.h.b16 %v626
    %v2649 = vunpack.c.l.b16 %v627
    %v2650 = vunpack.c.h.b16 %v627
    %v2651 = vunpack.c.l.b16 %v628
    %v2652 = vunpack.c.h.b16 %v628
    %v2653 = vunpack.c.l.b16 %v629
    %v2654 = vunpack.c.h.b16 %v629
    %v2655 = vunpack.c.l.b16 %v630
    %v2656 = vunpack.c.h.b16 %v630
    %v2657 = vunpack.c.l.b16 %v631
    %v2658 = vunpack.c.h.b16 %v631
    %v2659 = vunpack.c.l.b16 %v632
    %v2660 = vunpack.c.h.b16 %v632
    %v2661 = vunpack.c.l.b16 %v633
    %v2662 = vunpack.c.h.b16 %v633
    %v2663 = vunpack.c.l.b16 %v634
    %v2664 = vunpack.c.h.b16 %v634
    %v2665 = vunpack.c.l.b16 %v635
    %v2666 = vunpack.c.h.b16 %v635
    %v2667 = vunpack.c.l.b16 %v636
    %v2668 = vunpack.c.h.b16 %v636
    %v2669 = vunpack.c.l.b16 %v637
    %v2670 = vunpack.c.h.b16 %v637
    %v2671 = vunpack.c.l.b16 %v638
    %v2672 = vunpack.c.h.b16 %v638
    %v2673 = vunpack.c.l.b16 %v639
    %v2674 = vunpack.c.h.b16 %v639
    %v2675 = vunpack.c.l.b16 %v640
    %v2676 = vunpack.c.h.b16 %v640
    %v2677 = vunpack.c.l.b16 %v641
    %v2678 = vunpack.c.h.b16 %v641
    %v2679 = vunpack.c.l.b16 %v642
    %v2680 = vunpack.c.h.b16 %v642
    %v2681 = vunpack.c.l.b16 %v643
    %v2682 = vunpack.c.h.b16 %v643
    %v2683 = vunpack.c.l.b16 %v644
    %v2684 = vunpack.c.h.b16 %v644
    %v2685 = vunpack.c.l.b16 %v645
    %v2686 = vunpack.c.h.b16 %v645
    %v2687 = vunpack.c.l.b16 %v646
    %v2688 = vunpack.c.h.b16 %v646
    %v2689 = vunpack.c.l.b16 %v647
    %v2690 = vunpack.c.h.b16 %v647
    %v2691 = vunpack.c.l.b16 %v648
    %v2692 = vunpack.c.h.b16 %v648
    %v2693 = vunpack.c.l.b16 %v649
    %v2694 = vunpack.c.h.b16 %v649
    %v2695 = vunpack.c.l.b16 %v650
    %v2696 = vunpack.c.h.b16 %v650
    %v2697 = vunpack.c.l.b16 %v651
    %v2698 = vunpack.c.h.b16 %v651
    %v2699 = vunpack.c.l.b16 %v652
    %v2700 = vunpack.c.h.b16 %v652
    %v2701 = vunpack.c.l.b16 %v653
    %v2702 = vunpack.c.h.b16 %v653
    %v2703 = vunpack.c.l.b16 %v654
    %v2704 = vunpack.c.h.b16 %v654
    %v2705 = vunpack.c.l.b16 %v655
    %v2706 = vunpack.c.h.b16 %v655
    %v2707 = vunpack.c.l.b16 %v656
    %v2708 = vunpack.c.h.b16 %v656
    %v2709 = vunpack.c.l.b16 %v657
    %v2710 = vunpack.c.h.b16 %v657
    %v2711 = vunpack.c.l.b16 %v658
    %v2712 = vunpack.c.h.b16 %v658
    %v2713 = vunpack.c.l.b16 %v659
    %v2714 = vunpack.c.h.b16 %v659
    %v2715 = vunpack.c.l.b16 %v660
    %v2716 = vunpack.c.h.b16 %v660
    %v2717 = vunpack.c.l.b16 %v661
    %v2718 = vunpack.c.h.b16 %v661
    %v2719 = vunpack.c.l.b16 %v662
    %v2720 = vunpack.c.h.b16 %v662
    %v2721 = vunpack.c.l.b16 %v663
    %v2722 = vunpack.c.h.b16 %v663
    %v2723 = vunpack.c.l.b16 %v664
    %v2724 = vunpack.c.h.b16 %v664
    %v2725 = vunpack.c.l.b16 %v665
    %v2726 = vunpack.c.h.b16 %v665
    %v2727 = vunpack.c.l.b16 %v666
    %v2728 = vunpack.c.h.b16 %v666
    %v2729 = vunpack.c.l.b16 %v667
    %v2730 = vunpack.c.h.b16 %v667
    %v2731 = vunpack.c.l.b16 %v668
    %v2732 = vunpack.c.h.b16 %v668
    %v2733 = vunpack.c.l.b16 %v669
    %v2734 = vunpack.c.h.b16 %v669
    %v2735 = vunpack.c.l.b16 %v670
    %v2736 = vunpack.c.h.b16 %v670
    %v2737 = vunpack.c.l.b16 %v671
    %v2738 = vunpack.c.h.b16 %v671
    %v2739 = vunpack.c.l.b16 %v672
    %v2740 = vunpack.c.h.b16 %v672
    %v2741 = vunpack.c.l.b16 %v673
    %v2742 = vunpack.c.h.b16 %v673
    %v2743 = vunpack.c.l.b16 %v674
    %v2744 = vunpack.c.h.b16 %v674
    %v2745 = vunpack.c.l.b16 %v675
    %v2746 = vunpack.c.h.b16 %v675
    %v2747 = vunpack.c.l.b16 %v676
    %v2748 = vunpack.c.h.b16 %v676
    %v2749 = vunpack.c.l.b16 %v677
    %v2750 = vunpack.c.h.b16 %v677
    %v2751 = vunpack.c.l.b16 %v678
    %v2752 = vunpack.c.h.b16 %v678
    %v2753 = vunpack.c.l.b16 %v679
    %v2754 = vunpack.c.h.b16 %v679
    %v2755 = vunpack.c.l.b16 %v680
    %v2756 = vunpack.c.h.b16 %v680
    %v2757 = vunpack.c.l.b16 %v681
    %v2758 = vunpack.c.h.b16 %v681
    %v2759 = vunpack.c.l.b16 %v682
    %v2760 = vunpack.c.h.b16 %v682
    %v2761 = vunpack.c.l.b16 %v683
    %v2762 = vunpack.c.h.b16 %v683
    %v2763 = vunpack.c.l.b16 %v684
    %v2764 = vunpack.c.h.b16 %v684
    %v2765 = vunpack.c.l.b16 %v685
    %v2766 = vunpack.c.h.b16 %v685
    %v2767 = vunpack.c.l.b16 %v686
    %v2768 = vunpack.c.h.b16 %v686
    %v2769 = vunpack.c.l.b16 %v687
    %v2770 = vunpack.c.h.b16 %v687
    %v2771 = vunpack.c.l.b16 %v688
    %v2772 = vunpack.c.h.b16 %v688
    %v2773 = vunpack.c.l.b16 %v689
    %v2774 = vunpack.c.h.b16 %v689
    %v2775 = vunpack.c.l.b16 %v690
    %v2776 = vunpack.c.h.b16 %v690
    %v2777 = vunpack.c.l.b16 %v691
    %v2778 = vunpack.c.h.b16 %v691
    %v2779 = vunpack.c.l.b16 %v692
    %v2780 = vunpack.c.h.b16 %v692
    %v2781 = vunpack.c.l.b16 %v693
    %v2782 = vunpack.c.h.b16 %v693
    %v2783 = vunpack.c.l.b16 %v694
    %v2784 = vunpack.c.h.b16 %v694
    %v2785 = vunpack.c.l.b16 %v695
    %v2786 = vunpack.c.h.b16 %v695
    %v2787 = vunpack.c.l.b16 %v696
    %v2788 = vunpack.c.h.b16 %v696
    %v2789 = vunpack.c.l.b16 %v697
    %v2790 = vunpack.c.h.b16 %v697
    %v2791 = vunpack.c.l.b16 %v698
    %v2792 = vunpack.c.h.b16 %v698
    %v2793 = vunpack.c.l.b16 %v699
    %v2794 = vunpack.c.h.b16 %v699
    %v2795 = vunpack.c.l.b16 %v700
    %v2796 = vunpack.c.h.b16 %v700
    %v2797 = vunpack.c.l.b16 %v701
    %v2798 = vunpack.c.h.b16 %v701
    %v2799 = vunpack.c.l.b16 %v702
    %v2800 = vunpack.c.h.b16 %v702
    %v2801 = vunpack.c.l.b16 %v703
    %v2802 = vunpack.c.h.b16 %v703
    %v2803 = vunpack.c.l.b16 %v704
    %v2804 = vunpack.c.h.b16 %v704
    %v2805 = vunpack.c.l.b16 %v705
    %v2806 = vunpack.c.h.b16 %v705
    %v2807 = vunpack.c.l.b16 %v706
    %v2808 = vunpack.c.h.b16 %v706
    %v2809 = vunpack.c.l.b16 %v707
    %v2810 = vunpack.c.h.b16 %v707
    %v2811 = vunpack.c.l.b16 %v708
    %v2812 = vunpack.c.h.b16 %v708
    %v2813 = vunpack.c.l.b16 %v709
    %v2814 = vunpack.c.h.b16 %v709
    %v2815 = vunpack.c.l.b16 %v710
    %v2816 = vunpack.c.h.b16 %v710
    %v2817 = vunpack.c.l.b16 %v711
    %v2818 = vunpack.c.h.b16 %v711
    %v2819 = vunpack.c.l.b16 %v712
    %v2820 = vunpack.c.h.b16 %v712
    %v2821 = vunpack.c.l.b16 %v713
    %v2822 = vunpack.c.h.b16 %v713
    %v2823 = vunpack.c.l.b16 %v714
    %v2824 = vunpack.c.h.b16 %v714
    %v2825 = vunpack.c.l.b16 %v715
    %v2826 = vunpack.c.h.b16 %v715
    %v2827 = vunpack.c.l.b16 %v716
    %v2828 = vunpack.c.h.b16 %v716
    %v2829 = vunpack.c.l.b16 %v717
    %v2830 = vunpack.c.h.b16 %v717
    %v2831 = vunpack.c.l.b16 %v718
    %v2832 = vunpack.c.h.b16 %v718
    %v2833 = vunpack.c.l.b16 %v719
    %v2834 = vunpack.c.h.b16 %v719
    %v2835 = vunpack.c.l.b16 %v720
    %v2836 = vunpack.c.h.b16 %v720
    %v2837 = vunpack.c.l.b16 %v721
    %v2838 = vunpack.c.h.b16 %v721
    %v2839 = vunpack.c.l.b16 %v722
    %v2840 = vunpack.c.h.b16 %v722
    %v2841 = vunpack.c.l.b16 %v723
    %v2842 = vunpack.c.h.b16 %v723
    %v2843 = vunpack.c.l.b16 %v724
    %v2844 = vunpack.c.h.b16 %v724
    %v2845 = vunpack.c.l.b16 %v725
    %v2846 = vunpack.c.h.b16 %v725
    %v2847 = vunpack.c.l.b16 %v726
    %v2848 = vunpack.c.h.b16 %v726
    %v2849 = vunpack.c.l.b16 %v727
    %v2850 = vunpack.c.h.b16 %v727
    %v2851 = vunpack.c.l.b16 %v728
    %v2852 = vunpack.c.h.b16 %v728
    %v2853 = vunpack.c.l.b16 %v729
    %v2854 = vunpack.c.h.b16 %v729
    %v2855 = vunpack.c.l.b16 %v730
    %v2856 = vunpack.c.h.b16 %v730
    %v2857 = vunpack.c.l.b16 %v731
    %v2858 = vunpack.c.h.b16 %v731
    %v2859 = vunpack.c.l.b16 %v732
    %v2860 = vunpack.c.h.b16 %v732
    %v2861 = vunpack.c.l.b16 %v733
    %v2862 = vunpack.c.h.b16 %v733
    %v2863 = vunpack.c.l.b16 %v734
    %v2864 = vunpack.c.h.b16 %v734
    %v2865 = vunpack.c.l.b16 %v735
    %v2866 = vunpack.c.h.b16 %v735
    %v2867 = vunpack.c.l.b16 %v736
    %v2868 = vunpack.c.h.b16 %v736
    %v2869 = vunpack.c.l.b16 %v737
    %v2870 = vunpack.c.h.b16 %v737
    %v2871 = vunpack.c.l.b16 %v738
    %v2872 = vunpack.c.h.b16 %v738
    %v2873 = vunpack.c.l.b16 %v739
    %v2874 = vunpack.c.h.b16 %v739
    %v2875 = vunpack.c.l.b16 %v740
    %v2876 = vunpack.c.h.b16 %v740
    %v2877 = vunpack.c.l.b16 %v741
    %v2878 = vunpack.c.h.b16 %v741
    %v2879 = vunpack.c.l.b16 %v742
    %v2880 = vunpack.c.h.b16 %v742
    %v2881 = vunpack.c.l.b16 %v743
    %v2882 = vunpack.c.h.b16 %v743
    %v2883 = vunpack.c.l.b16 %v744
    %v2884 = vunpack.c.h.b16 %v744
    %v2885 = vunpack.c.l.b16 %v745
    %v2886 = vunpack.c.h.b16 %v745
    %v2887 = vunpack.c.l.b16 %v746
    %v2888 = vunpack.c.h.b16 %v746
    %v2889 = vunpack.c.l.b16 %v747
    %v2890 = vunpack.c.h.b16 %v747
    %v2891 = vunpack.c.l.b16 %v748
    %v2892 = vunpack.c.h.b16 %v748
    %v2893 = vunpack.c.l.b16 %v749
    %v2894 = vunpack.c.h.b16 %v749
    %v2895 = vunpack.c.l.b16 %v750
    %v2896 = vunpack.c.h.b16 %v750
    %v2897 = vunpack.c.l.b16 %v751
    %v2898 = vunpack.c.h.b16 %v751
    %v2899 = vunpack.c.l.b16 %v752
    %v2900 = vunpack.c.h.b16 %v752
    %v2901 = vunpack.c.l.b16 %v753
    %v2902 = vunpack.c.h.b16 %v753
    %v2903 = vunpack.c.l.b16 %v754
    %v2904 = vunpack.c.h.b16 %v754
    %v2905 = vunpack.c.l.b16 %v755
    %v2906 = vunpack.c.h.b16 %v755
    %v2907 = vunpack.c.l.b16 %v756
    %v2908 = vunpack.c.h.b16 %v756
    %v2909 = vunpack.c.l.b16 %v757
    %v2910 = vunpack.c.h.b16 %v757
    %v2911 = vunpack.c.l.b16 %v758
    %v2912 = vunpack.c.h.b16 %v758
    %v2913 = vunpack.c.l.b16 %v759
    %v2914 = vunpack.c.h.b16 %v759
    %v2915 = vunpack.c.l.b16 %v760
    %v2916 = vunpack.c.h.b16 %v760
    %v2917 = vunpack.c.l.b16 %v761
    %v2918 = vunpack.c.h.b16 %v761
    %v2919 = vunpack.c.l.b16 %v762
    %v2920 = vunpack.c.h.b16 %v762
    %v2921 = vunpack.c.l.b16 %v763
    %v2922 = vunpack.c.h.b16 %v763
    %v2923 = vunpack.c.l.b16 %v764
    %v2924 = vunpack.c.h.b16 %v764
    %v2925 = vunpack.c.l.b16 %v765
    %v2926 = vunpack.c.h.b16 %v765
    %v2927 = vunpack.c.l.b16 %v766
    %v2928 = vunpack.c.h.b16 %v766
    %v2929 = vunpack.c.l.b16 %v767
    %v2930 = vunpack.c.h.b16 %v767
    %v2931 = vunpack.c.l.b16 %v768
    %v2932 = vunpack.c.h.b16 %v768
    %v2933 = vunpack.c.l.b16 %v769
    %v2934 = vunpack.c.h.b16 %v769
    %v2935 = vunpack.c.l.b16 %v770
    %v2936 = vunpack.c.h.b16 %v770
    %v2937 = vunpack.c.l.b16 %v771
    %v2938 = vunpack.c.h.b16 %v771
    %v2939 = vunpack.c.l.b16 %v772
    %v2940 = vunpack.c.h.b16 %v772
    %v2941 = vunpack.c.l.b16 %v773
    %v2942 = vunpack.c.h.b16 %v773
    %v2943 = vunpack.c.l.b16 %v774
    %v2944 = vunpack.c.h.b16 %v774
    %v2945 = vunpack.c.l.b16 %v775
    %v2946 = vunpack.c.h.b16 %v775
    %v2947 = vunpack.c.l.b16 %v776
    %v2948 = vunpack.c.h.b16 %v776
    %v2949 = vunpack.c.l.b16 %v777
    %v2950 = vunpack.c.h.b16 %v777
    %v2951 = vunpack.c.l.b16 %v778
    %v2952 = vunpack.c.h.b16 %v778
    %v2953 = vunpack.c.l.b16 %v779
    %v2954 = vunpack.c.h.b16 %v779
    %v2955 = vunpack.c.l.b16 %v780
    %v2956 = vunpack.c.h.b16 %v780
    %v2957 = vunpack.c.l.b16 %v781
    %v2958 = vunpack.c.h.b16 %v781
    %v2959 = vunpack.c.l.b16 %v782
    %v2960 = vunpack.c.h.b16 %v782
    %v2961 = vunpack.c.l.b16 %v783
    %v2962 = vunpack.c.h.b16 %v783
    %v2963 = vunpack.c.l.b16 %v784
    %v2964 = vunpack.c.h.b16 %v784
    %v2965 = vunpack.c.l.b16 %v785
    %v2966 = vunpack.c.h.b16 %v785
    %v2967 = vunpack.c.l.b16 %v786
    %v2968 = vunpack.c.h.b16 %v786
    %v2969 = vunpack.c.l.b16 %v787
    %v2970 = vunpack.c.h.b16 %v787
    %v2971 = vunpack.c.l.b16 %v788
    %v2972 = vunpack.c.h.b16 %v788
    %v2973 = vunpack.c.l.b16 %v789
    %v2974 = vunpack.c.h.b16 %v789
    %v2975 = vunpack.c.l.b16 %v790
    %v2976 = vunpack.c.h.b16 %v790
    %v2977 = vunpack.c.l.b16 %v791
    %v2978 = vunpack.c.h.b16 %v791
    %v2979 = vunpack.c.l.b16 %v792
    %v2980 = vunpack.c.h.b16 %v792
    %v2981 = vunpack.c.l.b16 %v793
    %v2982 = vunpack.c.h.b16 %v793
    %v2983 = vunpack.c.l.b16 %v794
    %v2984 = vunpack.c.h.b16 %v794
    %v2985 = vunpack.c.l.b16 %v795
    %v2986 = vunpack.c.h.b16 %v795
    %v2987 = vunpack.c.l.b16 %v796
    %v2988 = vunpack.c.h.b16 %v796
    %v2989 = vunpack.c.l.b16 %v797
    %v2990 = vunpack.c.h.b16 %v797
    %v2991 = vunpack.c.l.b16 %v798
    %v2992 = vunpack.c.h.b16 %v798
    %v2993 = vunpack.c.l.b16 %v799
    %v2994 = vunpack.c.h.b16 %v799
    %v2995 = vunpack.c.l.b16 %v800
    %v2996 = vunpack.c.h.b16 %v800
    %v2997 = vunpack.c.l.b16 %v801
    %v2998 = vunpack.c.h.b16 %v801
    %v2999 = vunpack.c.l.b16 %v802
    %v3000 = vunpack.c.h.b16 %v802
    %v3001 = vunpack.c.l.b16 %v803
    %v3002 = vunpack.c.h.b16 %v803
    %v3003 = vunpack.c.l.b16 %v804
    %v3004 = vunpack.c.h.b16 %v804
    %v3005 = vunpack.c.l.b16 %v805
    %v3006 = vunpack.c.h.b16 %v805
    %v3007 = vunpack.c.l.b16 %v806
    %v3008 = vunpack.c.h.b16 %v806
    %v3009 = vunpack.c.l.b16 %v807
    %v3010 = vunpack.c.h.b16 %v807
    %v3011 = vunpack.c.l.b16 %v808
    %v3012 = vunpack.c.h.b16 %v808
    %v3013 = vunpack.c.l.b16 %v809
    %v3014 = vunpack.c.h.b16 %v809
    %v3015 = vunpack.c.l.b16 %v810
    %v3016 = vunpack.c.h.b16 %v810
    %v3017 = vunpack.c.l.b16 %v811
    %v3018 = vunpack.c.h.b16 %v811
    %v3019 = vunpack.c.l.b16 %v812
    %v3020 = vunpack.c.h.b16 %v812
    %v3021 = vunpack.c.l.b16 %v813
    %v3022 = vunpack.c.h.b16 %v813
    %v3023 = vunpack.c.l.b16 %v814
    %v3024 = vunpack.c.h.b16 %v814
    %v3025 = vunpack.c.l.b16 %v815
    %v3026 = vunpack.c.h.b16 %v815
    %v3027 = vunpack.c.l.b16 %v816
    %v3028 = vunpack.c.h.b16 %v816
    %v3029 = vunpack.c.l.b16 %v817
    %v3030 = vunpack.c.h.b16 %v817
    %v3031 = vunpack.c.l.b16 %v818
    %v3032 = vunpack.c.h.b16 %v818
    %v3033 = vunpack.c.l.b16 %v819
    %v3034 = vunpack.c.h.b16 %v819
    %v3035 = vunpack.c.l.b16 %v820
    %v3036 = vunpack.c.h.b16 %v820
    %v3037 = vunpack.c.l.b16 %v821
    %v3038 = vunpack.c.h.b16 %v821
    %v3039 = vunpack.c.l.b16 %v822
    %v3040 = vunpack.c.h.b16 %v822
    %v3041 = vunpack.c.l.b16 %v823
    %v3042 = vunpack.c.h.b16 %v823
    %v3043 = vunpack.c.l.b16 %v824
    %v3044 = vunpack.c.h.b16 %v824
    %v3045 = vunpack.c.l.b16 %v825
    %v3046 = vunpack.c.h.b16 %v825
    %v3047 = vunpack.c.l.b16 %v826
    %v3048 = vunpack.c.h.b16 %v826
    %v3049 = vunpack.c.l.b16 %v827
    %v3050 = vunpack.c.h.b16 %v827
    %v3051 = vunpack.c.l.b16 %v828
    %v3052 = vunpack.c.h.b16 %v828
    %v3053 = vunpack.c.l.b16 %v829
    %v3054 = vunpack.c.h.b16 %v829
    %v3055 = vunpack.c.l.b16 %v830
    %v3056 = vunpack.c.h.b16 %v830
    %v3057 = vunpack.c.l.b16 %v831
    %v3058 = vunpack.c.h.b16 %v831
    %v3059 = vunpack.c.l.b16 %v832
    %v3060 = vunpack.c.h.b16 %v832
    %v3061 = vunpack.c.l.b16 %v833
    %v3062 = vunpack.c.h.b16 %v833
    %v3063 = vunpack.c.l.b16 %v834
    %v3064 = vunpack.c.h.b16 %v834
    %v3065 = vunpack.c.l.b16 %v835
    %v3066 = vunpack.c.h.b16 %v835
    %v3067 = vunpack.c.l.b16 %v836
    %v3068 = vunpack.c.h.b16 %v836
    %v3069 = vunpack.c.l.b16 %v837
    %v3070 = vunpack.c.h.b16 %v837
    %v3071 = vunpack.c.l.b16 %v838
    %v3072 = vunpack.c.h.b16 %v838
    %v3073 = vunpack.c.l.b16 %v839
    %v3074 = vunpack.c.h.b16 %v839
    %v3075 = vunpack.c.l.b16 %v840
    %v3076 = vunpack.c.h.b16 %v840
    %v3077 = vunpack.c.l.b16 %v841
    %v3078 = vunpack.c.h.b16 %v841
    %v3079 = vunpack.c.l.b16 %v842
    %v3080 = vunpack.c.h.b16 %v842
    %v3081 = vunpack.c.l.b16 %v843
    %v3082 = vunpack.c.h.b16 %v843
    %v3083 = vunpack.c.l.b16 %v844
    %v3084 = vunpack.c.h.b16 %v844
    %v3085 = vunpack.c.l.b16 %v845
    %v3086 = vunpack.c.h.b16 %v845
    %v3087 = vunpack.c.l.b16 %v846
    %v3088 = vunpack.c.h.b16 %v846
    %v3089 = vunpack.c.l.b16 %v847
    %v3090 = vunpack.c.h.b16 %v847
    %v3091 = vunpack.c.l.b16 %v848
    %v3092 = vunpack.c.h.b16 %v848
    %v3093 = vunpack.c.l.b16 %v849
    %v3094 = vunpack.c.h.b16 %v849
    %v3095 = vunpack.c.l.b16 %v850
    %v3096 = vunpack.c.h.b16 %v850
    %v3097 = vunpack.c.l.b16 %v851
    %v3098 = vunpack.c.h.b16 %v851
    %v3099 = vunpack.c.l.b16 %v852
    %v3100 = vunpack.c.h.b16 %v852
    %v3101 = vunpack.c.l.b16 %v853
    %v3102 = vunpack.c.h.b16 %v853
    %v3103 = vunpack.c.l.b16 %v854
    %v3104 = vunpack.c.h.b16 %v854
    %v3105 = vunpack.c.l.b16 %v855
    %v3106 = vunpack.c.h.b16 %v855
    %v3107 = vunpack.c.l.b16 %v856
    %v3108 = vunpack.c.h.b16 %v856
    %v3109 = vunpack.c.l.b16 %v857
    %v3110 = vunpack.c.h.b16 %v857
    %v3111 = vunpack.c.l.b16 %v858
    %v3112 = vunpack.c.h.b16 %v858
    %v3113 = vunpack.c.l.b16 %v859
    %v3114 = vunpack.c.h.b16 %v859
    %v3115 = vunpack.c.l.b16 %v860
    %v3116 = vunpack.c.h.b16 %v860
    %v3117 = vunpack.c.l.b16 %v861
    %v3118 = vunpack.c.h.b16 %v861
    %v3119 = vunpack.c.l.b16 %v862
    %v3120 = vunpack.c.h.b16 %v862
    %v3121 = vunpack.c.l.b16 %v863
    %v3122 = vunpack.c.h.b16 %v863
    %v3123 = vunpack.c.l.b16 %v864
    %v3124 = vunpack.c.h.b16 %v864
    %v3125 = vunpack.c.l.b16 %v865
    %v3126 = vunpack.c.h.b16 %v865
    %v3127 = vunpack.c.l.b16 %v866
    %v3128 = vunpack.c.h.b16 %v866
    %v3129 = vunpack.c.l.b16 %v867
    %v3130 = vunpack.c.h.b16 %v867
    %v3131 = vunpack.c.l.b16 %v868
    %v3132 = vunpack.c.h.b16 %v868
    %v3133 = vunpack.c.l.b16 %v869
    %v3134 = vunpack.c.h.b16 %v869
    %v3135 = vunpack.c.l.b16 %v870
    %v3136 = vunpack.c.h.b16 %v870
    %v3137 = vunpack.c.l.b16 %v871
    %v3138 = vunpack.c.h.b16 %v871
    %v3139 = vunpack.c.l.b16 %v872
    %v3140 = vunpack.c.h.b16 %v872
    %v3141 = vunpack.c.l.b16 %v873
    %v3142 = vunpack.c.h.b16 %v873
    %v3143 = vunpack.c.l.b16 %v874
    %v3144 = vunpack.c.h.b16 %v874
    %v3145 = vunpack.c.l.b16 %v875
    %v3146 = vunpack.c.h.b16 %v875
    %v3147 = vunpack.c.l.b16 %v876
    %v3148 = vunpack.c.h.b16 %v876
    %v3149 = vunpack.c.l.b16 %v877
    %v3150 = vunpack.c.h.b16 %v877
    %v3151 = vunpack.c.l.b16 %v878
    %v3152 = vunpack.c.h.b16 %v878
    %v3153 = vunpack.c.l.b16 %v879
    %v3154 = vunpack.c.h.b16 %v879
    %v3155 = vunpack.c.l.b16 %v880
    %v3156 = vunpack.c.h.b16 %v880
    %v3157 = vunpack.c.l.b16 %v881
    %v3158 = vunpack.c.h.b16 %v881
    %v3159 = vunpack.c.l.b16 %v882
    %v3160 = vunpack.c.h.b16 %v882
    %v3161 = vunpack.c.l.b16 %v883
    %v3162 = vunpack.c.h.b16 %v883
    %v3163 = vunpack.c.l.b16 %v884
    %v3164 = vunpack.c.h.b16 %v884
    %v3165 = vunpack.c.l.b16 %v885
    %v3166 = vunpack.c.h.b16 %v885
    %v3167 = vunpack.c.l.b16 %v886
    %v3168 = vunpack.c.h.b16 %v886
    %v3169 = vunpack.c.l.b16 %v887
    %v3170 = vunpack.c.h.b16 %v887
    %v3171 = vunpack.c.l.b16 %v888
    %v3172 = vunpack.c.h.b16 %v888
    %v3173 = vunpack.c.l.b16 %v889
    %v3174 = vunpack.c.h.b16 %v889
    %v3175 = vunpack.c.l.b16 %v890
    %v3176 = vunpack.c.h.b16 %v890
    %v3177 = vunpack.c.l.b16 %v891
    %v3178 = vunpack.c.h.b16 %v891
    %v3179 = vunpack.c.l.b16 %v892
    %v3180 = vunpack.c.h.b16 %v892
    %v3181 = vunpack.c.l.b16 %v893
    %v3182 = vunpack.c.h.b16 %v893
    %v3183 = vunpack.c.l.b16 %v894
    %v3184 = vunpack.c.h.b16 %v894
    %v3185 = vunpack.c.l.b16 %v895
    %v3186 = vunpack.c.h.b16 %v895
    %v3187 = vunpack.c.l.b16 %v896
    %v3188 = vunpack.c.h.b16 %v896
    %v3189 = vunpack.c.l.b16 %v897
    %v3190 = vunpack.c.h.b16 %v897
    %v3191 = vunpack.c.l.b16 %v898
    %v3192 = vunpack.c.h.b16 %v898
    %v3193 = vunpack.c.l.b16 %v899
    %v3194 = vunpack.c.h.b16 %v899
    %v3195 = vunpack.c.l.b16 %v900
    %v3196 = vunpack.c.h.b16 %v900
    %v3197 = vunpack.c.l.b16 %v901
    %v3198 = vunpack.c.h.b16 %v901
    %v3199 = vunpack.c.l.b16 %v902
    %v3200 = vunpack.c.h.b16 %v902
    %v3201 = vunpack.c.l.b16 %v903
    %v3202 = vunpack.c.h.b16 %v903
    %v3203 = vunpack.c.l.b16 %v904
    %v3204 = vunpack.c.h.b16 %v904
    %v3205 = vunpack.c.l.b16 %v905
    %v3206 = vunpack.c.h.b16 %v905
    %v3207 = vunpack.c.l.b16 %v906
    %v3208 = vunpack.c.h.b16 %v906
    %v3209 = vunpack.c.l.b16 %v907
    %v3210 = vunpack.c.h.b16 %v907
    %v3211 = vunpack.c.l.b16 %v908
    %v3212 = vunpack.c.h.b16 %v908
    %v3213 = vunpack.c.l.b16 %v909
    %v3214 = vunpack.c.h.b16 %v909
    %v3215 = vunpack.c.l.b16 %v910
    %v3216 = vunpack.c.h.b16 %v910
    %v3217 = vunpack.c.l.b16 %v911
    %v3218 = vunpack.c.h.b16 %v911
    %v3219 = vunpack.c.l.b16 %v912
    %v3220 = vunpack.c.h.b16 %v912
    %v3221 = vunpack.c.l.b16 %v913
    %v3222 = vunpack.c.h.b16 %v913
    %v3223 = vunpack.c.l.b16 %v914
    %v3224 = vunpack.c.h.b16 %v914
    %v3225 = vunpack.c.l.b16 %v915
    %v3226 = vunpack.c.h.b16 %v915
    %v3227 = vunpack.c.l.b16 %v916
    %v3228 = vunpack.c.h.b16 %v916
    %v3229 = vunpack.c.l.b16 %v917
    %v3230 = vunpack.c.h.b16 %v917
    %v3231 = vunpack.c.l.b16 %v918
    %v3232 = vunpack.c.h.b16 %v918
    %v3233 = vunpack.c.l.b16 %v919
    %v3234 = vunpack.c.h.b16 %v919
    %v3235 = vunpack.c.l.b16 %v920
    %v3236 = vunpack.c.h.b16 %v920
    %v3237 = vunpack.c.l.b16 %v921
    %v3238 = vunpack.c.h.b16 %v921
    %v3239 = vunpack.c.l.b16 %v922
    %v3240 = vunpack.c.h.b16 %v922
    %v3241 = vunpack.c.l.b16 %v923
    %v3242 = vunpack.c.h.b16 %v923
    %v3243 = vunpack.c.l.b16 %v924
    %v3244 = vunpack.c.h.b16 %v924
    %v3245 = vunpack.c.l.b16 %v925
    %v3246 = vunpack.c.h.b16 %v925
    %v3247 = vunpack.c.l.b16 %v926
    %v3248 = vunpack.c.h.b16 %v926
    %v3249 = vunpack.c.l.b16 %v927
    %v3250 = vunpack.c.h.b16 %v927
    %v3251 = vunpack.c.l.b16 %v928
    %v3252 = vunpack.c.h.b16 %v928
    %v3253 = vunpack.c.l.b16 %v929
    %v3254 = vunpack.c.h.b16 %v929
    %v3255 = vunpack.c.l.b16 %v930
    %v3256 = vunpack.c.h.b16 %v930
    %v3257 = vpack.c.b16 %v1725, %v1721
    %v3258 = vpack.c.b16 %v1726, %v1722
    %v3259 = vpack.c.b16 %v1727, %v1723
    %v3260 = vpack.c.b16 %v1728, %v1724
    %v3261 = vpack.c.b16 %v1733, %v1729
    %v3262 = vpack.c.b16 %v1734, %v1730
    %v3263 = vpack.c.b16 %v1735, %v1731
    %v3264 = vpack.c.b16 %v1736, %v1732
    %v3265 = vpack.c.b16 %v1741, %v1737
    %v3266 = vpack.c.b16 %v1742, %v1738
    %v3267 = vpack.c.b16 %v1743, %v1739
    %v3268 = vpack.c.b16 %v1744, %v1740
    %v3269 = vpack.c.b16 %v1749, %v1745
    %v3270 = vpack.c.b16 %v1750, %v1746
    %v3271 = vpack.c.b16 %v1751, %v1747
    %v3272 = vpack.c.b16 %v1752, %v1748
    %v3273 = vpack.c.b16 %v1757, %v1753
    %v3274 = vpack.c.b16 %v1758, %v1754
    %v3275 = vpack.c.b16 %v1759, %v1755
    %v3276 = vpack.c.b16 %v1760, %v1756
    %v3277 = vpack.c.b16 %v1765, %v1761
    %v3278 = vpack.c.b16 %v1766, %v1762
    %v3279 = vpack.c.b16 %v1767, %v1763
    %v3280 = vpack.c.b16 %v1768, %v1764
    %v3281 = vpack.c.b16 %v1773, %v1769
    %v3282 = vpack.c.b16 %v1774, %v1770
    %v3283 = vpack.c.b16 %v1775, %v1771
    %v3284 = vpack.c.b16 %v1776, %v1772
    %v3285 = vpack.c.b16 %v1781, %v1777
    %v3286 = vpack.c.b16 %v1782, %v1778
    %v3287 = vpack.c.b16 %v1783, %v1779
    %v3288 = vpack.c.b16 %v1784, %v1780
    %v3289 = vpack.c.b16 %v1789, %v1785
    %v3290 = vpack.c.b16 %v1790, %v1786
    %v3291 = vpack.c.b16 %v1791, %v1787
    %v3292 = vpack.c.b16 %v1792, %v1788
    %v3293 = vpack.c.b16 %v1797, %v1793
    %v3294 = vpack.c.b16 %v1798, %v1794
    %v3295 = vpack.c.b16 %v1799, %v1795
    %v3296 = vpack.c.b16 %v1800, %v1796
    %v3297 = vpack.c.b16 %v1805, %v1801
    %v3298 = vpack.c.b16 %v1806, %v1802
    %v3299 = vpack.c.b16 %v1807, %v1803
    %v3300 = vpack.c.b16 %v1808, %v1804
    %v3301 = vpack.c.b16 %v1813, %v1809
    %v3302 = vpack.c.b16 %v1814, %v1810
    %v3303 = vpack.c.b16 %v1815, %v1811
    %v3304 = vpack.c.b16 %v1816, %v1812
    %v3305 = vpack.c.b16 %v1821, %v1817
    %v3306 = vpack.c.b16 %v1822, %v1818
    %v3307 = vpack.c.b16 %v1823, %v1819
    %v3308 = vpack.c.b16 %v1824, %v1820
    %v3309 = vpack.c.b16 %v1829, %v1825
    %v3310 = vpack.c.b16 %v1830, %v1826
    %v3311 = vpack.c.b16 %v1831, %v1827
    %v3312 = vpack.c.b16 %v1832, %v1828
    %v3313 = vpack.c.b16 %v1837, %v1833
    %v3314 = vpack.c.b16 %v1838, %v1834
    %v3315 = vpack.c.b16 %v1839, %v1835
    %v3316 = vpack.c.b16 %v1840, %v1836
    %v3317 = vpack.c.b16 %v1845, %v1841
    %v3318 = vpack.c.b16 %v1846, %v1842
    %v3319 = vpack.c.b16 %v1847, %v1843
    %v3320 = vpack.c.b16 %v1848, %v1844
    %v3321 = vpack.c.b16 %v1853, %v1849
    %v3322 = vpack.c.b16 %v1854, %v1850
    %v3323 = vpack.c.b16 %v1855, %v1851
    %v3324 = vpack.c.b16 %v1856, %v1852
    %v3325 = vpack.c.b16 %v1861, %v1857
    %v3326 = vpack.c.b16 %v1862, %v1858
    %v3327 = vpack.c.b16 %v1863, %v1859
    %v3328 = vpack.c.b16 %v1864, %v1860
    %v3329 = vpack.c.b16 %v1869, %v1865
    %v3330 = vpack.c.b16 %v1870, %v1866
    %v3331 = vpack.c.b16 %v1871, %v1867
    %v3332 = vpack.c.b16 %v1872, %v1868
    %v3333 = vpack.c.b16 %v1877, %v1873
    %v3334 = vpack.c.b16 %v1878, %v1874
    %v3335 = vpack.c.b16 %v1879, %v1875
    %v3336 = vpack.c.b16 %v1880, %v1876
    %v3337 = vpack.c.b16 %v1885, %v1881
    %v3338 = vpack.c.b16 %v1886, %v1882
    %v3339 = vpack.c.b16 %v1887, %v1883
    %v3340 = vpack.c.b16 %v1888, %v1884
    %v3341 = vpack.c.b16 %v1893, %v1889
    %v3342 = vpack.c.b16 %v1894, %v1890
    %v3343 = vpack.c.b16 %v1895, %v1891
    %v3344 = vpack.c.b16 %v1896, %v1892
    %v3345 = vpack.c.b16 %v1901, %v1897
    %v3346 = vpack.c.b16 %v1902, %v1898
    %v3347 = vpack.c.b16 %v1903, %v1899
    %v3348 = vpack.c.b16 %v1904, %v1900
    %v3349 = vpack.c.b16 %v1909, %v1905
    %v3350 = vpack.c.b16 %v1910, %v1906
    %v3351 = vpack.c.b16 %v1911, %v1907
    %v3352 = vpack.c.b16 %v1912, %v1908
    %v3353 = vpack.c.b16 %v1917, %v1913
    %v3354 = vpack.c.b16 %v1918, %v1914
    %v3355 = vpack.c.b16 %v1919, %v1915
    %v3356 = vpack.c.b16 %v1920, %v1916
    %v3357 = vpack.c.b16 %v1925, %v1921
    %v3358 = vpack.c.b16 %v1926, %v1922
    %v3359 = vpack.c.b16 %v1927, %v1923
    %v3360 = vpack.c.b16 %v1928, %v1924
    %v3361 = vpack.c.b16 %v1933, %v1929
    %v3362 = vpack.c.b16 %v1934, %v1930
    %v3363 = vpack.c.b16 %v1935, %v1931
    %v3364 = vpack.c.b16 %v1936, %v1932
    %v3365 = vpack.c.b16 %v1941, %v1937
    %v3366 = vpack.c.b16 %v1942, %v1938
    %v3367 = vpack.c.b16 %v1943, %v1939
    %v3368 = vpack.c.b16 %v1944, %v1940
    %v3369 = vpack.c.b16 %v1949, %v1945
    %v3370 = vpack.c.b16 %v1950, %v1946
    %v3371 = vpack.c.b16 %v1951, %v1947
    %v3372 = vpack.c.b16 %v1952, %v1948
    %v3373 = vpack.c.b16 %v1957, %v1953
    %v3374 = vpack.c.b16 %v1958, %v1954
    %v3375 = vpack.c.b16 %v1959, %v1955
    %v3376 = vpack.c.b16 %v1960, %v1956
    %v3377 = vpack.c.b16 %v1965, %v1961
    %v3378 = vpack.c.b16 %v1966, %v1962
    %v3379 = vpack.c.b16 %v1967, %v1963
    %v3380 = vpack.c.b16 %v1968, %v1964
    %v3381 = vpack.c.b16 %v1973, %v1969
    %v3382 = vpack.c.b16 %v1974, %v1970
    %v3383 = vpack.c.b16 %v1975, %v1971
    %v3384 = vpack.c.b16 %v1976, %v1972
    %v3385 = vpack.c.b16 %v1981, %v1977
    %v3386 = vpack.c.b16 %v1982, %v1978
    %v3387 = vpack.c.b16 %v1983, %v1979
    %v3388 = vpack.c.b16 %v1984, %v1980
    %v3389 = vpack.c.b16 %v1989, %v1985
    %v3390 = vpack.c.b16 %v1990, %v1986
    %v3391 = vpack.c.b16 %v1991, %v1987
    %v3392 = vpack.c.b16 %v1992, %v1988
    %v3393 = vpack.c.b16 %v1997, %v1993
    %v3394 = vpack.c.b16 %v1998, %v1994
    %v3395 = vpack.c.b16 %v1999, %v1995
    %v3396 = vpack.c.b16 %v2000, %v1996
    %v3397 = vpack.c.b16 %v2005, %v2001
    %v3398 = vpack.c.b16 %v2006, %v2002
    %v3399 = vpack.c.b16 %v2007, %v2003
    %v3400 = vpack.c.b16 %v2008, %v2004
    %v3401 = vpack.c.b16 %v2013, %v2009
    %v3402 = vpack.c.b16 %v2014, %v2010
    %v3403 = vpack.c.b16 %v2015, %v2011
    %v3404 = vpack.c.b16 %v2016, %v2012
    %v3405 = vpack.c.b16 %v2021, %v2017
    %v3406 = vpack.c.b16 %v2022, %v2018
    %v3407 = vpack.c.b16 %v2023, %v2019
    %v3408 = vpack.c.b16 %v2024, %v2020
    %v3409 = vpack.c.b16 %v2029, %v2025
    %v3410 = vpack.c.b16 %v2030, %v2026
    %v3411 = vpack.c.b16 %v2031, %v2027
    %v3412 = vpack.c.b16 %v2032, %v2028
    %v3413 = vpack.c.b16 %v2037, %v2033
    %v3414 = vpack.c.b16 %v2038, %v2034
    %v3415 = vpack.c.b16 %v2039, %v2035
    %v3416 = vpack.c.b16 %v2040, %v2036
    %v3417 = vpack.c.b16 %v2045, %v2041
    %v3418 = vpack.c.b16 %v2046, %v2042
    %v3419 = vpack.c.b16 %v2047, %v2043
    %v3420 = vpack.c.b16 %v2048, %v2044
    %v3421 = vpack.c.b16 %v2053, %v2049
    %v3422 = vpack.c.b16 %v2054, %v2050
    %v3423 = vpack.c.b16 %v2055, %v2051
    %v3424 = vpack.c.b16 %v2056, %v2052
    %v3425 = vpack.c.b16 %v2061, %v2057
    %v3426 = vpack.c.b16 %v2062, %v2058
    %v3427 = vpack.c.b16 %v2063, %v2059
    %v3428 = vpack.c.b16 %v2064, %v2060
    %v3429 = vpack.c.b16 %v2069, %v2065
    %v3430 = vpack.c.b16 %v2070, %v2066
    %v3431 = vpack.c.b16 %v2071, %v2067
    %v3432 = vpack.c.b16 %v2072, %v2068
    %v3433 = vpack.c.b16 %v2077, %v2073
    %v3434 = vpack.c.b16 %v2078, %v2074
    %v3435 = vpack.c.b16 %v2079, %v2075
    %v3436 = vpack.c.b16 %v2080, %v2076
    %v3437 = vpack.c.b16 %v2085, %v2081
    %v3438 = vpack.c.b16 %v2086, %v2082
    %v3439 = vpack.c.b16 %v2087, %v2083
    %v3440 = vpack.c.b16 %v2088, %v2084
    %v3441 = vpack.c.b16 %v2093, %v2089
    %v3442 = vpack.c.b16 %v2094, %v2090
    %v3443 = vpack.c.b16 %v2095, %v2091
    %v3444 = vpack.c.b16 %v2096, %v2092
    %v3445 = vpack.c.b16 %v2101, %v2097
    %v3446 = vpack.c.b16 %v2102, %v2098
    %v3447 = vpack.c.b16 %v2103, %v2099
    %v3448 = vpack.c.b16 %v2104, %v2100
    %v3449 = vpack.c.b16 %v2109, %v2105
    %v3450 = vpack.c.b16 %v2110, %v2106
    %v3451 = vpack.c.b16 %v2111, %v2107
    %v3452 = vpack.c.b16 %v2112, %v2108
    %v3453 = vpack.c.b16 %v2117, %v2113
    %v3454 = vpack.c.b16 %v2118, %v2114
    %v3455 = vpack.c.b16 %v2119, %v2115
    %v3456 = vpack.c.b16 %v2120, %v2116
    %v3457 = vpack.c.b16 %v2125, %v2121
    %v3458 = vpack.c.b16 %v2126, %v2122
    %v3459 = vpack.c.b16 %v2127, %v2123
    %v3460 = vpack.c.b16 %v2128, %v2124
    %v3461 = vpack.c.b16 %v2133, %v2129
    %v3462 = vpack.c.b16 %v2134, %v2130
    %v3463 = vpack.c.b16 %v2135, %v2131
    %v3464 = vpack.c.b16 %v2136, %v2132
    %v3465 = vpack.c.b16 %v2141, %v2137
    %v3466 = vpack.c.b16 %v2142, %v2138
    %v3467 = vpack.c.b16 %v2143, %v2139
    %v3468 = vpack.c.b16 %v2144, %v2140
    %v3469 = vpack.c.b16 %v2149, %v2145
    %v3470 = vpack.c.b16 %v2150, %v2146
    %v3471 = vpack.c.b16 %v2151, %v2147
    %v3472 = vpack.c.b16 %v2152, %v2148
    %v3473 = vpack.c.b16 %v2157, %v2153
    %v3474 = vpack.c.b16 %v2158, %v2154
    %v3475 = vpack.c.b16 %v2159, %v2155
    %v3476 = vpack.c.b16 %v2160, %v2156
    %v3477 = vpack.c.b16 %v2165, %v2161
    %v3478 = vpack.c.b16 %v2166, %v2162
    %v3479 = vpack.c.b16 %v2167, %v2163
    %v3480 = vpack.c.b16 %v2168, %v2164
    %v3481 = vpack.c.b16 %v2173, %v2169
    %v3482 = vpack.c.b16 %v2174, %v2170
    %v3483 = vpack.c.b16 %v2175, %v2171
    %v3484 = vpack.c.b16 %v2176, %v2172
    %v3485 = vpack.c.b16 %v2181, %v2177
    %v3486 = vpack.c.b16 %v2182, %v2178
    %v3487 = vpack.c.b16 %v2183, %v2179
    %v3488 = vpack.c.b16 %v2184, %v2180
    %v3489 = vpack.c.b16 %v2189, %v2185
    %v3490 = vpack.c.b16 %v2190, %v2186
    %v3491 = vpack.c.b16 %v2191, %v2187
    %v3492 = vpack.c.b16 %v2192, %v2188
    %v3493 = vpack.c.b16 %v2197, %v2193
    %v3494 = vpack.c.b16 %v2198, %v2194
    %v3495 = vpack.c.b16 %v2199, %v2195
    %v3496 = vpack.c.b16 %v2200, %v2196
    %v3497 = vpack.c.b16 %v2205, %v2201
    %v3498 = vpack.c.b16 %v2206, %v2202
    %v3499 = vpack.c.b16 %v2207, %v2203
    %v3500 = vpack.c.b16 %v2208, %v2204
    %v3501 = vpack.c.b16 %v2213, %v2209
    %v3502 = vpack.c.b16 %v2214, %v2210
    %v3503 = vpack.c.b16 %v2215, %v2211
    %v3504 = vpack.c.b16 %v2216, %v2212
    %v3505 = vpack.c.b16 %v2221, %v2217
    %v3506 = vpack.c.b16 %v2222, %v2218
    %v3507 = vpack.c.b16 %v2223, %v2219
    %v3508 = vpack.c.b16 %v2224, %v2220
    %v3509 = vpack.c.b16 %v2229, %v2225
    %v3510 = vpack.c.b16 %v2230, %v2226
    %v3511 = vpack.c.b16 %v2231, %v2227
    %v3512 = vpack.c.b16 %v2232, %v2228
    %v3513 = vpack.c.b16 %v2237, %v2233
    %v3514 = vpack.c.b16 %v2238, %v2234
    %v3515 = vpack.c.b16 %v2239, %v2235
    %v3516 = vpack.c.b16 %v2240, %v2236
    %v3517 = vpack.c.b16 %v2245, %v2241
    %v3518 = vpack.c.b16 %v2246, %v2242
    %v3519 = vpack.c.b16 %v2247, %v2243
    %v3520 = vpack.c.b16 %v2248, %v2244
    %v3521 = vpack.c.b16 %v2253, %v2249
    %v3522 = vpack.c.b16 %v2254, %v2250
    %v3523 = vpack.c.b16 %v2255, %v2251
    %v3524 = vpack.c.b16 %v2256, %v2252
    %v3525 = vpack.c.b16 %v2261, %v2257
    %v3526 = vpack.c.b16 %v2262, %v2258
    %v3527 = vpack.c.b16 %v2263, %v2259
    %v3528 = vpack.c.b16 %v2264, %v2260
    %v3529 = vpack.c.b16 %v2269, %v2265
    %v3530 = vpack.c.b16 %v2270, %v2266
    %v3531 = vpack.c.b16 %v2271, %v2267
    %v3532 = vpack.c.b16 %v2272, %v2268
    %v3533 = vpack.c.b16 %v2277, %v2273
    %v3534 = vpack.c.b16 %v2278, %v2274
    %v3535 = vpack.c.b16 %v2279, %v2275
    %v3536 = vpack.c.b16 %v2280, %v2276
    %v3537 = vpack.c.b16 %v2285, %v2281
    %v3538 = vpack.c.b16 %v2286, %v2282
    %v3539 = vpack.c.b16 %v2287, %v2283
    %v3540 = vpack.c.b16 %v2288, %v2284
    %v3541 = vpack.c.b16 %v2293, %v2289
    %v3542 = vpack.c.b16 %v2294, %v2290
    %v3543 = vpack.c.b16 %v2295, %v2291
    %v3544 = vpack.c.b16 %v2296, %v2292
    %v3545 = vpack.c.b16 %v2301, %v2297
    %v3546 = vpack.c.b16 %v2302, %v2298
    %v3547 = vpack.c.b16 %v2303, %v2299
    %v3548 = vpack.c.b16 %v2304, %v2300
    %v3549 = vpack.c.b16 %v2309, %v2305
    %v3550 = vpack.c.b16 %v2310, %v2306
    %v3551 = vpack.c.b16 %v2311, %v2307
    %v3552 = vpack.c.b16 %v2312, %v2308
    %v3553 = vpack.c.b16 %v2317, %v2313
    %v3554 = vpack.c.b16 %v2318, %v2314
    %v3555 = vpack.c.b16 %v2319, %v2315
    %v3556 = vpack.c.b16 %v2320, %v2316
    %v3557 = vpack.c.b16 %v2325, %v2321
    %v3558 = vpack.c.b16 %v2326, %v2322
    %v3559 = vpack.c.b16 %v2327, %v2323
    %v3560 = vpack.c.b16 %v2328, %v2324
    %v3561 = vpack.c.b16 %v2333, %v2329
    %v3562 = vpack.c.b16 %v2334, %v2330
    %v3563 = vpack.c.b16 %v2335, %v2331
    %v3564 = vpack.c.b16 %v2336, %v2332
    %v3565 = vpack.c.b16 %v2341, %v2337
    %v3566 = vpack.c.b16 %v2342, %v2338
    %v3567 = vpack.c.b16 %v2343, %v2339
    %v3568 = vpack.c.b16 %v2344, %v2340
    %v3569 = vpack.c.b16 %v2349, %v2345
    %v3570 = vpack.c.b16 %v2350, %v2346
    %v3571 = vpack.c.b16 %v2351, %v2347
    %v3572 = vpack.c.b16 %v2352, %v2348
    %v3573 = vpack.c.b16 %v2357, %v2353
    %v3574 = vpack.c.b16 %v2358, %v2354
    %v3575 = vpack.c.b16 %v2359, %v2355
    %v3576 = vpack.c.b16 %v2360, %v2356
    %v3577 = vpack.c.b16 %v2365, %v2361
    %v3578 = vpack.c.b16 %v2366, %v2362
    %v3579 = vpack.c.b16 %v2367, %v2363
    %v3580 = vpack.c.b16 %v2368, %v2364
    %v3581 = vpack.c.b16 %v2373, %v2369
    %v3582 = vpack.c.b16 %v2374, %v2370
    %v3583 = vpack.c.b16 %v2375, %v2371
    %v3584 = vpack.c.b16 %v2376, %v2372
    %v3585 = vpack.c.b16 %v2381, %v2377
    %v3586 = vpack.c.b16 %v2382, %v2378
    %v3587 = vpack.c.b16 %v2383, %v2379
    %v3588 = vpack.c.b16 %v2384, %v2380
    %v3589 = vpack.c.b16 %v2389, %v2385
    %v3590 = vpack.c.b16 %v2390, %v2386
    %v3591 = vpack.c.b16 %v2391, %v2387
    %v3592 = vpack.c.b16 %v2392, %v2388
    %v3593 = vpack.c.b16 %v2397, %v2393
    %v3594 = vpack.c.b16 %v2398, %v2394
    %v3595 = vpack.c.b16 %v2399, %v2395
    %v3596 = vpack.c.b16 %v2400, %v2396
    %v3597 = vpack.c.b16 %v2405, %v2401
    %v3598 = vpack.c.b16 %v2406, %v2402
    %v3599 = vpack.c.b16 %v2407, %v2403
    %v3600 = vpack.c.b16 %v2408, %v2404
    %v3601 = vpack.c.b16 %v2413, %v2409
    %v3602 = vpack.c.b16 %v2414, %v2410
    %v3603 = vpack.c.b16 %v2415, %v2411
    %v3604 = vpack.c.b16 %v2416, %v2412
    %v3605 = vpack.c.b16 %v2421, %v2417
    %v3606 = vpack.c.b16 %v2422, %v2418
    %v3607 = vpack.c.b16 %v2423, %v2419
    %v3608 = vpack.c.b16 %v2424, %v2420
    %v3609 = vpack.c.b16 %v2429, %v2425
    %v3610 = vpack.c.b16 %v2430, %v2426
    %v3611 = vpack.c.b16 %v2431, %v2427
    %v3612 = vpack.c.b16 %v2432, %v2428
    %v3613 = vpack.c.b16 %v2437, %v2433
    %v3614 = vpack.c.b16 %v2438, %v2434
    %v3615 = vpack.c.b16 %v2439, %v2435
    %v3616 = vpack.c.b16 %v2440, %v2436
    %v3617 = vpack.c.b16 %v2445, %v2441
    %v3618 = vpack.c.b16 %v2446, %v2442
    %v3619 = vpack.c.b16 %v2447, %v2443
    %v3620 = vpack.c.b16 %v2448, %v2444
    %v3621 = vpack.c.b16 %v2453, %v2449
    %v3622 = vpack.c.b16 %v2454, %v2450
    %v3623 = vpack.c.b16 %v2455, %v2451
    %v3624 = vpack.c.b16 %v2456, %v2452
    %v3625 = vpack.c.b16 %v2461, %v2457
    %v3626 = vpack.c.b16 %v2462, %v2458
    %v3627 = vpack.c.b16 %v2463, %v2459
    %v3628 = vpack.c.b16 %v2464, %v2460
    %v3629 = vpack.c.b16 %v2469, %v2465
    %v3630 = vpack.c.b16 %v2470, %v2466
    %v3631 = vpack.c.b16 %v2471, %v2467
    %v3632 = vpack.c.b16 %v2472, %v2468
    %v3633 = vpack.c.b16 %v2477, %v2473
    %v3634 = vpack.c.b16 %v2478, %v2474
    %v3635 = vpack.c.b16 %v2479, %v2475
    %v3636 = vpack.c.b16 %v2480, %v2476
    %v3637 = vpack.c.b16 %v2485, %v2481
    %v3638 = vpack.c.b16 %v2486, %v2482
    %v3639 = vpack.c.b16 %v2487, %v2483
    %v3640 = vpack.c.b16 %v2488, %v2484
    %v3641 = vpack.c.b16 %v2493, %v2489
    %v3642 = vpack.c.b16 %v2494, %v2490
    %v3643 = vpack.c.b16 %v2495, %v2491
    %v3644 = vpack.c.b16 %v2496, %v2492
    %v3645 = vpack.c.b16 %v2501, %v2497
    %v3646 = vpack.c.b16 %v2502, %v2498
    %v3647 = vpack.c.b16 %v2503, %v2499
    %v3648 = vpack.c.b16 %v2504, %v2500
    %v3649 = vpack.c.b16 %v2509, %v2505
    %v3650 = vpack.c.b16 %v2510, %v2506
    %v3651 = vpack.c.b16 %v2511, %v2507
    %v3652 = vpack.c.b16 %v2512, %v2508
    %v3653 = vpack.c.b16 %v2517, %v2513
    %v3654 = vpack.c.b16 %v2518, %v2514
    %v3655 = vpack.c.b16 %v2519, %v2515
    %v3656 = vpack.c.b16 %v2520, %v2516
    %v3657 = vpack.c.b16 %v2525, %v2521
    %v3658 = vpack.c.b16 %v2526, %v2522
    %v3659 = vpack.c.b16 %v2527, %v2523
    %v3660 = vpack.c.b16 %v2528, %v2524
    %v3661 = vpack.c.b16 %v2533, %v2529
    %v3662 = vpack.c.b16 %v2534, %v2530
    %v3663 = vpack.c.b16 %v2535, %v2531
    %v3664 = vpack.c.b16 %v2536, %v2532
    %v3665 = vpack.c.b16 %v2541, %v2537
    %v3666 = vpack.c.b16 %v2542, %v2538
    %v3667 = vpack.c.b16 %v2543, %v2539
    %v3668 = vpack.c.b16 %v2544, %v2540
    %v3669 = vpack.c.b16 %v2549, %v2545
    %v3670 = vpack.c.b16 %v2550, %v2546
    %v3671 = vpack.c.b16 %v2551, %v2547
    %v3672 = vpack.c.b16 %v2552, %v2548
    %v3673 = vpack.c.b16 %v2557, %v2553
    %v3674 = vpack.c.b16 %v2558, %v2554
    %v3675 = vpack.c.b16 %v2559, %v2555
    %v3676 = vpack.c.b16 %v2560, %v2556
    %v3677 = vpack.c.b16 %v2565, %v2561
    %v3678 = vpack.c.b16 %v2566, %v2562
    %v3679 = vpack.c.b16 %v2567, %v2563
    %v3680 = vpack.c.b16 %v2568, %v2564
    %v3681 = vpack.c.b16 %v2573, %v2569
    %v3682 = vpack.c.b16 %v2574, %v2570
    %v3683 = vpack.c.b16 %v2575, %v2571
    %v3684 = vpack.c.b16 %v2576, %v2572
    %v3685 = vpack.c.b16 %v2581, %v2577
    %v3686 = vpack.c.b16 %v2582, %v2578
    %v3687 = vpack.c.b16 %v2583, %v2579
    %v3688 = vpack.c.b16 %v2584, %v2580
    %v3689 = vpack.c.b16 %v2589, %v2585
    %v3690 = vpack.c.b16 %v2590, %v2586
    %v3691 = vpack.c.b16 %v2591, %v2587
    %v3692 = vpack.c.b16 %v2592, %v2588
    %v3693 = vpack.c.b16 %v2597, %v2593
    %v3694 = vpack.c.b16 %v2598, %v2594
    %v3695 = vpack.c.b16 %v2599, %v2595
    %v3696 = vpack.c.b16 %v2600, %v2596
    %v3697 = vpack.c.b16 %v2605, %v2601
    %v3698 = vpack.c.b16 %v2606, %v2602
    %v3699 = vpack.c.b16 %v2607, %v2603
    %v3700 = vpack.c.b16 %v2608, %v2604
    %v3701 = vpack.c.b16 %v2613, %v2609
    %v3702 = vpack.c.b16 %v2614, %v2610
    %v3703 = vpack.c.b16 %v2615, %v2611
    %v3704 = vpack.c.b16 %v2616, %v2612
    %v3705 = vpack.c.b16 %v2621, %v2617
    %v3706 = vpack.c.b16 %v2622, %v2618
    %v3707 = vpack.c.b16 %v2623, %v2619
    %v3708 = vpack.c.b16 %v2624, %v2620
    %v3709 = vpack.c.b16 %v2629, %v2625
    %v3710 = vpack.c.b16 %v2630, %v2626
    %v3711 = vpack.c.b16 %v2631, %v2627
    %v3712 = vpack.c.b16 %v2632, %v2628
    %v3713 = vpack.c.b16 %v2637, %v2633
    %v3714 = vpack.c.b16 %v2638, %v2634
    %v3715 = vpack.c.b16 %v2639, %v2635
    %v3716 = vpack.c.b16 %v2640, %v2636
    %v3717 = vpack.c.b16 %v2645, %v2641
    %v3718 = vpack.c.b16 %v2646, %v2642
    %v3719 = vpack.c.b16 %v2647, %v2643
    %v3720 = vpack.c.b16 %v2648, %v2644
    %v3721 = vpack.c.b16 %v2653, %v2649
    %v3722 = vpack.c.b16 %v2654, %v2650
    %v3723 = vpack.c.b16 %v2655, %v2651
    %v3724 = vpack.c.b16 %v2656, %v2652
    %v3725 = vpack.c.b16 %v2661, %v2657
    %v3726 = vpack.c.b16 %v2662, %v2658
    %v3727 = vpack.c.b16 %v2663, %v2659
    %v3728 = vpack.c.b16 %v2664, %v2660
    %v3729 = vpack.c.b16 %v2669, %v2665
    %v3730 = vpack.c.b16 %v2670, %v2666
    %v3731 = vpack.c.b16 %v2671, %v2667
    %v3732 = vpack.c.b16 %v2672, %v2668
    %v3733 = vpack.c.b16 %v2677, %v2673
    %v3734 = vpack.c.b16 %v2678, %v2674
    %v3735 = vpack.c.b16 %v2679, %v2675
    %v3736 = vpack.c.b16 %v2680, %v2676
    %v3737 = vpack.c.b16 %v2685, %v2681
    %v3738 = vpack.c.b16 %v2686, %v2682
    %v3739 = vpack.c.b16 %v2687, %v2683
    %v3740 = vpack.c.b16 %v2688, %v2684
    %v3741 = vpack.c.b16 %v2693, %v2689
    %v3742 = vpack.c.b16 %v2694, %v2690
    %v3743 = vpack.c.b16 %v2695, %v2691
    %v3744 = vpack.c.b16 %v2696, %v2692
    %v3745 = vpack.c.b16 %v2701, %v2697
    %v3746 = vpack.c.b16 %v2702, %v2698
    %v3747 = vpack.c.b16 %v2703, %v2699
    %v3748 = vpack.c.b16 %v2704, %v2700
    %v3749 = vpack.c.b16 %v2709, %v2705
    %v3750 = vpack.c.b16 %v2710, %v2706
    %v3751 = vpack.c.b16 %v2711, %v2707
    %v3752 = vpack.c.b16 %v2712, %v2708
    %v3753 = vpack.c.b16 %v2717, %v2713
    %v3754 = vpack.c.b16 %v2718, %v2714
    %v3755 = vpack.c.b16 %v2719, %v2715
    %v3756 = vpack.c.b16 %v2720, %v2716
    %v3757 = vpack.c.b16 %v2725, %v2721
    %v3758 = vpack.c.b16 %v2726, %v2722
    %v3759 = vpack.c.b16 %v2727, %v2723
    %v3760 = vpack.c.b16 %v2728, %v2724
    %v3761 = vpack.c.b16 %v2733, %v2729
    %v3762 = vpack.c.b16 %v2734, %v2730
    %v3763 = vpack.c.b16 %v2735, %v2731
    %v3764 = vpack.c.b16 %v2736, %v2732
    %v3765 = vpack.c.b16 %v2741, %v2737
    %v3766 = vpack.c.b16 %v2742, %v2738
    %v3767 = vpack.c.b16 %v2743, %v2739
    %v3768 = vpack.c.b16 %v2744, %v2740
    %v3769 = vpack.c.b16 %v2749, %v2745
    %v3770 = vpack.c.b16 %v2750, %v2746
    %v3771 = vpack.c.b16 %v2751, %v2747
    %v3772 = vpack.c.b16 %v2752, %v2748
    %v3773 = vpack.c.b16 %v2757, %v2753
    %v3774 = vpack.c.b16 %v2758, %v2754
    %v3775 = vpack.c.b16 %v2759, %v2755
    %v3776 = vpack.c.b16 %v2760, %v2756
    %v3777 = vpack.c.b16 %v2765, %v2761
    %v3778 = vpack.c.b16 %v2766, %v2762
    %v3779 = vpack.c.b16 %v2767, %v2763
    %v3780 = vpack.c.b16 %v2768, %v2764
    %v3781 = vpack.c.b16 %v2773, %v2769
    %v3782 = vpack.c.b16 %v2774, %v2770
    %v3783 = vpack.c.b16 %v2775, %v2771
    %v3784 = vpack.c.b16 %v2776, %v2772
    %v3785 = vpack.c.b16 %v2781, %v2777
    %v3786 = vpack.c.b16 %v2782, %v2778
    %v3787 = vpack.c.b16 %v2783, %v2779
    %v3788 = vpack.c.b16 %v2784, %v2780
    %v3789 = vpack.c.b16 %v2789, %v2785
    %v3790 = vpack.c.b16 %v2790, %v2786
    %v3791 = vpack.c.b16 %v2791, %v2787
    %v3792 = vpack.c.b16 %v2792, %v2788
    %v3793 = vpack.c.b16 %v2797, %v2793
    %v3794 = vpack.c.b16 %v2798, %v2794
    %v3795 = vpack.c.b16 %v2799, %v2795
    %v3796 = vpack.c.b16 %v2800, %v2796
    %v3797 = vpack.c.b16 %v2805, %v2801
    %v3798 = vpack.c.b16 %v2806, %v2802
    %v3799 = vpack.c.b16 %v2807, %v2803
    %v3800 = vpack.c.b16 %v2808, %v2804
    %v3801 = vpack.c.b16 %v2813, %v2809
    %v3802 = vpack.c.b16 %v2814, %v2810
    %v3803 = vpack.c.b16 %v2815, %v2811
    %v3804 = vpack.c.b16 %v2816, %v2812
    %v3805 = vpack.c.b16 %v2821, %v2817
    %v3806 = vpack.c.b16 %v2822, %v2818
    %v3807 = vpack.c.b16 %v2823, %v2819
    %v3808 = vpack.c.b16 %v2824, %v2820
    %v3809 = vpack.c.b16 %v2829, %v2825
    %v3810 = vpack.c.b16 %v2830, %v2826
    %v3811 = vpack.c.b16 %v2831, %v2827
    %v3812 = vpack.c.b16 %v2832, %v2828
    %v3813 = vpack.c.b16 %v2837, %v2833
    %v3814 = vpack.c.b16 %v2838, %v2834
    %v3815 = vpack.c.b16 %v2839, %v2835
    %v3816 = vpack.c.b16 %v2840, %v2836
    %v3817 = vpack.c.b16 %v2845, %v2841
    %v3818 = vpack.c.b16 %v2846, %v2842
    %v3819 = vpack.c.b16 %v2847, %v2843
    %v3820 = vpack.c.b16 %v2848, %v2844
    %v3821 = vpack.c.b16 %v2853, %v2849
    %v3822 = vpack.c.b16 %v2854, %v2850
    %v3823 = vpack.c.b16 %v2855, %v2851
    %v3824 = vpack.c.b16 %v2856, %v2852
    %v3825 = vpack.c.b16 %v2861, %v2857
    %v3826 = vpack.c.b16 %v2862, %v2858
    %v3827 = vpack.c.b16 %v2863, %v2859
    %v3828 = vpack.c.b16 %v2864, %v2860
    %v3829 = vpack.c.b16 %v2869, %v2865
    %v3830 = vpack.c.b16 %v2870, %v2866
    %v3831 = vpack.c.b16 %v2871, %v2867
    %v3832 = vpack.c.b16 %v2872, %v2868
    %v3833 = vpack.c.b16 %v2877, %v2873
    %v3834 = vpack.c.b16 %v2878, %v2874
    %v3835 = vpack.c.b16 %v2879, %v2875
    %v3836 = vpack.c.b16 %v2880, %v2876
    %v3837 = vpack.c.b16 %v2885, %v2881
    %v3838 = vpack.c.b16 %v2886, %v2882
    %v3839 = vpack.c.b16 %v2887, %v2883
    %v3840 = vpack.c.b16 %v2888, %v2884
    %v3841 = vpack.c.b16 %v2893, %v2889
    %v3842 = vpack.c.b16 %v2894, %v2890
    %v3843 = vpack.c.b16 %v2895, %v2891
    %v3844 = vpack.c.b16 %v2896, %v2892
    %v3845 = vpack.c.b16 %v2901, %v2897
    %v3846 = vpack.c.b16 %v2902, %v2898
    %v3847 = vpack.c.b16 %v2903, %v2899
    %v3848 = vpack.c.b16 %v2904, %v2900
    %v3849 = vpack.c.b16 %v2909, %v2905
    %v3850 = vpack.c.b16 %v2910, %v2906
    %v3851 = vpack.c.b16 %v2911, %v2907
    %v3852 = vpack.c.b16 %v2912, %v2908
    %v3853 = vpack.c.b16 %v2917, %v2913
    %v3854 = vpack.c.b16 %v2918, %v2914
    %v3855 = vpack.c.b16 %v2919, %v2915
    %v3856 = vpack.c.b16 %v2920, %v2916
    %v3857 = vpack.c.b16 %v2925, %v2921
    %v3858 = vpack.c.b16 %v2926, %v2922
    %v3859 = vpack.c.b16 %v2927, %v2923
    %v3860 = vpack.c.b16 %v2928, %v2924
    %v3861 = vpack.c.b16 %v2933, %v2929
    %v3862 = vpack.c.b16 %v2934, %v2930
    %v3863 = vpack.c.b16 %v2935, %v2931
    %v3864 = vpack.c.b16 %v2936, %v2932
    %v3865 = vpack.c.b16 %v2941, %v2937
    %v3866 = vpack.c.b16 %v2942, %v2938
    %v3867 = vpack.c.b16 %v2943, %v2939
    %v3868 = vpack.c.b16 %v2944, %v2940
    %v3869 = vpack.c.b16 %v2949, %v2945
    %v3870 = vpack.c.b16 %v2950, %v2946
    %v3871 = vpack.c.b16 %v2951, %v2947
    %v3872 = vpack.c.b16 %v2952, %v2948
    %v3873 = vpack.c.b16 %v2957, %v2953
    %v3874 = vpack.c.b16 %v2958, %v2954
    %v3875 = vpack.c.b16 %v2959, %v2955
    %v3876 = vpack.c.b16 %v2960, %v2956
    %v3877 = vpack.c.b16 %v2965, %v2961
    %v3878 = vpack.c.b16 %v2966, %v2962
    %v3879 = vpack.c.b16 %v2967, %v2963
    %v3880 = vpack.c.b16 %v2968, %v2964
    %v3881 = vpack.c.b16 %v2973, %v2969
    %v3882 = vpack.c.b16 %v2974, %v2970
    %v3883 = vpack.c.b16 %v2975, %v2971
    %v3884 = vpack.c.b16 %v2976, %v2972
    %v3885 = vpack.c.b16 %v2981, %v2977
    %v3886 = vpack.c.b16 %v2982, %v2978
    %v3887 = vpack.c.b16 %v2983, %v2979
    %v3888 = vpack.c.b16 %v2984, %v2980
    %v3889 = vpack.c.b16 %v2989, %v2985
    %v3890 = vpack.c.b16 %v2990, %v2986
    %v3891 = vpack.c.b16 %v2991, %v2987
    %v3892 = vpack.c.b16 %v2992, %v2988
    %v3893 = vpack.c.b16 %v2997, %v2993
    %v3894 = vpack.c.b16 %v2998, %v2994
    %v3895 = vpack.c.b16 %v2999, %v2995
    %v3896 = vpack.c.b16 %v3000, %v2996
    %v3897 = vpack.c.b16 %v3005, %v3001
    %v3898 = vpack.c.b16 %v3006, %v3002
    %v3899 = vpack.c.b16 %v3007, %v3003
    %v3900 = vpack.c.b16 %v3008, %v3004
    %v3901 = vpack.c.b16 %v3013, %v3009
    %v3902 = vpack.c.b16 %v3014, %v3010
    %v3903 = vpack.c.b16 %v3015, %v3011
    %v3904 = vpack.c.b16 %v3016, %v3012
    %v3905 = vpack.c.b16 %v3021, %v3017
    %v3906 = vpack.c.b16 %v3022, %v3018
    %v3907 = vpack.c.b16 %v3023, %v3019
    %v3908 = vpack.c.b16 %v3024, %v3020
    %v3909 = vpack.c.b16 %v3029, %v3025
    %v3910 = vpack.c.b16 %v3030, %v3026
    %v3911 = vpack.c.b16 %v3031, %v3027
    %v3912 = vpack.c.b16 %v3032, %v3028
    %v3913 = vpack.c.b16 %v3037, %v3033
    %v3914 = vpack.c.b16 %v3038, %v3034
    %v3915 = vpack.c.b16 %v3039, %v3035
    %v3916 = vpack.c.b16 %v3040, %v3036
    %v3917 = vpack.c.b16 %v3045, %v3041
    %v3918 = vpack.c.b16 %v3046, %v3042
    %v3919 = vpack.c.b16 %v3047, %v3043
    %v3920 = vpack.c.b16 %v3048, %v3044
    %v3921 = vpack.c.b16 %v3053, %v3049
    %v3922 = vpack.c.b16 %v3054, %v3050
    %v3923 = vpack.c.b16 %v3055, %v3051
    %v3924 = vpack.c.b16 %v3056, %v3052
    %v3925 = vpack.c.b16 %v3061, %v3057
    %v3926 = vpack.c.b16 %v3062, %v3058
    %v3927 = vpack.c.b16 %v3063, %v3059
    %v3928 = vpack.c.b16 %v3064, %v3060
    %v3929 = vpack.c.b16 %v3069, %v3065
    %v3930 = vpack.c.b16 %v3070, %v3066
    %v3931 = vpack.c.b16 %v3071, %v3067
    %v3932 = vpack.c.b16 %v3072, %v3068
    %v3933 = vpack.c.b16 %v3077, %v3073
    %v3934 = vpack.c.b16 %v3078, %v3074
    %v3935 = vpack.c.b16 %v3079, %v3075
    %v3936 = vpack.c.b16 %v3080, %v3076
    %v3937 = vpack.c.b16 %v3085, %v3081
    %v3938 = vpack.c.b16 %v3086, %v3082
    %v3939 = vpack.c.b16 %v3087, %v3083
    %v3940 = vpack.c.b16 %v3088, %v3084
    %v3941 = vpack.c.b16 %v3093, %v3089
    %v3942 = vpack.c.b16 %v3094, %v3090
    %v3943 = vpack.c.b16 %v3095, %v3091
    %v3944 = vpack.c.b16 %v3096, %v3092
    %v3945 = vpack.c.b16 %v3101, %v3097
    %v3946 = vpack.c.b16 %v3102, %v3098
    %v3947 = vpack.c.b16 %v3103, %v3099
    %v3948 = vpack.c.b16 %v3104, %v3100
    %v3949 = vpack.c.b16 %v3109, %v3105
    %v3950 = vpack.c.b16 %v3110, %v3106
    %v3951 = vpack.c.b16 %v3111, %v3107
    %v3952 = vpack.c.b16 %v3112, %v3108
    %v3953 = vpack.c.b16 %v3117, %v3113
    %v3954 = vpack.c.b16 %v3118, %v3114
    %v3955 = vpack.c.b16 %v3119, %v3115
    %v3956 = vpack.c.b16 %v3120, %v3116
    %v3957 = vpack.c.b16 %v3125, %v3121
    %v3958 = vpack.c.b16 %v3126, %v3122
    %v3959 = vpack.c.b16 %v3127, %v3123
    %v3960 = vpack.c.b16 %v3128, %v3124
    %v3961 = vpack.c.b16 %v3133, %v3129
    %v3962 = vpack.c.b16 %v3134, %v3130
    %v3963 = vpack.c.b16 %v3135, %v3131
    %v3964 = vpack.c.b16 %v3136, %v3132
    %v3965 = vpack.c.b16 %v3141, %v3137
    %v3966 = vpack.c.b16 %v3142, %v3138
    %v3967 = vpack.c.b16 %v3143, %v3139
    %v3968 = vpack.c.b16 %v3144, %v3140
    %v3969 = vpack.c.b16 %v3149, %v3145
    %v3970 = vpack.c.b16 %v3150, %v3146
    %v3971 = vpack.c.b16 %v3151, %v3147
    %v3972 = vpack.c.b16 %v3152, %v3148
    %v3973 = vpack.c.b16 %v3157, %v3153
    %v3974 = vpack.c.b16 %v3158, %v3154
    %v3975 = vpack.c.b16 %v3159, %v3155
    %v3976 = vpack.c.b16 %v3160, %v3156
    %v3977 = vpack.c.b16 %v3165, %v3161
    %v3978 = vpack.c.b16 %v3166, %v3162
    %v3979 = vpack.c.b16 %v3167, %v3163
    %v3980 = vpack.c.b16 %v3168, %v3164
    %v3981 = vpack.c.b16 %v3173, %v3169
    %v3982 = vpack.c.b16 %v3174, %v3170
    %v3983 = vpack.c.b16 %v3175, %v3171
    %v3984 = vpack.c.b16 %v3176, %v3172
    %v3985 = vpack.c.b16 %v3181, %v3177
    %v3986 = vpack.c.b16 %v3182, %v3178
    %v3987 = vpack.c.b16 %v3183, %v3179
    %v3988 = vpack.c.b16 %v3184, %v3180
    %v3989 = vpack.c.b16 %v3189, %v3185
    %v3990 = vpack.c.b16 %v3190, %v3186
    %v3991 = vpack.c.b16 %v3191, %v3187
    %v3992 = vpack.c.b16 %v3192, %v3188
    %v3993 = vpack.c.b16 %v3197, %v3193
    %v3994 = vpack.c.b16 %v3198, %v3194
    %v3995 = vpack.c.b16 %v3199, %v3195
    %v3996 = vpack.c.b16 %v3200, %v3196
    %v3997 = vpack.c.b16 %v3205, %v3201
    %v3998 = vpack.c.b16 %v3206, %v3202
    %v3999 = vpack.c.b16 %v3207, %v3203
    %v4000 = vpack.c.b16 %v3208, %v3204
    %v4001 = vpack.c.b16 %v3213, %v3209
    %v4002 = vpack.c.b16 %v3214, %v3210
    %v4003 = vpack.c.b16 %v3215, %v3211
    %v4004 = vpack.c.b16 %v3216, %v3212
    %v4005 = vpack.c.b16 %v3221, %v3217
    %v4006 = vpack.c.b16 %v3222, %v3218
    %v4007 = vpack.c.b16 %v3223, %v3219
    %v4008 = vpack.c.b16 %v3224, %v3220
    %v4009 = vpack.c.b16 %v3229, %v3225
    %v4010 = vpack.c.b16 %v3230, %v3226
    %v4011 = vpack.c.b16 %v3231, %v3227
    %v4012 = vpack.c.b16 %v3232, %v3228
    %v4013 = vpack.c.b16 %v3237, %v3233
    %v4014 = vpack.c.b16 %v3238, %v3234
    %v4015 = vpack.c.b16 %v3239, %v3235
    %v4016 = vpack.c.b16 %v3240, %v3236
    %v4017 = vpack.c.b16 %v3245, %v3241
    %v4018 = vpack.c.b16 %v3246, %v3242
    %v4019 = vpack.c.b16 %v3247, %v3243
    %v4020 = vpack.c.b16 %v3248, %v3244
    %v4021 = vpack.c.b16 %v3253, %v3249
    %v4022 = vpack.c.b16 %v3254, %v3250
    %v4023 = vpack.c.b16 %v3255, %v3251
    %v4024 = vpack.c.b16 %v3256, %v3252
    %4793 = vmatprep.subr.bf16.mxu0 %v3286
    %4794 = vmatpush1.bf16.msra.mxu0 %v3285
    %4795 = vmatprep.subr.bf16.mxu0 %v3282
    %4796 = vmatpush1.bf16.msra.mxu0 %v3281
    %4797 = vmatprep.subr.bf16.mxu0 %v3278
    %4798 = vmatpush1.bf16.msra.mxu0 %v3277
    %4799 = vmatprep.subr.bf16.mxu0 %v3274
    %4800 = vmatpush1.bf16.msra.mxu0 %v3273
    %4801 = vmatprep.subr.bf16.mxu0 %v3270
    %4802 = vmatpush1.bf16.msra.mxu0 %v3269
    %4803 = vmatprep.subr.bf16.mxu0 %v3266
    %4804 = vmatpush1.bf16.msra.mxu0 %v3265
    %4805 = vmatprep.subr.bf16.mxu0 %v3262
    %4806 = vmatpush1.bf16.msra.mxu0 %v3261
    %4807 = vmatprep.subr.bf16.mxu0 %v3258
    %4808 = vmatpush1.bf16.msra.mxu0 %v3257
    %4809 = vmatprep.subr.bf16.mxu0 %v3318
    %4810 = vmatpush2.bf16.msra.mxu0 %v3317
    %4811 = vmatprep.subr.bf16.mxu0 %v3314
    %4812 = vmatpush2.bf16.msra.mxu0 %v3313
    %4813 = vmatprep.subr.bf16.mxu0 %v3310
    %4814 = vmatpush2.bf16.msra.mxu0 %v3309
    %4815 = vmatprep.subr.bf16.mxu0 %v3306
    %4816 = vmatpush2.bf16.msra.mxu0 %v3305
    %4817 = vmatprep.subr.bf16.mxu0 %v3302
    %4818 = vmatpush2.bf16.msra.mxu0 %v3301
    %4819 = vmatprep.subr.bf16.mxu0 %v3298
    %4820 = vmatpush2.bf16.msra.mxu0 %v3297
    %4821 = vmatprep.subr.bf16.mxu0 %v3294
    %4822 = vmatpush2.bf16.msra.mxu0 %v3293
    %4823 = vmatprep.subr.bf16.mxu0 %v3290
    %4824 = vmatpush2.bf16.msra.mxu0 %v3289
    %4825 = vmatprep.mubr.bf16.mxu0 %v140
    %4826 = vmatmul.mubr.bf16.gmra.mxu0 %v139
    %v4827 = vpop.f32.mrf.mxu0
    %v4828 = vadd.f32 %v936, %v4827
    %v4829 = vpop.f32.mrf.mxu0
    %v4830 = vadd.f32 %v940, %v4829
    %v4831 = vpop.f32.mrf.mxu0
    %v4832 = vpop.f32.mrf.mxu0
    %4833 = vdwg.mxu0
    %4834 = vmatprep.subr.bf16.mxu0 %v3350
    %4835 = vmatpush1.bf16.msra.mxu0 %v3349
    %4836 = vmatprep.subr.bf16.mxu0 %v3346
    %4837 = vmatpush1.bf16.msra.mxu0 %v3345
    %4838 = vmatprep.subr.bf16.mxu0 %v3342
    %4839 = vmatpush1.bf16.msra.mxu0 %v3341
    %4840 = vmatprep.subr.bf16.mxu0 %v3338
    %4841 = vmatpush1.bf16.msra.mxu0 %v3337
    %4842 = vmatprep.subr.bf16.mxu0 %v3334
    %4843 = vmatpush1.bf16.msra.mxu0 %v3333
    %4844 = vmatprep.subr.bf16.mxu0 %v3330
    %4845 = vmatpush1.bf16.msra.mxu0 %v3329
    %4846 = vmatprep.subr.bf16.mxu0 %v3326
    %4847 = vmatpush1.bf16.msra.mxu0 %v3325
    %4848 = vmatprep.subr.bf16.mxu0 %v3322
    %4849 = vmatpush1.bf16.msra.mxu0 %v3321
    %4850 = vmatprep.subr.bf16.mxu0 %v3382
    %4851 = vmatpush2.bf16.msra.mxu0 %v3381
    %4852 = vmatprep.subr.bf16.mxu0 %v3378
    %4853 = vmatpush2.bf16.msra.mxu0 %v3377
    %4854 = vmatprep.subr.bf16.mxu0 %v3374
    %4855 = vmatpush2.bf16.msra.mxu0 %v3373
    %4856 = vmatprep.subr.bf16.mxu0 %v3370
    %4857 = vmatpush2.bf16.msra.mxu0 %v3369
    %4858 = vmatprep.subr.bf16.mxu0 %v3366
    %4859 = vmatpush2.bf16.msra.mxu0 %v3365
    %4860 = vmatprep.subr.bf16.mxu0 %v3362
    %4861 = vmatpush2.bf16.msra.mxu0 %v3361
    %4862 = vmatprep.subr.bf16.mxu0 %v3358
    %4863 = vmatpush2.bf16.msra.mxu0 %v3357
    %4864 = vmatprep.subr.bf16.mxu0 %v3354
    %4865 = vmatpush2.bf16.msra.mxu0 %v3353
    %4866 = vmatprep.mubr.bf16.mxu0 %v142
    %4867 = vmatmul.mubr.bf16.gmra.mxu0 %v141
    %v4868 = vpop.f32.mrf.mxu0
    %v4869 = vadd.f32 %v4828, %v4868
    %v4870 = vpop.f32.mrf.mxu0
    %v4871 = vadd.f32 %v4830, %v4870
    %v4872 = vpop.f32.mrf.mxu0
    %v4873 = vpop.f32.mrf.mxu0
    %4874 = vdwg.mxu0
    %4875 = vmatprep.subr.bf16.mxu0 %v3414
    %4876 = vmatpush1.bf16.msra.mxu0 %v3413
    %4877 = vmatprep.subr.bf16.mxu0 %v3410
    %4878 = vmatpush1.bf16.msra.mxu0 %v3409
    %4879 = vmatprep.subr.bf16.mxu0 %v3406
    %4880 = vmatpush1.bf16.msra.mxu0 %v3405
    %4881 = vmatprep.subr.bf16.mxu0 %v3402
    %4882 = vmatpush1.bf16.msra.mxu0 %v3401
    %4883 = vmatprep.subr.bf16.mxu0 %v3398
    %4884 = vmatpush1.bf16.msra.mxu0 %v3397
    %4885 = vmatprep.subr.bf16.mxu0 %v3394
    %4886 = vmatpush1.bf16.msra.mxu0 %v3393
    %4887 = vmatprep.subr.bf16.mxu0 %v3390
    %4888 = vmatpush1.bf16.msra.mxu0 %v3389
    %4889 = vmatprep.subr.bf16.mxu0 %v3386
    %4890 = vmatpush1.bf16.msra.mxu0 %v3385
    %4891 = vmatprep.subr.bf16.mxu0 %v3446
    %4892 = vmatpush2.bf16.msra.mxu0 %v3445
    %4893 = vmatprep.subr.bf16.mxu0 %v3442
    %4894 = vmatpush2.bf16.msra.mxu0 %v3441
    %4895 = vmatprep.subr.bf16.mxu0 %v3438
    %4896 = vmatpush2.bf16.msra.mxu0 %v3437
    %4897 = vmatprep.subr.bf16.mxu0 %v3434
    %4898 = vmatpush2.bf16.msra.mxu0 %v3433
    %4899 = vmatprep.subr.bf16.mxu0 %v3430
    %4900 = vmatpush2.bf16.msra.mxu0 %v3429
    %4901 = vmatprep.subr.bf16.mxu0 %v3426
    %4902 = vmatpush2.bf16.msra.mxu0 %v3425
    %4903 = vmatprep.subr.bf16.mxu0 %v3422
    %4904 = vmatpush2.bf16.msra.mxu0 %v3421
    %4905 = vmatprep.subr.bf16.mxu0 %v3418
    %4906 = vmatpush2.bf16.msra.mxu0 %v3417
    %4907 = vmatprep.mubr.bf16.mxu0 %v144
    %4908 = vmatmul.mubr.bf16.gmra.mxu0 %v143
    %v4909 = vpop.f32.mrf.mxu0
    %v4910 = vadd.f32 %v4869, %v4909
    %v4911 = vpop.f32.mrf.mxu0
    %v4912 = vadd.f32 %v4871, %v4911
    %v4913 = vpop.f32.mrf.mxu0
    %v4914 = vpop.f32.mrf.mxu0
    %4915 = vdwg.mxu0
    %4916 = vmatprep.subr.bf16.mxu0 %v3478
    %4917 = vmatpush1.bf16.msra.mxu0 %v3477
    %4918 = vmatprep.subr.bf16.mxu0 %v3474
    %4919 = vmatpush1.bf16.msra.mxu0 %v3473
    %4920 = vmatprep.subr.bf16.mxu0 %v3470
    %4921 = vmatpush1.bf16.msra.mxu0 %v3469
    %4922 = vmatprep.subr.bf16.mxu0 %v3466
    %4923 = vmatpush1.bf16.msra.mxu0 %v3465
    %4924 = vmatprep.subr.bf16.mxu0 %v3462
    %4925 = vmatpush1.bf16.msra.mxu0 %v3461
    %4926 = vmatprep.subr.bf16.mxu0 %v3458
    %4927 = vmatpush1.bf16.msra.mxu0 %v3457
    %4928 = vmatprep.subr.bf16.mxu0 %v3454
    %4929 = vmatpush1.bf16.msra.mxu0 %v3453
    %4930 = vmatprep.subr.bf16.mxu0 %v3450
    %4931 = vmatpush1.bf16.msra.mxu0 %v3449
    %4932 = vmatprep.subr.bf16.mxu0 %v3510
    %4933 = vmatpush2.bf16.msra.mxu0 %v3509
    %4934 = vmatprep.subr.bf16.mxu0 %v3506
    %4935 = vmatpush2.bf16.msra.mxu0 %v3505
    %4936 = vmatprep.subr.bf16.mxu0 %v3502
    %4937 = vmatpush2.bf16.msra.mxu0 %v3501
    %4938 = vmatprep.subr.bf16.mxu0 %v3498
    %4939 = vmatpush2.bf16.msra.mxu0 %v3497
    %4940 = vmatprep.subr.bf16.mxu0 %v3494
    %4941 = vmatpush2.bf16.msra.mxu0 %v3493
    %4942 = vmatprep.subr.bf16.mxu0 %v3490
    %4943 = vmatpush2.bf16.msra.mxu0 %v3489
    %4944 = vmatprep.subr.bf16.mxu0 %v3486
    %4945 = vmatpush2.bf16.msra.mxu0 %v3485
    %4946 = vmatprep.subr.bf16.mxu0 %v3482
    %4947 = vmatpush2.bf16.msra.mxu0 %v3481
    %4948 = vmatprep.mubr.bf16.mxu0 %v146
    %4949 = vmatmul.mubr.bf16.gmra.mxu0 %v145
    %v4950 = vpop.f32.mrf.mxu0
    %v4951 = vadd.f32 %v4910, %v4950
    %v4952 = vpop.f32.mrf.mxu0
    %v4953 = vadd.f32 %v4912, %v4952
    %v4954 = vpop.f32.mrf.mxu0
    %v4955 = vpop.f32.mrf.mxu0
    %4956 = vdwg.mxu0
    %4957 = vmatprep.subr.bf16.mxu0 %v3542
    %4958 = vmatpush1.bf16.msra.mxu0 %v3541
    %4959 = vmatprep.subr.bf16.mxu0 %v3538
    %4960 = vmatpush1.bf16.msra.mxu0 %v3537
    %4961 = vmatprep.subr.bf16.mxu0 %v3534
    %4962 = vmatpush1.bf16.msra.mxu0 %v3533
    %4963 = vmatprep.subr.bf16.mxu0 %v3530
    %4964 = vmatpush1.bf16.msra.mxu0 %v3529
    %4965 = vmatprep.subr.bf16.mxu0 %v3526
    %4966 = vmatpush1.bf16.msra.mxu0 %v3525
    %4967 = vmatprep.subr.bf16.mxu0 %v3522
    %4968 = vmatpush1.bf16.msra.mxu0 %v3521
    %4969 = vmatprep.subr.bf16.mxu0 %v3518
    %4970 = vmatpush1.bf16.msra.mxu0 %v3517
    %4971 = vmatprep.subr.bf16.mxu0 %v3514
    %4972 = vmatpush1.bf16.msra.mxu0 %v3513
    %4973 = vmatprep.subr.bf16.mxu0 %v3574
    %4974 = vmatpush2.bf16.msra.mxu0 %v3573
    %4975 = vmatprep.subr.bf16.mxu0 %v3570
    %4976 = vmatpush2.bf16.msra.mxu0 %v3569
    %4977 = vmatprep.subr.bf16.mxu0 %v3566
    %4978 = vmatpush2.bf16.msra.mxu0 %v3565
    %4979 = vmatprep.subr.bf16.mxu0 %v3562
    %4980 = vmatpush2.bf16.msra.mxu0 %v3561
    %4981 = vmatprep.subr.bf16.mxu0 %v3558
    %4982 = vmatpush2.bf16.msra.mxu0 %v3557
    %4983 = vmatprep.subr.bf16.mxu0 %v3554
    %4984 = vmatpush2.bf16.msra.mxu0 %v3553
    %4985 = vmatprep.subr.bf16.mxu0 %v3550
    %4986 = vmatpush2.bf16.msra.mxu0 %v3549
    %4987 = vmatprep.subr.bf16.mxu0 %v3546
    %4988 = vmatpush2.bf16.msra.mxu0 %v3545
    %4989 = vmatprep.mubr.bf16.mxu0 %v148
    %4990 = vmatmul.mubr.bf16.gmra.mxu0 %v147
    %v4991 = vpop.f32.mrf.mxu0
    %v4992 = vadd.f32 %v4951, %v4991
    %v4993 = vpop.f32.mrf.mxu0
    %v4994 = vadd.f32 %v4953, %v4993
    %v4995 = vpop.f32.mrf.mxu0
    %v4996 = vpop.f32.mrf.mxu0
    %4997 = vdwg.mxu0
    %4998 = vmatprep.subr.bf16.mxu0 %v3606
    %4999 = vmatpush1.bf16.msra.mxu0 %v3605
    %5000 = vmatprep.subr.bf16.mxu0 %v3602
    %5001 = vmatpush1.bf16.msra.mxu0 %v3601
    %5002 = vmatprep.subr.bf16.mxu0 %v3598
    %5003 = vmatpush1.bf16.msra.mxu0 %v3597
    %5004 = vmatprep.subr.bf16.mxu0 %v3594
    %5005 = vmatpush1.bf16.msra.mxu0 %v3593
    %5006 = vmatprep.subr.bf16.mxu0 %v3590
    %5007 = vmatpush1.bf16.msra.mxu0 %v3589
    %5008 = vmatprep.subr.bf16.mxu0 %v3586
    %5009 = vmatpush1.bf16.msra.mxu0 %v3585
    %5010 = vmatprep.subr.bf16.mxu0 %v3582
    %5011 = vmatpush1.bf16.msra.mxu0 %v3581
    %5012 = vmatprep.subr.bf16.mxu0 %v3578
    %5013 = vmatpush1.bf16.msra.mxu0 %v3577
    %5014 = vmatprep.subr.bf16.mxu0 %v3638
    %5015 = vmatpush2.bf16.msra.mxu0 %v3637
    %5016 = vmatprep.subr.bf16.mxu0 %v3634
    %5017 = vmatpush2.bf16.msra.mxu0 %v3633
    %5018 = vmatprep.subr.bf16.mxu0 %v3630
    %5019 = vmatpush2.bf16.msra.mxu0 %v3629
    %5020 = vmatprep.subr.bf16.mxu0 %v3626
    %5021 = vmatpush2.bf16.msra.mxu0 %v3625
    %5022 = vmatprep.subr.bf16.mxu0 %v3622
    %5023 = vmatpush2.bf16.msra.mxu0 %v3621
    %5024 = vmatprep.subr.bf16.mxu0 %v3618
    %5025 = vmatpush2.bf16.msra.mxu0 %v3617
    %5026 = vmatprep.subr.bf16.mxu0 %v3614
    %5027 = vmatpush2.bf16.msra.mxu0 %v3613
    %5028 = vmatprep.subr.bf16.mxu0 %v3610
    %5029 = vmatpush2.bf16.msra.mxu0 %v3609
    %5030 = vmatprep.mubr.bf16.mxu0 %v150
    %5031 = vmatmul.mubr.bf16.gmra.mxu0 %v149
    %v5032 = vpop.f32.mrf.mxu0
    %v5033 = vadd.f32 %v4992, %v5032
    %v5034 = vpop.f32.mrf.mxu0
    %v5035 = vadd.f32 %v4994, %v5034
    %v5036 = vpop.f32.mrf.mxu0
    %v5037 = vpop.f32.mrf.mxu0
    %5038 = vdwg.mxu0
    %5039 = vmatprep.subr.bf16.mxu0 %v3670
    %5040 = vmatpush1.bf16.msra.mxu0 %v3669
    %5041 = vmatprep.subr.bf16.mxu0 %v3666
    %5042 = vmatpush1.bf16.msra.mxu0 %v3665
    %5043 = vmatprep.subr.bf16.mxu0 %v3662
    %5044 = vmatpush1.bf16.msra.mxu0 %v3661
    %5045 = vmatprep.subr.bf16.mxu0 %v3658
    %5046 = vmatpush1.bf16.msra.mxu0 %v3657
    %5047 = vmatprep.subr.bf16.mxu0 %v3654
    %5048 = vmatpush1.bf16.msra.mxu0 %v3653
    %5049 = vmatprep.subr.bf16.mxu0 %v3650
    %5050 = vmatpush1.bf16.msra.mxu0 %v3649
    %5051 = vmatprep.subr.bf16.mxu0 %v3646
    %5052 = vmatpush1.bf16.msra.mxu0 %v3645
    %5053 = vmatprep.subr.bf16.mxu0 %v3642
    %5054 = vmatpush1.bf16.msra.mxu0 %v3641
    %5055 = vmatprep.subr.bf16.mxu0 %v3702
    %5056 = vmatpush2.bf16.msra.mxu0 %v3701
    %5057 = vmatprep.subr.bf16.mxu0 %v3698
    %5058 = vmatpush2.bf16.msra.mxu0 %v3697
    %5059 = vmatprep.subr.bf16.mxu0 %v3694
    %5060 = vmatpush2.bf16.msra.mxu0 %v3693
    %5061 = vmatprep.subr.bf16.mxu0 %v3690
    %5062 = vmatpush2.bf16.msra.mxu0 %v3689
    %5063 = vmatprep.subr.bf16.mxu0 %v3686
    %5064 = vmatpush2.bf16.msra.mxu0 %v3685
    %5065 = vmatprep.subr.bf16.mxu0 %v3682
    %5066 = vmatpush2.bf16.msra.mxu0 %v3681
    %5067 = vmatprep.subr.bf16.mxu0 %v3678
    %5068 = vmatpush2.bf16.msra.mxu0 %v3677
    %5069 = vmatprep.subr.bf16.mxu0 %v3674
    %5070 = vmatpush2.bf16.msra.mxu0 %v3673
    %5071 = vmatprep.mubr.bf16.mxu0 %v152
    %5072 = vmatmul.mubr.bf16.gmra.mxu0 %v151
    %v5073 = vpop.f32.mrf.mxu0
    %v5074 = vadd.f32 %v5033, %v5073
    %v5075 = vpop.f32.mrf.mxu0
    %v5076 = vadd.f32 %v5035, %v5075
    %v5077 = vpop.f32.mrf.mxu0
    %v5078 = vpop.f32.mrf.mxu0
    %5079 = vdwg.mxu0
    %5080 = vmatprep.subr.bf16.mxu0 %v3734
    %5081 = vmatpush1.bf16.msra.mxu0 %v3733
    %5082 = vmatprep.subr.bf16.mxu0 %v3730
    %5083 = vmatpush1.bf16.msra.mxu0 %v3729
    %5084 = vmatprep.subr.bf16.mxu0 %v3726
    %5085 = vmatpush1.bf16.msra.mxu0 %v3725
    %5086 = vmatprep.subr.bf16.mxu0 %v3722
    %5087 = vmatpush1.bf16.msra.mxu0 %v3721
    %5088 = vmatprep.subr.bf16.mxu0 %v3718
    %5089 = vmatpush1.bf16.msra.mxu0 %v3717
    %5090 = vmatprep.subr.bf16.mxu0 %v3714
    %5091 = vmatpush1.bf16.msra.mxu0 %v3713
    %5092 = vmatprep.subr.bf16.mxu0 %v3710
    %5093 = vmatpush1.bf16.msra.mxu0 %v3709
    %5094 = vmatprep.subr.bf16.mxu0 %v3706
    %5095 = vmatpush1.bf16.msra.mxu0 %v3705
    %5096 = vmatprep.subr.bf16.mxu0 %v3766
    %5097 = vmatpush2.bf16.msra.mxu0 %v3765
    %5098 = vmatprep.subr.bf16.mxu0 %v3762
    %5099 = vmatpush2.bf16.msra.mxu0 %v3761
    %5100 = vmatprep.subr.bf16.mxu0 %v3758
    %5101 = vmatpush2.bf16.msra.mxu0 %v3757
    %5102 = vmatprep.subr.bf16.mxu0 %v3754
    %5103 = vmatpush2.bf16.msra.mxu0 %v3753
    %5104 = vmatprep.subr.bf16.mxu0 %v3750
    %5105 = vmatpush2.bf16.msra.mxu0 %v3749
    %5106 = vmatprep.subr.bf16.mxu0 %v3746
    %5107 = vmatpush2.bf16.msra.mxu0 %v3745
    %5108 = vmatprep.subr.bf16.mxu0 %v3742
    %5109 = vmatpush2.bf16.msra.mxu0 %v3741
    %5110 = vmatprep.subr.bf16.mxu0 %v3738
    %5111 = vmatpush2.bf16.msra.mxu0 %v3737
    %5112 = vmatprep.mubr.bf16.mxu0 %v154
    %5113 = vmatmul.mubr.bf16.gmra.mxu0 %v153
    %v5114 = vpop.f32.mrf.mxu0
    %v5115 = vadd.f32 %v5074, %v5114
    %v5116 = vpop.f32.mrf.mxu0
    %v5117 = vadd.f32 %v5076, %v5116
    %v5118 = vpop.f32.mrf.mxu0
    %v5119 = vpop.f32.mrf.mxu0
    %5120 = vdwg.mxu0
    %5121 = vmatprep.subr.bf16.mxu0 %v3798
    %5122 = vmatpush1.bf16.msra.mxu0 %v3797
    %5123 = vmatprep.subr.bf16.mxu0 %v3794
    %5124 = vmatpush1.bf16.msra.mxu0 %v3793
    %5125 = vmatprep.subr.bf16.mxu0 %v3790
    %5126 = vmatpush1.bf16.msra.mxu0 %v3789
    %5127 = vmatprep.subr.bf16.mxu0 %v3786
    %5128 = vmatpush1.bf16.msra.mxu0 %v3785
    %5129 = vmatprep.subr.bf16.mxu0 %v3782
    %5130 = vmatpush1.bf16.msra.mxu0 %v3781
    %5131 = vmatprep.subr.bf16.mxu0 %v3778
    %5132 = vmatpush1.bf16.msra.mxu0 %v3777
    %5133 = vmatprep.subr.bf16.mxu0 %v3774
    %5134 = vmatpush1.bf16.msra.mxu0 %v3773
    %5135 = vmatprep.subr.bf16.mxu0 %v3770
    %5136 = vmatpush1.bf16.msra.mxu0 %v3769
    %5137 = vmatprep.subr.bf16.mxu0 %v3830
    %5138 = vmatpush2.bf16.msra.mxu0 %v3829
    %5139 = vmatprep.subr.bf16.mxu0 %v3826
    %5140 = vmatpush2.bf16.msra.mxu0 %v3825
    %5141 = vmatprep.subr.bf16.mxu0 %v3822
    %5142 = vmatpush2.bf16.msra.mxu0 %v3821
    %5143 = vmatprep.subr.bf16.mxu0 %v3818
    %5144 = vmatpush2.bf16.msra.mxu0 %v3817
    %5145 = vmatprep.subr.bf16.mxu0 %v3814
    %5146 = vmatpush2.bf16.msra.mxu0 %v3813
    %5147 = vmatprep.subr.bf16.mxu0 %v3810
    %5148 = vmatpush2.bf16.msra.mxu0 %v3809
    %5149 = vmatprep.subr.bf16.mxu0 %v3806
    %5150 = vmatpush2.bf16.msra.mxu0 %v3805
    %5151 = vmatprep.subr.bf16.mxu0 %v3802
    %5152 = vmatpush2.bf16.msra.mxu0 %v3801
    %5153 = vmatprep.mubr.bf16.mxu0 %v156
    %5154 = vmatmul.mubr.bf16.gmra.mxu0 %v155
    %v5155 = vpop.f32.mrf.mxu0
    %v5156 = vadd.f32 %v5115, %v5155
    %v5157 = vpop.f32.mrf.mxu0
    %v5158 = vadd.f32 %v5117, %v5157
    %v5159 = vpop.f32.mrf.mxu0
    %v5160 = vpop.f32.mrf.mxu0
    %5161 = vdwg.mxu0
    %5162 = vmatprep.subr.bf16.mxu0 %v3862
    %5163 = vmatpush1.bf16.msra.mxu0 %v3861
    %5164 = vmatprep.subr.bf16.mxu0 %v3858
    %5165 = vmatpush1.bf16.msra.mxu0 %v3857
    %5166 = vmatprep.subr.bf16.mxu0 %v3854
    %5167 = vmatpush1.bf16.msra.mxu0 %v3853
    %5168 = vmatprep.subr.bf16.mxu0 %v3850
    %5169 = vmatpush1.bf16.msra.mxu0 %v3849
    %5170 = vmatprep.subr.bf16.mxu0 %v3846
    %5171 = vmatpush1.bf16.msra.mxu0 %v3845
    %5172 = vmatprep.subr.bf16.mxu0 %v3842
    %5173 = vmatpush1.bf16.msra.mxu0 %v3841
    %5174 = vmatprep.subr.bf16.mxu0 %v3838
    %5175 = vmatpush1.bf16.msra.mxu0 %v3837
    %5176 = vmatprep.subr.bf16.mxu0 %v3834
    %5177 = vmatpush1.bf16.msra.mxu0 %v3833
    %5178 = vmatprep.subr.bf16.mxu0 %v3894
    %5179 = vmatpush2.bf16.msra.mxu0 %v3893
    %5180 = vmatprep.subr.bf16.mxu0 %v3890
    %5181 = vmatpush2.bf16.msra.mxu0 %v3889
    %5182 = vmatprep.subr.bf16.mxu0 %v3886
    %5183 = vmatpush2.bf16.msra.mxu0 %v3885
    %5184 = vmatprep.subr.bf16.mxu0 %v3882
    %5185 = vmatpush2.bf16.msra.mxu0 %v3881
    %5186 = vmatprep.subr.bf16.mxu0 %v3878
    %5187 = vmatpush2.bf16.msra.mxu0 %v3877
    %5188 = vmatprep.subr.bf16.mxu0 %v3874
    %5189 = vmatpush2.bf16.msra.mxu0 %v3873
    %5190 = vmatprep.subr.bf16.mxu0 %v3870
    %5191 = vmatpush2.bf16.msra.mxu0 %v3869
    %5192 = vmatprep.subr.bf16.mxu0 %v3866
    %5193 = vmatpush2.bf16.msra.mxu0 %v3865
    %5194 = vmatprep.mubr.bf16.mxu0 %v158
    %5195 = vmatmul.mubr.bf16.gmra.mxu0 %v157
    %v5196 = vpop.f32.mrf.mxu0
    %v5197 = vadd.f32 %v5156, %v5196
    %v5198 = vpop.f32.mrf.mxu0
    %v5199 = vadd.f32 %v5158, %v5198
    %v5200 = vpop.f32.mrf.mxu0
    %v5201 = vpop.f32.mrf.mxu0
    %5202 = vdwg.mxu0
    %5203 = vmatprep.subr.bf16.mxu0 %v3926
    %5204 = vmatpush1.bf16.msra.mxu0 %v3925
    %5205 = vmatprep.subr.bf16.mxu0 %v3922
    %5206 = vmatpush1.bf16.msra.mxu0 %v3921
    %5207 = vmatprep.subr.bf16.mxu0 %v3918
    %5208 = vmatpush1.bf16.msra.mxu0 %v3917
    %5209 = vmatprep.subr.bf16.mxu0 %v3914
    %5210 = vmatpush1.bf16.msra.mxu0 %v3913
    %5211 = vmatprep.subr.bf16.mxu0 %v3910
    %5212 = vmatpush1.bf16.msra.mxu0 %v3909
    %5213 = vmatprep.subr.bf16.mxu0 %v3906
    %5214 = vmatpush1.bf16.msra.mxu0 %v3905
    %5215 = vmatprep.subr.bf16.mxu0 %v3902
    %5216 = vmatpush1.bf16.msra.mxu0 %v3901
    %5217 = vmatprep.subr.bf16.mxu0 %v3898
    %5218 = vmatpush1.bf16.msra.mxu0 %v3897
    %5219 = vmatprep.subr.bf16.mxu0 %v3958
    %5220 = vmatpush2.bf16.msra.mxu0 %v3957
    %5221 = vmatprep.subr.bf16.mxu0 %v3954
    %5222 = vmatpush2.bf16.msra.mxu0 %v3953
    %5223 = vmatprep.subr.bf16.mxu0 %v3950
    %5224 = vmatpush2.bf16.msra.mxu0 %v3949
    %5225 = vmatprep.subr.bf16.mxu0 %v3946
    %5226 = vmatpush2.bf16.msra.mxu0 %v3945
    %5227 = vmatprep.subr.bf16.mxu0 %v3942
    %5228 = vmatpush2.bf16.msra.mxu0 %v3941
    %5229 = vmatprep.subr.bf16.mxu0 %v3938
    %5230 = vmatpush2.bf16.msra.mxu0 %v3937
    %5231 = vmatprep.subr.bf16.mxu0 %v3934
    %5232 = vmatpush2.bf16.msra.mxu0 %v3933
    %5233 = vmatprep.subr.bf16.mxu0 %v3930
    %5234 = vmatpush2.bf16.msra.mxu0 %v3929
    %5235 = vmatprep.mubr.bf16.mxu0 %v160
    %5236 = vmatmul.mubr.bf16.gmra.mxu0 %v159
    %v5237 = vpop.f32.mrf.mxu0
    %v5238 = vadd.f32 %v5197, %v5237
    %v5239 = vpop.f32.mrf.mxu0
    %v5240 = vadd.f32 %v5199, %v5239
    %v5241 = vpop.f32.mrf.mxu0
    %v5242 = vpop.f32.mrf.mxu0
    %5243 = vdwg.mxu0
    %5244 = vmatprep.subr.bf16.mxu0 %v3990
    %5245 = vmatpush1.bf16.msra.mxu0 %v3989
    %5246 = vmatprep.subr.bf16.mxu0 %v3986
    %5247 = vmatpush1.bf16.msra.mxu0 %v3985
    %5248 = vmatprep.subr.bf16.mxu0 %v3982
    %5249 = vmatpush1.bf16.msra.mxu0 %v3981
    %5250 = vmatprep.subr.bf16.mxu0 %v3978
    %5251 = vmatpush1.bf16.msra.mxu0 %v3977
    %5252 = vmatprep.subr.bf16.mxu0 %v3974
    %5253 = vmatpush1.bf16.msra.mxu0 %v3973
    %5254 = vmatprep.subr.bf16.mxu0 %v3970
    %5255 = vmatpush1.bf16.msra.mxu0 %v3969
    %5256 = vmatprep.subr.bf16.mxu0 %v3966
    %5257 = vmatpush1.bf16.msra.mxu0 %v3965
    %5258 = vmatprep.subr.bf16.mxu0 %v3962
    %5259 = vmatpush1.bf16.msra.mxu0 %v3961
    %5260 = vmatprep.subr.bf16.mxu0 %v4022
    %5261 = vmatpush2.bf16.msra.mxu0 %v4021
    %5262 = vmatprep.subr.bf16.mxu0 %v4018
    %5263 = vmatpush2.bf16.msra.mxu0 %v4017
    %5264 = vmatprep.subr.bf16.mxu0 %v4014
    %5265 = vmatpush2.bf16.msra.mxu0 %v4013
    %5266 = vmatprep.subr.bf16.mxu0 %v4010
    %5267 = vmatpush2.bf16.msra.mxu0 %v4009
    %5268 = vmatprep.subr.bf16.mxu0 %v4006
    %5269 = vmatpush2.bf16.msra.mxu0 %v4005
    %5270 = vmatprep.subr.bf16.mxu0 %v4002
    %5271 = vmatpush2.bf16.msra.mxu0 %v4001
    %5272 = vmatprep.subr.bf16.mxu0 %v3998
    %5273 = vmatpush2.bf16.msra.mxu0 %v3997
    %5274 = vmatprep.subr.bf16.mxu0 %v3994
    %5275 = vmatpush2.bf16.msra.mxu0 %v3993
    %5276 = vmatprep.mubr.bf16.mxu0 %v162
    %5277 = vmatmul.mubr.bf16.gmra.mxu0 %v161
    %v5278 = vpop.f32.mrf.mxu0
    %v5279 = vadd.f32 %v5238, %v5278
    %v5280 = vpop.f32.mrf.mxu0
    %v5281 = vadd.f32 %v5240, %v5280
    %v5282 = vpop.f32.mrf.mxu0
    %v5283 = vpop.f32.mrf.mxu0
    %5284 = vdwg.mxu0
    %5285 = vmatprep.subr.bf16.mxu0 %v3288
    %5286 = vmatpush1.bf16.msra.mxu0 %v3287
    %5287 = vmatprep.subr.bf16.mxu0 %v3284
    %5288 = vmatpush1.bf16.msra.mxu0 %v3283
    %5289 = vmatprep.subr.bf16.mxu0 %v3280
    %5290 = vmatpush1.bf16.msra.mxu0 %v3279
    %5291 = vmatprep.subr.bf16.mxu0 %v3276
    %5292 = vmatpush1.bf16.msra.mxu0 %v3275
    %5293 = vmatprep.subr.bf16.mxu0 %v3272
    %5294 = vmatpush1.bf16.msra.mxu0 %v3271
    %5295 = vmatprep.subr.bf16.mxu0 %v3268
    %5296 = vmatpush1.bf16.msra.mxu0 %v3267
    %5297 = vmatprep.subr.bf16.mxu0 %v3264
    %5298 = vmatpush1.bf16.msra.mxu0 %v3263
    %5299 = vmatprep.subr.bf16.mxu0 %v3260
    %5300 = vmatpush1.bf16.msra.mxu0 %v3259
    %5301 = vmatprep.subr.bf16.mxu0 %v3320
    %5302 = vmatpush2.bf16.msra.mxu0 %v3319
    %5303 = vmatprep.subr.bf16.mxu0 %v3316
    %5304 = vmatpush2.bf16.msra.mxu0 %v3315
    %5305 = vmatprep.subr.bf16.mxu0 %v3312
    %5306 = vmatpush2.bf16.msra.mxu0 %v3311
    %5307 = vmatprep.subr.bf16.mxu0 %v3308
    %5308 = vmatpush2.bf16.msra.mxu0 %v3307
    %5309 = vmatprep.subr.bf16.mxu0 %v3304
    %5310 = vmatpush2.bf16.msra.mxu0 %v3303
    %5311 = vmatprep.subr.bf16.mxu0 %v3300
    %5312 = vmatpush2.bf16.msra.mxu0 %v3299
    %5313 = vmatprep.subr.bf16.mxu0 %v3296
    %5314 = vmatpush2.bf16.msra.mxu0 %v3295
    %5315 = vmatprep.subr.bf16.mxu0 %v3292
    %5316 = vmatpush2.bf16.msra.mxu0 %v3291
    %5317 = vmatprep.mubr.bf16.mxu0 %v140
    %5318 = vmatmul.mubr.bf16.gmra.mxu0 %v139
    %v5319 = vpop.f32.mrf.mxu0
    %v5320 = vadd.f32 %v944, %v5319
    %v5321 = vpop.f32.mrf.mxu0
    %v5322 = vadd.f32 %v948, %v5321
    %v5323 = vpop.f32.mrf.mxu0
    %v5324 = vpop.f32.mrf.mxu0
    %5325 = vdwg.mxu0
    %5326 = vmatprep.subr.bf16.mxu0 %v3352
    %5327 = vmatpush1.bf16.msra.mxu0 %v3351
    %5328 = vmatprep.subr.bf16.mxu0 %v3348
    %5329 = vmatpush1.bf16.msra.mxu0 %v3347
    %5330 = vmatprep.subr.bf16.mxu0 %v3344
    %5331 = vmatpush1.bf16.msra.mxu0 %v3343
    %5332 = vmatprep.subr.bf16.mxu0 %v3340
    %5333 = vmatpush1.bf16.msra.mxu0 %v3339
    %5334 = vmatprep.subr.bf16.mxu0 %v3336
    %5335 = vmatpush1.bf16.msra.mxu0 %v3335
    %5336 = vmatprep.subr.bf16.mxu0 %v3332
    %5337 = vmatpush1.bf16.msra.mxu0 %v3331
    %5338 = vmatprep.subr.bf16.mxu0 %v3328
    %5339 = vmatpush1.bf16.msra.mxu0 %v3327
    %5340 = vmatprep.subr.bf16.mxu0 %v3324
    %5341 = vmatpush1.bf16.msra.mxu0 %v3323
    %5342 = vmatprep.subr.bf16.mxu0 %v3384
    %5343 = vmatpush2.bf16.msra.mxu0 %v3383
    %5344 = vmatprep.subr.bf16.mxu0 %v3380
    %5345 = vmatpush2.bf16.msra.mxu0 %v3379
    %5346 = vmatprep.subr.bf16.mxu0 %v3376
    %5347 = vmatpush2.bf16.msra.mxu0 %v3375
    %5348 = vmatprep.subr.bf16.mxu0 %v3372
    %5349 = vmatpush2.bf16.msra.mxu0 %v3371
    %5350 = vmatprep.subr.bf16.mxu0 %v3368
    %5351 = vmatpush2.bf16.msra.mxu0 %v3367
    %5352 = vmatprep.subr.bf16.mxu0 %v3364
    %5353 = vmatpush2.bf16.msra.mxu0 %v3363
    %5354 = vmatprep.subr.bf16.mxu0 %v3360
    %5355 = vmatpush2.bf16.msra.mxu0 %v3359
    %5356 = vmatprep.subr.bf16.mxu0 %v3356
    %5357 = vmatpush2.bf16.msra.mxu0 %v3355
    %5358 = vmatprep.mubr.bf16.mxu0 %v142
    %5359 = vmatmul.mubr.bf16.gmra.mxu0 %v141
    %v5360 = vpop.f32.mrf.mxu0
    %v5361 = vadd.f32 %v5320, %v5360
    %v5362 = vpop.f32.mrf.mxu0
    %v5363 = vadd.f32 %v5322, %v5362
    %v5364 = vpop.f32.mrf.mxu0
    %v5365 = vpop.f32.mrf.mxu0
    %5366 = vdwg.mxu0
    %5367 = vmatprep.subr.bf16.mxu0 %v3416
    %5368 = vmatpush1.bf16.msra.mxu0 %v3415
    %5369 = vmatprep.subr.bf16.mxu0 %v3412
    %5370 = vmatpush1.bf16.msra.mxu0 %v3411
    %5371 = vmatprep.subr.bf16.mxu0 %v3408
    %5372 = vmatpush1.bf16.msra.mxu0 %v3407
    %5373 = vmatprep.subr.bf16.mxu0 %v3404
    %5374 = vmatpush1.bf16.msra.mxu0 %v3403
    %5375 = vmatprep.subr.bf16.mxu0 %v3400
    %5376 = vmatpush1.bf16.msra.mxu0 %v3399
    %5377 = vmatprep.subr.bf16.mxu0 %v3396
    %5378 = vmatpush1.bf16.msra.mxu0 %v3395
    %5379 = vmatprep.subr.bf16.mxu0 %v3392
    %5380 = vmatpush1.bf16.msra.mxu0 %v3391
    %5381 = vmatprep.subr.bf16.mxu0 %v3388
    %5382 = vmatpush1.bf16.msra.mxu0 %v3387
    %5383 = vmatprep.subr.bf16.mxu0 %v3448
    %5384 = vmatpush2.bf16.msra.mxu0 %v3447
    %5385 = vmatprep.subr.bf16.mxu0 %v3444
    %5386 = vmatpush2.bf16.msra.mxu0 %v3443
    %5387 = vmatprep.subr.bf16.mxu0 %v3440
    %5388 = vmatpush2.bf16.msra.mxu0 %v3439
    %5389 = vmatprep.subr.bf16.mxu0 %v3436
    %5390 = vmatpush2.bf16.msra.mxu0 %v3435
    %5391 = vmatprep.subr.bf16.mxu0 %v3432
    %5392 = vmatpush2.bf16.msra.mxu0 %v3431
    %5393 = vmatprep.subr.bf16.mxu0 %v3428
    %5394 = vmatpush2.bf16.msra.mxu0 %v3427
    %5395 = vmatprep.subr.bf16.mxu0 %v3424
    %5396 = vmatpush2.bf16.msra.mxu0 %v3423
    %5397 = vmatprep.subr.bf16.mxu0 %v3420
    %5398 = vmatpush2.bf16.msra.mxu0 %v3419
    %5399 = vmatprep.mubr.bf16.mxu0 %v144
    %5400 = vmatmul.mubr.bf16.gmra.mxu0 %v143
    %v5401 = vpop.f32.mrf.mxu0
    %v5402 = vadd.f32 %v5361, %v5401
    %v5403 = vpop.f32.mrf.mxu0
    %v5404 = vadd.f32 %v5363, %v5403
    %v5405 = vpop.f32.mrf.mxu0
    %v5406 = vpop.f32.mrf.mxu0
    %5407 = vdwg.mxu0
    %5408 = vmatprep.subr.bf16.mxu0 %v3480
    %5409 = vmatpush1.bf16.msra.mxu0 %v3479
    %5410 = vmatprep.subr.bf16.mxu0 %v3476
    %5411 = vmatpush1.bf16.msra.mxu0 %v3475
    %5412 = vmatprep.subr.bf16.mxu0 %v3472
    %5413 = vmatpush1.bf16.msra.mxu0 %v3471
    %5414 = vmatprep.subr.bf16.mxu0 %v3468
    %5415 = vmatpush1.bf16.msra.mxu0 %v3467
    %5416 = vmatprep.subr.bf16.mxu0 %v3464
    %5417 = vmatpush1.bf16.msra.mxu0 %v3463
    %5418 = vmatprep.subr.bf16.mxu0 %v3460
    %5419 = vmatpush1.bf16.msra.mxu0 %v3459
    %5420 = vmatprep.subr.bf16.mxu0 %v3456
    %5421 = vmatpush1.bf16.msra.mxu0 %v3455
    %5422 = vmatprep.subr.bf16.mxu0 %v3452
    %5423 = vmatpush1.bf16.msra.mxu0 %v3451
    %5424 = vmatprep.subr.bf16.mxu0 %v3512
    %5425 = vmatpush2.bf16.msra.mxu0 %v3511
    %5426 = vmatprep.subr.bf16.mxu0 %v3508
    %5427 = vmatpush2.bf16.msra.mxu0 %v3507
    %5428 = vmatprep.subr.bf16.mxu0 %v3504
    %5429 = vmatpush2.bf16.msra.mxu0 %v3503
    %5430 = vmatprep.subr.bf16.mxu0 %v3500
    %5431 = vmatpush2.bf16.msra.mxu0 %v3499
    %5432 = vmatprep.subr.bf16.mxu0 %v3496
    %5433 = vmatpush2.bf16.msra.mxu0 %v3495
    %5434 = vmatprep.subr.bf16.mxu0 %v3492
    %5435 = vmatpush2.bf16.msra.mxu0 %v3491
    %5436 = vmatprep.subr.bf16.mxu0 %v3488
    %5437 = vmatpush2.bf16.msra.mxu0 %v3487
    %5438 = vmatprep.subr.bf16.mxu0 %v3484
    %5439 = vmatpush2.bf16.msra.mxu0 %v3483
    %5440 = vmatprep.mubr.bf16.mxu0 %v146
    %5441 = vmatmul.mubr.bf16.gmra.mxu0 %v145
    %v5442 = vpop.f32.mrf.mxu0
    %v5443 = vadd.f32 %v5402, %v5442
    %v5444 = vpop.f32.mrf.mxu0
    %v5445 = vadd.f32 %v5404, %v5444
    %v5446 = vpop.f32.mrf.mxu0
    %v5447 = vpop.f32.mrf.mxu0
    %5448 = vdwg.mxu0
    %5449 = vmatprep.subr.bf16.mxu0 %v3544
    %5450 = vmatpush1.bf16.msra.mxu0 %v3543
    %5451 = vmatprep.subr.bf16.mxu0 %v3540
    %5452 = vmatpush1.bf16.msra.mxu0 %v3539
    %5453 = vmatprep.subr.bf16.mxu0 %v3536
    %5454 = vmatpush1.bf16.msra.mxu0 %v3535
    %5455 = vmatprep.subr.bf16.mxu0 %v3532
    %5456 = vmatpush1.bf16.msra.mxu0 %v3531
    %5457 = vmatprep.subr.bf16.mxu0 %v3528
    %5458 = vmatpush1.bf16.msra.mxu0 %v3527
    %5459 = vmatprep.subr.bf16.mxu0 %v3524
    %5460 = vmatpush1.bf16.msra.mxu0 %v3523
    %5461 = vmatprep.subr.bf16.mxu0 %v3520
    %5462 = vmatpush1.bf16.msra.mxu0 %v3519
    %5463 = vmatprep.subr.bf16.mxu0 %v3516
    %5464 = vmatpush1.bf16.msra.mxu0 %v3515
    %5465 = vmatprep.subr.bf16.mxu0 %v3576
    %5466 = vmatpush2.bf16.msra.mxu0 %v3575
    %5467 = vmatprep.subr.bf16.mxu0 %v3572
    %5468 = vmatpush2.bf16.msra.mxu0 %v3571
    %5469 = vmatprep.subr.bf16.mxu0 %v3568
    %5470 = vmatpush2.bf16.msra.mxu0 %v3567
    %5471 = vmatprep.subr.bf16.mxu0 %v3564
    %5472 = vmatpush2.bf16.msra.mxu0 %v3563
    %5473 = vmatprep.subr.bf16.mxu0 %v3560
    %5474 = vmatpush2.bf16.msra.mxu0 %v3559
    %5475 = vmatprep.subr.bf16.mxu0 %v3556
    %5476 = vmatpush2.bf16.msra.mxu0 %v3555
    %5477 = vmatprep.subr.bf16.mxu0 %v3552
    %5478 = vmatpush2.bf16.msra.mxu0 %v3551
    %5479 = vmatprep.subr.bf16.mxu0 %v3548
    %5480 = vmatpush2.bf16.msra.mxu0 %v3547
    %5481 = vmatprep.mubr.bf16.mxu0 %v148
    %5482 = vmatmul.mubr.bf16.gmra.mxu0 %v147
    %v5483 = vpop.f32.mrf.mxu0
    %v5484 = vadd.f32 %v5443, %v5483
    %v5485 = vpop.f32.mrf.mxu0
    %v5486 = vadd.f32 %v5445, %v5485
    %v5487 = vpop.f32.mrf.mxu0
    %v5488 = vpop.f32.mrf.mxu0
    %5489 = vdwg.mxu0
    %5490 = vmatprep.subr.bf16.mxu0 %v3608
    %5491 = vmatpush1.bf16.msra.mxu0 %v3607
    %5492 = vmatprep.subr.bf16.mxu0 %v3604
    %5493 = vmatpush1.bf16.msra.mxu0 %v3603
    %5494 = vmatprep.subr.bf16.mxu0 %v3600
    %5495 = vmatpush1.bf16.msra.mxu0 %v3599
    %5496 = vmatprep.subr.bf16.mxu0 %v3596
    %5497 = vmatpush1.bf16.msra.mxu0 %v3595
    %5498 = vmatprep.subr.bf16.mxu0 %v3592
    %5499 = vmatpush1.bf16.msra.mxu0 %v3591
    %5500 = vmatprep.subr.bf16.mxu0 %v3588
    %5501 = vmatpush1.bf16.msra.mxu0 %v3587
    %5502 = vmatprep.subr.bf16.mxu0 %v3584
    %5503 = vmatpush1.bf16.msra.mxu0 %v3583
    %5504 = vmatprep.subr.bf16.mxu0 %v3580
    %5505 = vmatpush1.bf16.msra.mxu0 %v3579
    %5506 = vmatprep.subr.bf16.mxu0 %v3640
    %5507 = vmatpush2.bf16.msra.mxu0 %v3639
    %5508 = vmatprep.subr.bf16.mxu0 %v3636
    %5509 = vmatpush2.bf16.msra.mxu0 %v3635
    %5510 = vmatprep.subr.bf16.mxu0 %v3632
    %5511 = vmatpush2.bf16.msra.mxu0 %v3631
    %5512 = vmatprep.subr.bf16.mxu0 %v3628
    %5513 = vmatpush2.bf16.msra.mxu0 %v3627
    %5514 = vmatprep.subr.bf16.mxu0 %v3624
    %5515 = vmatpush2.bf16.msra.mxu0 %v3623
    %5516 = vmatprep.subr.bf16.mxu0 %v3620
    %5517 = vmatpush2.bf16.msra.mxu0 %v3619
    %5518 = vmatprep.subr.bf16.mxu0 %v3616
    %5519 = vmatpush2.bf16.msra.mxu0 %v3615
    %5520 = vmatprep.subr.bf16.mxu0 %v3612
    %5521 = vmatpush2.bf16.msra.mxu0 %v3611
    %5522 = vmatprep.mubr.bf16.mxu0 %v150
    %5523 = vmatmul.mubr.bf16.gmra.mxu0 %v149
    %v5524 = vpop.f32.mrf.mxu0
    %v5525 = vadd.f32 %v5484, %v5524
    %v5526 = vpop.f32.mrf.mxu0
    %v5527 = vadd.f32 %v5486, %v5526
    %v5528 = vpop.f32.mrf.mxu0
    %v5529 = vpop.f32.mrf.mxu0
    %5530 = vdwg.mxu0
    %5531 = vmatprep.subr.bf16.mxu0 %v3672
    %5532 = vmatpush1.bf16.msra.mxu0 %v3671
    %5533 = vmatprep.subr.bf16.mxu0 %v3668
    %5534 = vmatpush1.bf16.msra.mxu0 %v3667
    %5535 = vmatprep.subr.bf16.mxu0 %v3664
    %5536 = vmatpush1.bf16.msra.mxu0 %v3663
    %5537 = vmatprep.subr.bf16.mxu0 %v3660
    %5538 = vmatpush1.bf16.msra.mxu0 %v3659
    %5539 = vmatprep.subr.bf16.mxu0 %v3656
    %5540 = vmatpush1.bf16.msra.mxu0 %v3655
    %5541 = vmatprep.subr.bf16.mxu0 %v3652
    %5542 = vmatpush1.bf16.msra.mxu0 %v3651
    %5543 = vmatprep.subr.bf16.mxu0 %v3648
    %5544 = vmatpush1.bf16.msra.mxu0 %v3647
    %5545 = vmatprep.subr.bf16.mxu0 %v3644
    %5546 = vmatpush1.bf16.msra.mxu0 %v3643
    %5547 = vmatprep.subr.bf16.mxu0 %v3704
    %5548 = vmatpush2.bf16.msra.mxu0 %v3703
    %5549 = vmatprep.subr.bf16.mxu0 %v3700
    %5550 = vmatpush2.bf16.msra.mxu0 %v3699
    %5551 = vmatprep.subr.bf16.mxu0 %v3696
    %5552 = vmatpush2.bf16.msra.mxu0 %v3695
    %5553 = vmatprep.subr.bf16.mxu0 %v3692
    %5554 = vmatpush2.bf16.msra.mxu0 %v3691
    %5555 = vmatprep.subr.bf16.mxu0 %v3688
    %5556 = vmatpush2.bf16.msra.mxu0 %v3687
    %5557 = vmatprep.subr.bf16.mxu0 %v3684
    %5558 = vmatpush2.bf16.msra.mxu0 %v3683
    %5559 = vmatprep.subr.bf16.mxu0 %v3680
    %5560 = vmatpush2.bf16.msra.mxu0 %v3679
    %5561 = vmatprep.subr.bf16.mxu0 %v3676
    %5562 = vmatpush2.bf16.msra.mxu0 %v3675
    %5563 = vmatprep.mubr.bf16.mxu0 %v152
    %5564 = vmatmul.mubr.bf16.gmra.mxu0 %v151
    %v5565 = vpop.f32.mrf.mxu0
    %v5566 = vadd.f32 %v5525, %v5565
    %v5567 = vpop.f32.mrf.mxu0
    %v5568 = vadd.f32 %v5527, %v5567
    %v5569 = vpop.f32.mrf.mxu0
    %v5570 = vpop.f32.mrf.mxu0
    %5571 = vdwg.mxu0
    %5572 = vmatprep.subr.bf16.mxu0 %v3736
    %5573 = vmatpush1.bf16.msra.mxu0 %v3735
    %5574 = vmatprep.subr.bf16.mxu0 %v3732
    %5575 = vmatpush1.bf16.msra.mxu0 %v3731
    %5576 = vmatprep.subr.bf16.mxu0 %v3728
    %5577 = vmatpush1.bf16.msra.mxu0 %v3727
    %5578 = vmatprep.subr.bf16.mxu0 %v3724
    %5579 = vmatpush1.bf16.msra.mxu0 %v3723
    %5580 = vmatprep.subr.bf16.mxu0 %v3720
    %5581 = vmatpush1.bf16.msra.mxu0 %v3719
    %5582 = vmatprep.subr.bf16.mxu0 %v3716
    %5583 = vmatpush1.bf16.msra.mxu0 %v3715
    %5584 = vmatprep.subr.bf16.mxu0 %v3712
    %5585 = vmatpush1.bf16.msra.mxu0 %v3711
    %5586 = vmatprep.subr.bf16.mxu0 %v3708
    %5587 = vmatpush1.bf16.msra.mxu0 %v3707
    %5588 = vmatprep.subr.bf16.mxu0 %v3768
    %5589 = vmatpush2.bf16.msra.mxu0 %v3767
    %5590 = vmatprep.subr.bf16.mxu0 %v3764
    %5591 = vmatpush2.bf16.msra.mxu0 %v3763
    %5592 = vmatprep.subr.bf16.mxu0 %v3760
    %5593 = vmatpush2.bf16.msra.mxu0 %v3759
    %5594 = vmatprep.subr.bf16.mxu0 %v3756
    %5595 = vmatpush2.bf16.msra.mxu0 %v3755
    %5596 = vmatprep.subr.bf16.mxu0 %v3752
    %5597 = vmatpush2.bf16.msra.mxu0 %v3751
    %5598 = vmatprep.subr.bf16.mxu0 %v3748
    %5599 = vmatpush2.bf16.msra.mxu0 %v3747
    %5600 = vmatprep.subr.bf16.mxu0 %v3744
    %5601 = vmatpush2.bf16.msra.mxu0 %v3743
    %5602 = vmatprep.subr.bf16.mxu0 %v3740
    %5603 = vmatpush2.bf16.msra.mxu0 %v3739
    %5604 = vmatprep.mubr.bf16.mxu0 %v154
    %5605 = vmatmul.mubr.bf16.gmra.mxu0 %v153
    %v5606 = vpop.f32.mrf.mxu0
    %v5607 = vadd.f32 %v5566, %v5606
    %v5608 = vpop.f32.mrf.mxu0
    %v5609 = vadd.f32 %v5568, %v5608
    %v5610 = vpop.f32.mrf.mxu0
    %v5611 = vpop.f32.mrf.mxu0
    %5612 = vdwg.mxu0
    %5613 = vmatprep.subr.bf16.mxu0 %v3800
    %5614 = vmatpush1.bf16.msra.mxu0 %v3799
    %5615 = vmatprep.subr.bf16.mxu0 %v3796
    %5616 = vmatpush1.bf16.msra.mxu0 %v3795
    %5617 = vmatprep.subr.bf16.mxu0 %v3792
    %5618 = vmatpush1.bf16.msra.mxu0 %v3791
    %5619 = vmatprep.subr.bf16.mxu0 %v3788
    %5620 = vmatpush1.bf16.msra.mxu0 %v3787
    %5621 = vmatprep.subr.bf16.mxu0 %v3784
    %5622 = vmatpush1.bf16.msra.mxu0 %v3783
    %5623 = vmatprep.subr.bf16.mxu0 %v3780
    %5624 = vmatpush1.bf16.msra.mxu0 %v3779
    %5625 = vmatprep.subr.bf16.mxu0 %v3776
    %5626 = vmatpush1.bf16.msra.mxu0 %v3775
    %5627 = vmatprep.subr.bf16.mxu0 %v3772
    %5628 = vmatpush1.bf16.msra.mxu0 %v3771
    %5629 = vmatprep.subr.bf16.mxu0 %v3832
    %5630 = vmatpush2.bf16.msra.mxu0 %v3831
    %5631 = vmatprep.subr.bf16.mxu0 %v3828
    %5632 = vmatpush2.bf16.msra.mxu0 %v3827
    %5633 = vmatprep.subr.bf16.mxu0 %v3824
    %5634 = vmatpush2.bf16.msra.mxu0 %v3823
    %5635 = vmatprep.subr.bf16.mxu0 %v3820
    %5636 = vmatpush2.bf16.msra.mxu0 %v3819
    %5637 = vmatprep.subr.bf16.mxu0 %v3816
    %5638 = vmatpush2.bf16.msra.mxu0 %v3815
    %5639 = vmatprep.subr.bf16.mxu0 %v3812
    %5640 = vmatpush2.bf16.msra.mxu0 %v3811
    %5641 = vmatprep.subr.bf16.mxu0 %v3808
    %5642 = vmatpush2.bf16.msra.mxu0 %v3807
    %5643 = vmatprep.subr.bf16.mxu0 %v3804
    %5644 = vmatpush2.bf16.msra.mxu0 %v3803
    %5645 = vmatprep.mubr.bf16.mxu0 %v156
    %5646 = vmatmul.mubr.bf16.gmra.mxu0 %v155
    %v5647 = vpop.f32.mrf.mxu0
    %v5648 = vadd.f32 %v5607, %v5647
    %v5649 = vpop.f32.mrf.mxu0
    %v5650 = vadd.f32 %v5609, %v5649
    %v5651 = vpop.f32.mrf.mxu0
    %v5652 = vpop.f32.mrf.mxu0
    %5653 = vdwg.mxu0
    %5654 = vmatprep.subr.bf16.mxu0 %v3864
    %5655 = vmatpush1.bf16.msra.mxu0 %v3863
    %5656 = vmatprep.subr.bf16.mxu0 %v3860
    %5657 = vmatpush1.bf16.msra.mxu0 %v3859
    %5658 = vmatprep.subr.bf16.mxu0 %v3856
    %5659 = vmatpush1.bf16.msra.mxu0 %v3855
    %5660 = vmatprep.subr.bf16.mxu0 %v3852
    %5661 = vmatpush1.bf16.msra.mxu0 %v3851
    %5662 = vmatprep.subr.bf16.mxu0 %v3848
    %5663 = vmatpush1.bf16.msra.mxu0 %v3847
    %5664 = vmatprep.subr.bf16.mxu0 %v3844
    %5665 = vmatpush1.bf16.msra.mxu0 %v3843
    %5666 = vmatprep.subr.bf16.mxu0 %v3840
    %5667 = vmatpush1.bf16.msra.mxu0 %v3839
    %5668 = vmatprep.subr.bf16.mxu0 %v3836
    %5669 = vmatpush1.bf16.msra.mxu0 %v3835
    %5670 = vmatprep.subr.bf16.mxu0 %v3896
    %5671 = vmatpush2.bf16.msra.mxu0 %v3895
    %5672 = vmatprep.subr.bf16.mxu0 %v3892
    %5673 = vmatpush2.bf16.msra.mxu0 %v3891
    %5674 = vmatprep.subr.bf16.mxu0 %v3888
    %5675 = vmatpush2.bf16.msra.mxu0 %v3887
    %5676 = vmatprep.subr.bf16.mxu0 %v3884
    %5677 = vmatpush2.bf16.msra.mxu0 %v3883
    %5678 = vmatprep.subr.bf16.mxu0 %v3880
    %5679 = vmatpush2.bf16.msra.mxu0 %v3879
    %5680 = vmatprep.subr.bf16.mxu0 %v3876
    %5681 = vmatpush2.bf16.msra.mxu0 %v3875
    %5682 = vmatprep.subr.bf16.mxu0 %v3872
    %5683 = vmatpush2.bf16.msra.mxu0 %v3871
    %5684 = vmatprep.subr.bf16.mxu0 %v3868
    %5685 = vmatpush2.bf16.msra.mxu0 %v3867
    %5686 = vmatprep.mubr.bf16.mxu0 %v158
    %5687 = vmatmul.mubr.bf16.gmra.mxu0 %v157
    %v5688 = vpop.f32.mrf.mxu0
    %v5689 = vadd.f32 %v5648, %v5688
    %v5690 = vpop.f32.mrf.mxu0
    %v5691 = vadd.f32 %v5650, %v5690
    %v5692 = vpop.f32.mrf.mxu0
    %v5693 = vpop.f32.mrf.mxu0
    %5694 = vdwg.mxu0
    %5695 = vmatprep.subr.bf16.mxu0 %v3928
    %5696 = vmatpush1.bf16.msra.mxu0 %v3927
    %5697 = vmatprep.subr.bf16.mxu0 %v3924
    %5698 = vmatpush1.bf16.msra.mxu0 %v3923
    %5699 = vmatprep.subr.bf16.mxu0 %v3920
    %5700 = vmatpush1.bf16.msra.mxu0 %v3919
    %5701 = vmatprep.subr.bf16.mxu0 %v3916
    %5702 = vmatpush1.bf16.msra.mxu0 %v3915
    %5703 = vmatprep.subr.bf16.mxu0 %v3912
    %5704 = vmatpush1.bf16.msra.mxu0 %v3911
    %5705 = vmatprep.subr.bf16.mxu0 %v3908
    %5706 = vmatpush1.bf16.msra.mxu0 %v3907
    %5707 = vmatprep.subr.bf16.mxu0 %v3904
    %5708 = vmatpush1.bf16.msra.mxu0 %v3903
    %5709 = vmatprep.subr.bf16.mxu0 %v3900
    %5710 = vmatpush1.bf16.msra.mxu0 %v3899
    %5711 = vmatprep.subr.bf16.mxu0 %v3960
    %5712 = vmatpush2.bf16.msra.mxu0 %v3959
    %5713 = vmatprep.subr.bf16.mxu0 %v3956
    %5714 = vmatpush2.bf16.msra.mxu0 %v3955
    %5715 = vmatprep.subr.bf16.mxu0 %v3952
    %5716 = vmatpush2.bf16.msra.mxu0 %v3951
    %5717 = vmatprep.subr.bf16.mxu0 %v3948
    %5718 = vmatpush2.bf16.msra.mxu0 %v3947
    %5719 = vmatprep.subr.bf16.mxu0 %v3944
    %5720 = vmatpush2.bf16.msra.mxu0 %v3943
    %5721 = vmatprep.subr.bf16.mxu0 %v3940
    %5722 = vmatpush2.bf16.msra.mxu0 %v3939
    %5723 = vmatprep.subr.bf16.mxu0 %v3936
    %5724 = vmatpush2.bf16.msra.mxu0 %v3935
    %5725 = vmatprep.subr.bf16.mxu0 %v3932
    %5726 = vmatpush2.bf16.msra.mxu0 %v3931
    %5727 = vmatprep.mubr.bf16.mxu0 %v160
    %5728 = vmatmul.mubr.bf16.gmra.mxu0 %v159
    %v5729 = vpop.f32.mrf.mxu0
    %v5730 = vadd.f32 %v5689, %v5729
    %v5731 = vpop.f32.mrf.mxu0
    %v5732 = vadd.f32 %v5691, %v5731
    %v5733 = vpop.f32.mrf.mxu0
    %v5734 = vpop.f32.mrf.mxu0
    %5735 = vdwg.mxu0
    %5736 = vmatprep.subr.bf16.mxu0 %v3992
    %5737 = vmatpush1.bf16.msra.mxu0 %v3991
    %5738 = vmatprep.subr.bf16.mxu0 %v3988
    %5739 = vmatpush1.bf16.msra.mxu0 %v3987
    %5740 = vmatprep.subr.bf16.mxu0 %v3984
    %5741 = vmatpush1.bf16.msra.mxu0 %v3983
    %5742 = vmatprep.subr.bf16.mxu0 %v3980
    %5743 = vmatpush1.bf16.msra.mxu0 %v3979
    %5744 = vmatprep.subr.bf16.mxu0 %v3976
    %5745 = vmatpush1.bf16.msra.mxu0 %v3975
    %5746 = vmatprep.subr.bf16.mxu0 %v3972
    %5747 = vmatpush1.bf16.msra.mxu0 %v3971
    %5748 = vmatprep.subr.bf16.mxu0 %v3968
    %5749 = vmatpush1.bf16.msra.mxu0 %v3967
    %5750 = vmatprep.subr.bf16.mxu0 %v3964
    %5751 = vmatpush1.bf16.msra.mxu0 %v3963
    %5752 = vmatprep.subr.bf16.mxu0 %v4024
    %5753 = vmatpush2.bf16.msra.mxu0 %v4023
    %5754 = vmatprep.subr.bf16.mxu0 %v4020
    %5755 = vmatpush2.bf16.msra.mxu0 %v4019
    %5756 = vmatprep.subr.bf16.mxu0 %v4016
    %5757 = vmatpush2.bf16.msra.mxu0 %v4015
    %5758 = vmatprep.subr.bf16.mxu0 %v4012
    %5759 = vmatpush2.bf16.msra.mxu0 %v4011
    %5760 = vmatprep.subr.bf16.mxu0 %v4008
    %5761 = vmatpush2.bf16.msra.mxu0 %v4007
    %5762 = vmatprep.subr.bf16.mxu0 %v4004
    %5763 = vmatpush2.bf16.msra.mxu0 %v4003
    %5764 = vmatprep.subr.bf16.mxu0 %v4000
    %5765 = vmatpush2.bf16.msra.mxu0 %v3999
    %5766 = vmatprep.subr.bf16.mxu0 %v3996
    %5767 = vmatpush2.bf16.msra.mxu0 %v3995
    %5768 = vmatprep.mubr.bf16.mxu0 %v162
    %5769 = vmatmul.mubr.bf16.gmra.mxu0 %v161
    %v5770 = vpop.f32.mrf.mxu0
    %v5771 = vadd.f32 %v5730, %v5770
    %v5772 = vpop.f32.mrf.mxu0
    %v5773 = vadd.f32 %v5732, %v5772
    %v5774 = vpop.f32.mrf.mxu0
    %v5775 = vpop.f32.mrf.mxu0
    %5776 = vdwg.mxu0
    %v5777 = vmax.f32 %v5279, 0.0
    %v5778 = vmax.f32 %v5281, 0.0
    %v5779 = vmax.f32 %v5771, 0.0
    %v5780 = vmax.f32 %v5773, 0.0
    %v5781 = vpack.c.bf16 %v5777, %v5777
    %v5782 = vpack.c.bf16 %v5778, %v5778
    %v5783 = vpack.c.bf16 %v5779, %v5779
    %v5784 = vpack.c.bf16 %v5780, %v5780
    %v5785 = vld [vmem:[#allocation8] sm:$0xff]
    %v5786 = vld [vmem:[#allocation8 + $0x8] sm:$0xff]
    %v5787 = vld [vmem:[#allocation8 + $0x10] sm:$0xff]
    %v5788 = vld [vmem:[#allocation8 + $0x18] sm:$0xff]
    %v5789 = vld [vmem:[#allocation8 + $0x20] sm:$0xff]
    %v5790 = vld [vmem:[#allocation8 + $0x28] sm:$0xff]
    %v5791 = vld [vmem:[#allocation8 + $0x30] sm:$0xff]
    %v5792 = vld [vmem:[#allocation8 + $0x38] sm:$0xff]
    %v5793 = vld [vmem:[#allocation8 + $0x40] sm:$0xff]
    %v5794 = vld [vmem:[#allocation8 + $0x48] sm:$0xff]
    %v5795 = vld [vmem:[#allocation8 + $0x50] sm:$0xff]
    %v5796 = vld [vmem:[#allocation8 + $0x58] sm:$0xff]
    %v5797 = vld [vmem:[#allocation8 + $0x60] sm:$0xff]
    %v5798 = vld [vmem:[#allocation8 + $0x68] sm:$0xff]
    %v5799 = vld [vmem:[#allocation8 + $0x70] sm:$0xff]
    %v5800 = vld [vmem:[#allocation8 + $0x78] sm:$0xff]
    %v5801 = vld [vmem:[#allocation8 + $0x80] sm:$0xff]
    %v5802 = vld [vmem:[#allocation8 + $0x88] sm:$0xff]
    %v5803 = vld [vmem:[#allocation8 + $0x90] sm:$0xff]
    %v5804 = vld [vmem:[#allocation8 + $0x98] sm:$0xff]
    %v5805 = vld [vmem:[#allocation8 + $0xa0] sm:$0xff]
    %v5806 = vld [vmem:[#allocation8 + $0xa8] sm:$0xff]
    %v5807 = vld [vmem:[#allocation8 + $0xb0] sm:$0xff]
    %v5808 = vld [vmem:[#allocation8 + $0xb8] sm:$0xff]
    %v5809 = vld [vmem:[#allocation8 + $0xc0] sm:$0xff]
    %v5810 = vld [vmem:[#allocation8 + $0xc8] sm:$0xff]
    %v5811 = vld [vmem:[#allocation8 + $0xd0] sm:$0xff]
    %v5812 = vld [vmem:[#allocation8 + $0xd8] sm:$0xff]
    %v5813 = vld [vmem:[#allocation8 + $0xe0] sm:$0xff]
    %v5814 = vld [vmem:[#allocation8 + $0xe8] sm:$0xff]
    %v5815 = vld [vmem:[#allocation8 + $0xf0] sm:$0xff]
    %v5816 = vld [vmem:[#allocation8 + $0xf8] sm:$0xff]
    %v5817 = vld [vmem:[#allocation8 + $0x100] sm:$0xff]
    %v5818 = vld [vmem:[#allocation8 + $0x108] sm:$0xff]
    %v5819 = vld [vmem:[#allocation8 + $0x110] sm:$0xff]
    %v5820 = vld [vmem:[#allocation8 + $0x118] sm:$0xff]
    %v5821 = vld [vmem:[#allocation8 + $0x120] sm:$0xff]
    %v5822 = vld [vmem:[#allocation8 + $0x128] sm:$0xff]
    %v5823 = vld [vmem:[#allocation8 + $0x130] sm:$0xff]
    %v5824 = vld [vmem:[#allocation8 + $0x138] sm:$0xff]
    %v5825 = vld [vmem:[#allocation8 + $0x140] sm:$0xff]
    %v5826 = vld [vmem:[#allocation8 + $0x148] sm:$0xff]
    %v5827 = vld [vmem:[#allocation8 + $0x150] sm:$0xff]
    %v5828 = vld [vmem:[#allocation8 + $0x158] sm:$0xff]
    %v5829 = vld [vmem:[#allocation8 + $0x160] sm:$0xff]
    %v5830 = vld [vmem:[#allocation8 + $0x168] sm:$0xff]
    %v5831 = vld [vmem:[#allocation8 + $0x170] sm:$0xff]
    %v5832 = vld [vmem:[#allocation8 + $0x178] sm:$0xff]
    %v5833 = vld [vmem:[#allocation8 + $0x180] sm:$0xff]
    %v5834 = vld [vmem:[#allocation8 + $0x188] sm:$0xff]
    %v5835 = vld [vmem:[#allocation8 + $0x190] sm:$0xff]
    %v5836 = vld [vmem:[#allocation8 + $0x198] sm:$0xff]
    %v5837 = vld [vmem:[#allocation8 + $0x1a0] sm:$0xff]
    %v5838 = vld [vmem:[#allocation8 + $0x1a8] sm:$0xff]
    %v5839 = vld [vmem:[#allocation8 + $0x1b0] sm:$0xff]
    %v5840 = vld [vmem:[#allocation8 + $0x1b8] sm:$0xff]
    %v5841 = vld [vmem:[#allocation8 + $0x1c0] sm:$0xff]
    %v5842 = vld [vmem:[#allocation8 + $0x1c8] sm:$0xff]
    %v5843 = vld [vmem:[#allocation8 + $0x1d0] sm:$0xff]
    %v5844 = vld [vmem:[#allocation8 + $0x1d8] sm:$0xff]
    %v5845 = vld [vmem:[#allocation8 + $0x1e0] sm:$0xff]
    %v5846 = vld [vmem:[#allocation8 + $0x1e8] sm:$0xff]
    %v5847 = vld [vmem:[#allocation8 + $0x1f0] sm:$0xff]
    %v5848 = vld [vmem:[#allocation8 + $0x1f8] sm:$0xff]
    %v5849 = vld [vmem:[#allocation10] sm:$0x3]
    %v5851 = vlaneseq
    %v5852 = vshrl.u32 %v5851, 7
    %v5853 = vsub.s32 0, %v5852
    %v5854 = vrot.slane %v5849, %v5853
    %v5855 = vlaneseq
    %v5856 = vshrl.u32 %v5855, 7
    %v5857 = vsub.s32 1, %v5856
    %v5858 = vrot.slane %v5849, %v5857
    %v5925 = vunpack.c.l.b16 %v5785
    %v5926 = vunpack.c.h.b16 %v5785
    %v5927 = vunpack.c.l.b16 %v5786
    %v5928 = vunpack.c.h.b16 %v5786
    %v5929 = vunpack.c.l.b16 %v5787
    %v5930 = vunpack.c.h.b16 %v5787
    %v5931 = vunpack.c.l.b16 %v5788
    %v5932 = vunpack.c.h.b16 %v5788
    %v5933 = vunpack.c.l.b16 %v5789
    %v5934 = vunpack.c.h.b16 %v5789
    %v5935 = vunpack.c.l.b16 %v5790
    %v5936 = vunpack.c.h.b16 %v5790
    %v5937 = vunpack.c.l.b16 %v5791
    %v5938 = vunpack.c.h.b16 %v5791
    %v5939 = vunpack.c.l.b16 %v5792
    %v5940 = vunpack.c.h.b16 %v5792
    %v5941 = vunpack.c.l.b16 %v5793
    %v5942 = vunpack.c.h.b16 %v5793
    %v5943 = vunpack.c.l.b16 %v5794
    %v5944 = vunpack.c.h.b16 %v5794
    %v5945 = vunpack.c.l.b16 %v5795
    %v5946 = vunpack.c.h.b16 %v5795
    %v5947 = vunpack.c.l.b16 %v5796
    %v5948 = vunpack.c.h.b16 %v5796
    %v5949 = vunpack.c.l.b16 %v5797
    %v5950 = vunpack.c.h.b16 %v5797
    %v5951 = vunpack.c.l.b16 %v5798
    %v5952 = vunpack.c.h.b16 %v5798
    %v5953 = vunpack.c.l.b16 %v5799
    %v5954 = vunpack.c.h.b16 %v5799
    %v5955 = vunpack.c.l.b16 %v5800
    %v5956 = vunpack.c.h.b16 %v5800
    %v5957 = vunpack.c.l.b16 %v5801
    %v5958 = vunpack.c.h.b16 %v5801
    %v5959 = vunpack.c.l.b16 %v5802
    %v5960 = vunpack.c.h.b16 %v5802
    %v5961 = vunpack.c.l.b16 %v5803
    %v5962 = vunpack.c.h.b16 %v5803
    %v5963 = vunpack.c.l.b16 %v5804
    %v5964 = vunpack.c.h.b16 %v5804
    %v5965 = vunpack.c.l.b16 %v5805
    %v5966 = vunpack.c.h.b16 %v5805
    %v5967 = vunpack.c.l.b16 %v5806
    %v5968 = vunpack.c.h.b16 %v5806
    %v5969 = vunpack.c.l.b16 %v5807
    %v5970 = vunpack.c.h.b16 %v5807
    %v5971 = vunpack.c.l.b16 %v5808
    %v5972 = vunpack.c.h.b16 %v5808
    %v5973 = vunpack.c.l.b16 %v5809
    %v5974 = vunpack.c.h.b16 %v5809
    %v5975 = vunpack.c.l.b16 %v5810
    %v5976 = vunpack.c.h.b16 %v5810
    %v5977 = vunpack.c.l.b16 %v5811
    %v5978 = vunpack.c.h.b16 %v5811
    %v5979 = vunpack.c.l.b16 %v5812
    %v5980 = vunpack.c.h.b16 %v5812
    %v5981 = vunpack.c.l.b16 %v5813
    %v5982 = vunpack.c.h.b16 %v5813
    %v5983 = vunpack.c.l.b16 %v5814
    %v5984 = vunpack.c.h.b16 %v5814
    %v5985 = vunpack.c.l.b16 %v5815
    %v5986 = vunpack.c.h.b16 %v5815
    %v5987 = vunpack.c.l.b16 %v5816
    %v5988 = vunpack.c.h.b16 %v5816
    %v5989 = vunpack.c.l.b16 %v5817
    %v5990 = vunpack.c.h.b16 %v5817
    %v5991 = vunpack.c.l.b16 %v5818
    %v5992 = vunpack.c.h.b16 %v5818
    %v5993 = vunpack.c.l.b16 %v5819
    %v5994 = vunpack.c.h.b16 %v5819
    %v5995 = vunpack.c.l.b16 %v5820
    %v5996 = vunpack.c.h.b16 %v5820
    %v5997 = vunpack.c.l.b16 %v5821
    %v5998 = vunpack.c.h.b16 %v5821
    %v5999 = vunpack.c.l.b16 %v5822
    %v6000 = vunpack.c.h.b16 %v5822
    %v6001 = vunpack.c.l.b16 %v5823
    %v6002 = vunpack.c.h.b16 %v5823
    %v6003 = vunpack.c.l.b16 %v5824
    %v6004 = vunpack.c.h.b16 %v5824
    %v6005 = vunpack.c.l.b16 %v5825
    %v6006 = vunpack.c.h.b16 %v5825
    %v6007 = vunpack.c.l.b16 %v5826
    %v6008 = vunpack.c.h.b16 %v5826
    %v6009 = vunpack.c.l.b16 %v5827
    %v6010 = vunpack.c.h.b16 %v5827
    %v6011 = vunpack.c.l.b16 %v5828
    %v6012 = vunpack.c.h.b16 %v5828
    %v6013 = vunpack.c.l.b16 %v5829
    %v6014 = vunpack.c.h.b16 %v5829
    %v6015 = vunpack.c.l.b16 %v5830
    %v6016 = vunpack.c.h.b16 %v5830
    %v6017 = vunpack.c.l.b16 %v5831
    %v6018 = vunpack.c.h.b16 %v5831
    %v6019 = vunpack.c.l.b16 %v5832
    %v6020 = vunpack.c.h.b16 %v5832
    %v6021 = vunpack.c.l.b16 %v5833
    %v6022 = vunpack.c.h.b16 %v5833
    %v6023 = vunpack.c.l.b16 %v5834
    %v6024 = vunpack.c.h.b16 %v5834
    %v6025 = vunpack.c.l.b16 %v5835
    %v6026 = vunpack.c.h.b16 %v5835
    %v6027 = vunpack.c.l.b16 %v5836
    %v6028 = vunpack.c.h.b16 %v5836
    %v6029 = vunpack.c.l.b16 %v5837
    %v6030 = vunpack.c.h.b16 %v5837
    %v6031 = vunpack.c.l.b16 %v5838
    %v6032 = vunpack.c.h.b16 %v5838
    %v6033 = vunpack.c.l.b16 %v5839
    %v6034 = vunpack.c.h.b16 %v5839
    %v6035 = vunpack.c.l.b16 %v5840
    %v6036 = vunpack.c.h.b16 %v5840
    %v6037 = vunpack.c.l.b16 %v5841
    %v6038 = vunpack.c.h.b16 %v5841
    %v6039 = vunpack.c.l.b16 %v5842
    %v6040 = vunpack.c.h.b16 %v5842
    %v6041 = vunpack.c.l.b16 %v5843
    %v6042 = vunpack.c.h.b16 %v5843
    %v6043 = vunpack.c.l.b16 %v5844
    %v6044 = vunpack.c.h.b16 %v5844
    %v6045 = vunpack.c.l.b16 %v5845
    %v6046 = vunpack.c.h.b16 %v5845
    %v6047 = vunpack.c.l.b16 %v5846
    %v6048 = vunpack.c.h.b16 %v5846
    %v6049 = vunpack.c.l.b16 %v5847
    %v6050 = vunpack.c.h.b16 %v5847
    %v6051 = vunpack.c.l.b16 %v5848
    %v6052 = vunpack.c.h.b16 %v5848
    %v6053 = vpack.c.b16 %v5927, %v5925
    %v6054 = vpack.c.b16 %v5928, %v5926
    %v6055 = vpack.c.b16 %v5931, %v5929
    %v6056 = vpack.c.b16 %v5932, %v5930
    %v6057 = vpack.c.b16 %v5935, %v5933
    %v6058 = vpack.c.b16 %v5936, %v5934
    %v6059 = vpack.c.b16 %v5939, %v5937
    %v6060 = vpack.c.b16 %v5940, %v5938
    %v6061 = vpack.c.b16 %v5943, %v5941
    %v6062 = vpack.c.b16 %v5944, %v5942
    %v6063 = vpack.c.b16 %v5947, %v5945
    %v6064 = vpack.c.b16 %v5948, %v5946
    %v6065 = vpack.c.b16 %v5951, %v5949
    %v6066 = vpack.c.b16 %v5952, %v5950
    %v6067 = vpack.c.b16 %v5955, %v5953
    %v6068 = vpack.c.b16 %v5956, %v5954
    %v6069 = vpack.c.b16 %v5959, %v5957
    %v6070 = vpack.c.b16 %v5960, %v5958
    %v6071 = vpack.c.b16 %v5963, %v5961
    %v6072 = vpack.c.b16 %v5964, %v5962
    %v6073 = vpack.c.b16 %v5967, %v5965
    %v6074 = vpack.c.b16 %v5968, %v5966
    %v6075 = vpack.c.b16 %v5971, %v5969
    %v6076 = vpack.c.b16 %v5972, %v5970
    %v6077 = vpack.c.b16 %v5975, %v5973
    %v6078 = vpack.c.b16 %v5976, %v5974
    %v6079 = vpack.c.b16 %v5979, %v5977
    %v6080 = vpack.c.b16 %v5980, %v5978
    %v6081 = vpack.c.b16 %v5983, %v5981
    %v6082 = vpack.c.b16 %v5984, %v5982
    %v6083 = vpack.c.b16 %v5987, %v5985
    %v6084 = vpack.c.b16 %v5988, %v5986
    %v6085 = vpack.c.b16 %v5991, %v5989
    %v6086 = vpack.c.b16 %v5992, %v5990
    %v6087 = vpack.c.b16 %v5995, %v5993
    %v6088 = vpack.c.b16 %v5996, %v5994
    %v6089 = vpack.c.b16 %v5999, %v5997
    %v6090 = vpack.c.b16 %v6000, %v5998
    %v6091 = vpack.c.b16 %v6003, %v6001
    %v6092 = vpack.c.b16 %v6004, %v6002
    %v6093 = vpack.c.b16 %v6007, %v6005
    %v6094 = vpack.c.b16 %v6008, %v6006
    %v6095 = vpack.c.b16 %v6011, %v6009
    %v6096 = vpack.c.b16 %v6012, %v6010
    %v6097 = vpack.c.b16 %v6015, %v6013
    %v6098 = vpack.c.b16 %v6016, %v6014
    %v6099 = vpack.c.b16 %v6019, %v6017
    %v6100 = vpack.c.b16 %v6020, %v6018
    %v6101 = vpack.c.b16 %v6023, %v6021
    %v6102 = vpack.c.b16 %v6024, %v6022
    %v6103 = vpack.c.b16 %v6027, %v6025
    %v6104 = vpack.c.b16 %v6028, %v6026
    %v6105 = vpack.c.b16 %v6031, %v6029
    %v6106 = vpack.c.b16 %v6032, %v6030
    %v6107 = vpack.c.b16 %v6035, %v6033
    %v6108 = vpack.c.b16 %v6036, %v6034
    %v6109 = vpack.c.b16 %v6039, %v6037
    %v6110 = vpack.c.b16 %v6040, %v6038
    %v6111 = vpack.c.b16 %v6043, %v6041
    %v6112 = vpack.c.b16 %v6044, %v6042
    %v6113 = vpack.c.b16 %v6047, %v6045
    %v6114 = vpack.c.b16 %v6048, %v6046
    %v6115 = vpack.c.b16 %v6051, %v6049
    %v6116 = vpack.c.b16 %v6052, %v6050
    %6181 = vmatprep.subr.bf16.mxu0 %v6068
    %6182 = vmatpush1.bf16.msra.mxu0 %v6067
    %6183 = vmatprep.subr.bf16.mxu0 %v6066
    %6184 = vmatpush1.bf16.msra.mxu0 %v6065
    %6185 = vmatprep.subr.bf16.mxu0 %v6064
    %6186 = vmatpush1.bf16.msra.mxu0 %v6063
    %6187 = vmatprep.subr.bf16.mxu0 %v6062
    %6188 = vmatpush1.bf16.msra.mxu0 %v6061
    %6189 = vmatprep.subr.bf16.mxu0 %v6060
    %6190 = vmatpush1.bf16.msra.mxu0 %v6059
    %6191 = vmatprep.subr.bf16.mxu0 %v6058
    %6192 = vmatpush1.bf16.msra.mxu0 %v6057
    %6193 = vmatprep.subr.bf16.mxu0 %v6056
    %6194 = vmatpush1.bf16.msra.mxu0 %v6055
    %6195 = vmatprep.subr.bf16.mxu0 %v6054
    %6196 = vmatpush1.bf16.msra.mxu0 %v6053
    %6197 = vmatprep.subr.bf16.mxu0 %v6084
    %6198 = vmatpush2.bf16.msra.mxu0 %v6083
    %6199 = vmatprep.subr.bf16.mxu0 %v6082
    %6200 = vmatpush2.bf16.msra.mxu0 %v6081
    %6201 = vmatprep.subr.bf16.mxu0 %v6080
    %6202 = vmatpush2.bf16.msra.mxu0 %v6079
    %6203 = vmatprep.subr.bf16.mxu0 %v6078
    %6204 = vmatpush2.bf16.msra.mxu0 %v6077
    %6205 = vmatprep.subr.bf16.mxu0 %v6076
    %6206 = vmatpush2.bf16.msra.mxu0 %v6075
    %6207 = vmatprep.subr.bf16.mxu0 %v6074
    %6208 = vmatpush2.bf16.msra.mxu0 %v6073
    %6209 = vmatprep.subr.bf16.mxu0 %v6072
    %6210 = vmatpush2.bf16.msra.mxu0 %v6071
    %6211 = vmatprep.subr.bf16.mxu0 %v6070
    %6212 = vmatpush2.bf16.msra.mxu0 %v6069
    %6213 = vmatprep.mubr.bf16.mxu0 %v5782
    %6214 = vmatmul.mubr.bf16.gmra.mxu0 %v5781
    %v6215 = vpop.f32.mrf.mxu0
    %v6216 = vadd.f32 %v5854, %v6215
    %v6217 = vpop.f32.mrf.mxu0
    %v6218 = vadd.f32 %v5858, %v6217
    %v6219 = vpop.f32.mrf.mxu0
    %v6220 = vpop.f32.mrf.mxu0
    %6221 = vdwg.mxu0
    %6222 = vmatprep.subr.bf16.mxu0 %v6100
    %6223 = vmatpush1.bf16.msra.mxu0 %v6099
    %6224 = vmatprep.subr.bf16.mxu0 %v6098
    %6225 = vmatpush1.bf16.msra.mxu0 %v6097
    %6226 = vmatprep.subr.bf16.mxu0 %v6096
    %6227 = vmatpush1.bf16.msra.mxu0 %v6095
    %6228 = vmatprep.subr.bf16.mxu0 %v6094
    %6229 = vmatpush1.bf16.msra.mxu0 %v6093
    %6230 = vmatprep.subr.bf16.mxu0 %v6092
    %6231 = vmatpush1.bf16.msra.mxu0 %v6091
    %6232 = vmatprep.subr.bf16.mxu0 %v6090
    %6233 = vmatpush1.bf16.msra.mxu0 %v6089
    %6234 = vmatprep.subr.bf16.mxu0 %v6088
    %6235 = vmatpush1.bf16.msra.mxu0 %v6087
    %6236 = vmatprep.subr.bf16.mxu0 %v6086
    %6237 = vmatpush1.bf16.msra.mxu0 %v6085
    %6238 = vmatprep.subr.bf16.mxu0 %v6116
    %6239 = vmatpush2.bf16.msra.mxu0 %v6115
    %6240 = vmatprep.subr.bf16.mxu0 %v6114
    %6241 = vmatpush2.bf16.msra.mxu0 %v6113
    %6242 = vmatprep.subr.bf16.mxu0 %v6112
    %6243 = vmatpush2.bf16.msra.mxu0 %v6111
    %6244 = vmatprep.subr.bf16.mxu0 %v6110
    %6245 = vmatpush2.bf16.msra.mxu0 %v6109
    %6246 = vmatprep.subr.bf16.mxu0 %v6108
    %6247 = vmatpush2.bf16.msra.mxu0 %v6107
    %6248 = vmatprep.subr.bf16.mxu0 %v6106
    %6249 = vmatpush2.bf16.msra.mxu0 %v6105
    %6250 = vmatprep.subr.bf16.mxu0 %v6104
    %6251 = vmatpush2.bf16.msra.mxu0 %v6103
    %6252 = vmatprep.subr.bf16.mxu0 %v6102
    %6253 = vmatpush2.bf16.msra.mxu0 %v6101
    %6254 = vmatprep.mubr.bf16.mxu0 %v5784
    %6255 = vmatmul.mubr.bf16.gmra.mxu0 %v5783
    %v6256 = vpop.f32.mrf.mxu0
    %v6257 = vadd.f32 %v6216, %v6256
    %v6258 = vpop.f32.mrf.mxu0
    %v6259 = vadd.f32 %v6218, %v6258
    %v6260 = vpop.f32.mrf.mxu0
    %v6261 = vpop.f32.mrf.mxu0
    %6262 = vdwg.mxu0
    %v6263 = vmax.f32 %v6257, 0.0
    %v6264 = vmax.f32 %v6259, 0.0
    %v6265 = vpack.c.bf16 %v6263, %v6263
    %v6266 = vpack.c.bf16 %v6264, %v6264
    %v6267 = vld [vmem:[#allocation11] sm:$0xf]
    %v6268 = vld [vmem:[#allocation11 + $0x4] sm:$0xf]
    %v6269 = vld [vmem:[#allocation11 + $0x8] sm:$0xf]
    %v6270 = vld [vmem:[#allocation11 + $0xc] sm:$0xf]
    %v6271 = vld [vmem:[#allocation11 + $0x10] sm:$0xf]
    %v6272 = vld [vmem:[#allocation11 + $0x14] sm:$0xf]
    %v6273 = vld [vmem:[#allocation11 + $0x18] sm:$0xf]
    %v6274 = vld [vmem:[#allocation11 + $0x1c] sm:$0xf]
    %v6275 = vld [vmem:[#allocation11 + $0x20] sm:$0xf]
    %v6276 = vld [vmem:[#allocation11 + $0x24] sm:$0xf]
    %v6277 = vld [vmem:[#allocation11 + $0x28] sm:$0xf]
    %v6278 = vld [vmem:[#allocation11 + $0x2c] sm:$0xf]
    %v6279 = vld [vmem:[#allocation11 + $0x30] sm:$0xf]
    %v6280 = vld [vmem:[#allocation11 + $0x34] sm:$0xf]
    %v6281 = vld [vmem:[#allocation11 + $0x38] sm:$0xf]
    %v6282 = vld [vmem:[#allocation11 + $0x3c] sm:$0xf]
    %v6283 = vld [vmem:[#allocation11 + $0x40] sm:$0xf]
    %v6284 = vld [vmem:[#allocation11 + $0x44] sm:$0xf]
    %v6285 = vld [vmem:[#allocation11 + $0x48] sm:$0xf]
    %v6286 = vld [vmem:[#allocation11 + $0x4c] sm:$0xf]
    %v6287 = vld [vmem:[#allocation11 + $0x50] sm:$0xf]
    %v6288 = vld [vmem:[#allocation11 + $0x54] sm:$0xf]
    %v6289 = vld [vmem:[#allocation11 + $0x58] sm:$0xf]
    %v6290 = vld [vmem:[#allocation11 + $0x5c] sm:$0xf]
    %v6291 = vld [vmem:[#allocation11 + $0x60] sm:$0xf]
    %v6292 = vld [vmem:[#allocation11 + $0x64] sm:$0xf]
    %v6293 = vld [vmem:[#allocation11 + $0x68] sm:$0xf]
    %v6294 = vld [vmem:[#allocation11 + $0x6c] sm:$0xf]
    %v6295 = vld [vmem:[#allocation11 + $0x70] sm:$0xf]
    %v6296 = vld [vmem:[#allocation11 + $0x74] sm:$0xf]
    %v6297 = vld [vmem:[#allocation11 + $0x78] sm:$0xf]
    %v6298 = vld [vmem:[#allocation11 + $0x7c] sm:$0xf]
    %v6299 = vld [vmem:[#allocation13] sm:$0x1]
    %v6301 = vlaneseq
    %v6302 = vshrl.u32 %v6301, 7
    %v6303 = vsub.s32 0, %v6302
    %v6304 = vrot.slane %v6299, %v6303
    %v6338 = vunpack.c.l.b16 %v6267
    %v6339 = vunpack.c.l.b16 %v6268
    %v6340 = vunpack.c.l.b16 %v6269
    %v6341 = vunpack.c.l.b16 %v6270
    %v6342 = vunpack.c.l.b16 %v6271
    %v6343 = vunpack.c.l.b16 %v6272
    %v6344 = vunpack.c.l.b16 %v6273
    %v6345 = vunpack.c.l.b16 %v6274
    %v6346 = vunpack.c.l.b16 %v6275
    %v6347 = vunpack.c.l.b16 %v6276
    %v6348 = vunpack.c.l.b16 %v6277
    %v6349 = vunpack.c.l.b16 %v6278
    %v6350 = vunpack.c.l.b16 %v6279
    %v6351 = vunpack.c.l.b16 %v6280
    %v6352 = vunpack.c.l.b16 %v6281
    %v6353 = vunpack.c.l.b16 %v6282
    %v6354 = vunpack.c.l.b16 %v6283
    %v6355 = vunpack.c.l.b16 %v6284
    %v6356 = vunpack.c.l.b16 %v6285
    %v6357 = vunpack.c.l.b16 %v6286
    %v6358 = vunpack.c.l.b16 %v6287
    %v6359 = vunpack.c.l.b16 %v6288
    %v6360 = vunpack.c.l.b16 %v6289
    %v6361 = vunpack.c.l.b16 %v6290
    %v6362 = vunpack.c.l.b16 %v6291
    %v6363 = vunpack.c.l.b16 %v6292
    %v6364 = vunpack.c.l.b16 %v6293
    %v6365 = vunpack.c.l.b16 %v6294
    %v6366 = vunpack.c.l.b16 %v6295
    %v6367 = vunpack.c.l.b16 %v6296
    %v6368 = vunpack.c.l.b16 %v6297
    %v6369 = vunpack.c.l.b16 %v6298
    %v6370 = vpack.c.b16 %v6339, %v6338
    %v6371 = vpack.c.b16 %v6341, %v6340
    %v6372 = vpack.c.b16 %v6343, %v6342
    %v6373 = vpack.c.b16 %v6345, %v6344
    %v6374 = vpack.c.b16 %v6347, %v6346
    %v6375 = vpack.c.b16 %v6349, %v6348
    %v6376 = vpack.c.b16 %v6351, %v6350
    %v6377 = vpack.c.b16 %v6353, %v6352
    %v6378 = vpack.c.b16 %v6355, %v6354
    %v6379 = vpack.c.b16 %v6357, %v6356
    %v6380 = vpack.c.b16 %v6359, %v6358
    %v6381 = vpack.c.b16 %v6361, %v6360
    %v6382 = vpack.c.b16 %v6363, %v6362
    %v6383 = vpack.c.b16 %v6365, %v6364
    %v6384 = vpack.c.b16 %v6367, %v6366
    %v6385 = vpack.c.b16 %v6369, %v6368
    %6402 = vmatprep.subr.bf16.mxu0 0
    %6403 = vmatpush1.bf16.msra.mxu0 %v6377
    %6404 = vmatprep.subr.bf16.mxu0 0
    %6405 = vmatpush1.bf16.msra.mxu0 %v6376
    %6406 = vmatprep.subr.bf16.mxu0 0
    %6407 = vmatpush1.bf16.msra.mxu0 %v6375
    %6408 = vmatprep.subr.bf16.mxu0 0
    %6409 = vmatpush1.bf16.msra.mxu0 %v6374
    %6410 = vmatprep.subr.bf16.mxu0 0
    %6411 = vmatpush1.bf16.msra.mxu0 %v6373
    %6412 = vmatprep.subr.bf16.mxu0 0
    %6413 = vmatpush1.bf16.msra.mxu0 %v6372
    %6414 = vmatprep.subr.bf16.mxu0 0
    %6415 = vmatpush1.bf16.msra.mxu0 %v6371
    %6416 = vmatprep.subr.bf16.mxu0 0
    %6417 = vmatpush1.bf16.msra.mxu0 %v6370
    %6418 = vmatprep.subr.bf16.mxu0 0
    %6419 = vmatpush2.bf16.msra.mxu0 %v6385
    %6420 = vmatprep.subr.bf16.mxu0 0
    %6421 = vmatpush2.bf16.msra.mxu0 %v6384
    %6422 = vmatprep.subr.bf16.mxu0 0
    %6423 = vmatpush2.bf16.msra.mxu0 %v6383
    %6424 = vmatprep.subr.bf16.mxu0 0
    %6425 = vmatpush2.bf16.msra.mxu0 %v6382
    %6426 = vmatprep.subr.bf16.mxu0 0
    %6427 = vmatpush2.bf16.msra.mxu0 %v6381
    %6428 = vmatprep.subr.bf16.mxu0 0
    %6429 = vmatpush2.bf16.msra.mxu0 %v6380
    %6430 = vmatprep.subr.bf16.mxu0 0
    %6431 = vmatpush2.bf16.msra.mxu0 %v6379
    %6432 = vmatprep.subr.bf16.mxu0 0
    %6433 = vmatpush2.bf16.msra.mxu0 %v6378
    %6434 = vmatprep.mubr.bf16.mxu0 %v6266
    %6435 = vmatmul.mubr.bf16.gmra.mxu0 %v6265
    %v6436 = vpop.f32.mrf.mxu0
    %v6437 = vadd.f32 %v6304, %v6436
    %v6438 = vpop.f32.mrf.mxu0
    %v6439 = vpop.f32.mrf.mxu0
    %v6440 = vpop.f32.mrf.mxu0
    %6441 = vdwg.mxu0
    %6442 = vst [vmem:[#allocation14] sm:$0xff] %v6437
    // Predicated region
    $region58: #{tpu_custom_call.1} parent=1 // pred_check
      _
    $region59: #{tpu_custom_call.1} parent=1 // pred_check_branch
      %6444 = sbr.rel (0) target = $region61
    $region60: #{tpu_custom_call.1} parent=1 // pred_region
      %s6446 = ssub.s32 128, 128
      %6447 = vsyncadd [#allocation4], %s6446
      %s6449 = sshll.u32 [#allocation14], 4
      %s6450 = int_to_ptr.vmem [resolvable:$true] %s6449
      %6452 = dma.vmem_to_hbm [thread:$0]  %s6450, 128, %s7, [#allocation4]
    $region61: #{tpu_custom_call.1} parent=1 // pred_fallthru
      _
    // Predicated region
    $region62: #{tpu_custom_call.1} parent=1 // pred_check
      _
    $region63: #{tpu_custom_call.1} parent=1 // pred_check_branch
      %6454 = sbr.rel (0) target = $region65
    $region64: #{tpu_custom_call.1} parent=1 // pred_region
      %6455 = dma.done [#allocation4], 128
    $region65: #{tpu_custom_call.1} parent=1 // pred_fallthru
      _
    %6456 = vsyncpa [#allocation3], 1
    %6457 = vsyncpa [#allocation6], 1
    %6458 = vsyncpa [#allocation9], 1
    %6459 = vsyncpa [#allocation12], 1
    %6460 = vsyncpa [#allocation4], 1

</llo_original>
